<compile_context>
chip_gen: v7x
topology: tpu7x:2x2x1
jax: 0.10.0
libtpu: 0.0.40
codegen_flags: <defaults>
</compile_context>

<pallas_src>
import math

import jax
import jax.numpy as jnp
from jax.experimental import pallas as pl
from jax.experimental.pallas import tpu as pltpu


def mlp_kernel(x_ref, w1_ref, b1_ref, w2_ref, b2_ref, o_ref):
    k = pl.program_id(1)  # hidden (reduction) axis, innermost

    # Fold bias2 into the accumulator init; o_ref is f32 and stays VMEM
    # resident across the whole k loop (constant output block index there).
    @pl.when(k == 0)
    def _():
        o_ref[...] = jnp.broadcast_to(b2_ref[...], o_ref.shape)

    # Linear 1 partial: cast x to bf16 in-register, MXU matmul, f32 accum.
    x_bf = x_ref[...].astype(jnp.bfloat16)
    h = jnp.dot(x_bf, w1_ref[...], preferred_element_type=jnp.float32)
    h = h + b1_ref[...]

    # GELU: tanh form (~8 VALU + 1 EUP op/elem) instead of exact erf
    # (~25-40 VALU ops/elem with a branch-select).  Max abs deviation from
    # the exact GELU is ~3e-3, far under this kernel's bf16 matmul noise.
    c0 = jnp.float32(0.7978845608028654)   # sqrt(2/pi)
    c1 = jnp.float32(0.044715)
    g = 0.5 * h * (1.0 + jnp.tanh(c0 * (h + c1 * h * h * h)))

    # Linear 2 partial, accumulated straight into the output block.
    o_ref[...] += jnp.dot(g.astype(jnp.bfloat16), w2_ref[...],
                          preferred_element_type=jnp.float32)


def mlp_pallas(x, w1, b1, w2, b2, *, hidden_block=None, row_blocks=None):
    """x: (..., 384) f32 -> Linear(384,1536) -> GELU -> Linear(1536,384)."""
    lead_shape = x.shape[:-1]
    c_in = x.shape[-1]
    n = math.prod(lead_shape)
    hidden = w1.shape[1]
    c_out = w2.shape[1]

    kind = jax.devices()[0].device_kind.lower()
    if hidden_block is None:
        # v5e: weight-DMA / MXU co-binding -> smaller tiles, better overlap.
        # v6e / v7x: per-grid-step overhead dominates -> fewer, bigger tiles.
        hidden_block = 384 if "v5" in kind else 768
    if row_blocks is None:
        # v7x has 2 TensorCores per chip; split rows across them.
        row_blocks = 2 if "v7" in kind else 1
    assert hidden % hidden_block == 0
    num_k = hidden // hidden_block

    x2d = x.reshape(n, c_in)
    if row_blocks > 1:
        row_mult = 8 * row_blocks
        n_pad = ((n + row_mult - 1) // row_mult) * row_mult
        if n_pad != n:
            x2d = jnp.pad(x2d, ((0, n_pad - n), (0, 0)))
    else:
        n_pad = n  # full-array row block: no pad, no output slice
    row_block = n_pad // row_blocks

    # Weights as bf16 MXU operands (one-time / constant-foldable); biases f32.
    w1_bf = w1.astype(jnp.bfloat16)
    w2_bf = w2.astype(jnp.bfloat16)
    b1_2d = b1.reshape(1, hidden).astype(jnp.float32)
    b2_2d = b2.reshape(1, c_out).astype(jnp.float32)

    out = pl.pallas_call(
        mlp_kernel,
        out_shape=jax.ShapeDtypeStruct((n_pad, c_out), jnp.float32),
        grid_spec=pltpu.PrefetchScalarGridSpec(
            num_scalar_prefetch=0,
            grid=(row_blocks, num_k),
            in_specs=[
                pl.BlockSpec((row_block, c_in), lambda r, k: (r, 0)),      # x
                pl.BlockSpec((c_in, hidden_block), lambda r, k: (0, k)),   # W1
                pl.BlockSpec((1, hidden_block), lambda r, k: (0, k)),      # b1
                pl.BlockSpec((hidden_block, c_out), lambda r, k: (k, 0)),  # W2
                pl.BlockSpec((1, c_out), lambda r, k: (0, 0)),             # b2
            ],
            out_specs=pl.BlockSpec((row_block, c_out), lambda r, k: (r, 0)),
        ),
        compiler_params=pltpu.CompilerParams(
            dimension_semantics=("parallel", "arbitrary"),
        ),
    )(x2d, w1_bf, b1_2d, w2_bf, b2_2d)

    if n_pad != n:
        out = out[:n]
    return out.reshape(*lead_shape, c_out).astype(x.dtype)


def init_params(key, in_features=384, hidden=1536):
    """Deterministic init mimicking nn.Linear defaults (uniform +/- 1/sqrt(fan_in))."""
    k1, k2, k3, k4 = jax.random.split(key, 4)
    bound1 = 1.0 / math.sqrt(in_features)
    bound2 = 1.0 / math.sqrt(hidden)
    # stored as (in, out) = transpose of PyTorch's (out, in)
    w1 = jax.random.uniform(k1, (in_features, hidden), jnp.float32, -bound1, bound1)
    b1 = jax.random.uniform(k2, (hidden,), jnp.float32, -bound1, bound1)
    w2 = jax.random.uniform(k3, (hidden, in_features), jnp.float32, -bound2, bound2)
    b2 = jax.random.uniform(k4, (in_features,), jnp.float32, -bound2, bound2)
    return w1, b1, w2, b2


if __name__ == "__main__":
    key = jax.random.PRNGKey(0)
    kx, kp = jax.random.split(key)

    # input matching the module: [1, 14, 14, 384], channels-last
    x = jax.random.normal(kx, (1, 14, 14, 384), dtype=jnp.float32)
    w1, b1, w2, b2 = init_params(kp)

    y = mlp_pallas(x, w1, b1, w2, b2)
    y = jax.block_until_ready(y)

    # reference in plain f32 JAX with exact GELU; tolerance covers the bf16
    # MXU operands and the tanh-form GELU used inside the kernel.
    h_ref = x.reshape(-1, 384) @ w1 + b1
    h_ref = 0.5 * h_ref * (1.0 + jax.lax.erf(h_ref / jnp.sqrt(2.0)))
    y_ref = (h_ref @ w2 + b2).reshape(1, 14, 14, 384)

    assert y.shape == (1, 14, 14, 384)
    assert bool(jnp.all(jnp.isfinite(y)))
    assert jnp.allclose(y, y_ref, atol=2e-2, rtol=2e-2), (
        float(jnp.max(jnp.abs(y - y_ref))))

    print("KERNEL_OK")
</pallas_src>

<mosaic_0001>
module attributes {stable_mosaic.version = 11 : i64} {
  func.func @mlp_kernel(%arg0: i32, %arg1: i32, %arg2: memref<196x384xf32, #tpu.memory_space<vmem>>, %arg3: memref<384x768xbf16, #tpu.memory_space<vmem>>, %arg4: memref<1x768xf32, #tpu.memory_space<vmem>>, %arg5: memref<768x384xbf16, #tpu.memory_space<vmem>>, %arg6: memref<1x384xf32, #tpu.memory_space<vmem>>, %arg7: memref<196x384xf32, #tpu.memory_space<vmem>>) attributes {dimension_semantics = [#tpu.dimension_semantics<parallel>, #tpu.dimension_semantics<arbitrary>], iteration_bounds = array<i64: 1, 2>, scalar_prefetch = 0 : i64, scratch_operands = 0 : i64, tpu.core_type = #tpu.core_type<tc>, window_params = [{transform_indices = @transform_0, window_bounds = array<i64: 196, 384>}, {transform_indices = @transform_1, window_bounds = array<i64: 384, 768>}, {transform_indices = @transform_2, window_bounds = array<i64: 1, 768>}, {transform_indices = @transform_3, window_bounds = array<i64: 768, 384>}, {pipeline_mode = #tpu.pipeline_mode<synchronous>, transform_indices = @transform_4, window_bounds = array<i64: 1, 384>}, {transform_indices = @transform_5, window_bounds = array<i64: 196, 384>}]} {
    %c0_i32 = arith.constant 0 : i32
    %0 = arith.cmpi eq, %arg1, %c0_i32 : i32
    %1 = arith.extui %0 : i1 to i32
    %c0_i32_0 = arith.constant 0 : i32
    %2 = arith.cmpi ne, %1, %c0_i32_0 : i32
    scf.if %2 {
      %c0_17 = arith.constant 0 : index
      %c0_18 = arith.constant 0 : index
      %29 = vector.load %arg6[%c0_17, %c0_18] : memref<1x384xf32, #tpu.memory_space<vmem>>, vector<1x384xf32>
      %30 = vector.shape_cast %29 : vector<1x384xf32> to vector<1x384xf32>
      %31 = vector.broadcast %30 : vector<1x384xf32> to vector<196x384xf32>
      %c0_19 = arith.constant 0 : index
      %c0_20 = arith.constant 0 : index
      %32 = vector.load %arg7[%c0_19, %c0_20] : memref<196x384xf32, #tpu.memory_space<vmem>>, vector<196x384xf32>
      tpu.vector_store %arg7[%c0_19, %c0_20], %31 {strides = array<i32>} : memref<196x384xf32, #tpu.memory_space<vmem>>, vector<196x384xf32>,
    } else {
    }
    %c0 = arith.constant 0 : index
    %c0_1 = arith.constant 0 : index
    %3 = vector.load %arg2[%c0, %c0_1] : memref<196x384xf32, #tpu.memory_space<vmem>>, vector<196x384xf32>
    %4 = arith.truncf %3 : vector<196x384xf32> to vector<196x384xbf16>
    %c0_2 = arith.constant 0 : index
    %c0_3 = arith.constant 0 : index
    %5 = vector.load %arg3[%c0_2, %c0_3] : memref<384x768xbf16, #tpu.memory_space<vmem>>, vector<384x768xbf16>
    %cst = arith.constant dense<0.000000e+00> : vector<196x768xf32>
    %6 = tpu.matmul %4, %5, %cst {dimension_numbers = #tpu.dot_dimension_numbers<[1], [0], [0], [1], [0, 0, 1, 1], [], []>} : vector<196x384xbf16>, vector<384x768xbf16>, vector<196x768xf32> -> vector<196x768xf32>
    %c0_4 = arith.constant 0 : index
    %c0_5 = arith.constant 0 : index
    %7 = vector.load %arg4[%c0_4, %c0_5] : memref<1x768xf32, #tpu.memory_space<vmem>>, vector<1x768xf32>
    %8 = vector.broadcast %7 : vector<1x768xf32> to vector<196x768xf32>
    %9 = arith.addf %6, %8 : vector<196x768xf32>
    %cst_6 = arith.constant 5.000000e-01 : f32
    %10 = vector.broadcast %cst_6 : f32 to vector<196x768xf32>
    %11 = arith.mulf %10, %9 : vector<196x768xf32>
    %cst_7 = arith.constant 4.471500e-02 : f32
    %12 = vector.broadcast %cst_7 : f32 to vector<196x768xf32>
    %13 = arith.mulf %12, %9 : vector<196x768xf32>
    %14 = arith.mulf %13, %9 : vector<196x768xf32>
    %15 = arith.mulf %14, %9 : vector<196x768xf32>
    %16 = arith.addf %9, %15 : vector<196x768xf32>
    %cst_8 = arith.constant 0.797884583 : f32
    %17 = vector.broadcast %cst_8 : f32 to vector<196x768xf32>
    %18 = arith.mulf %17, %16 : vector<196x768xf32>
    %19 = math.tanh %18 : vector<196x768xf32>
    %cst_9 = arith.constant 1.000000e+00 : f32
    %20 = vector.broadcast %cst_9 : f32 to vector<196x768xf32>
    %21 = arith.addf %20, %19 : vector<196x768xf32>
    %22 = arith.mulf %11, %21 : vector<196x768xf32>
    %c0_10 = arith.constant 0 : index
    %c0_11 = arith.constant 0 : index
    %23 = vector.load %arg7[%c0_10, %c0_11] : memref<196x384xf32, #tpu.memory_space<vmem>>, vector<196x384xf32>
    %24 = arith.truncf %22 : vector<196x768xf32> to vector<196x768xbf16>
    %c0_12 = arith.constant 0 : index
    %c0_13 = arith.constant 0 : index
    %25 = vector.load %arg5[%c0_12, %c0_13] : memref<768x384xbf16, #tpu.memory_space<vmem>>, vector<768x384xbf16>
    %cst_14 = arith.constant dense<0.000000e+00> : vector<196x384xf32>
    %26 = tpu.matmul %24, %25, %cst_14 {dimension_numbers = #tpu.dot_dimension_numbers<[1], [0], [0], [1], [0, 0, 1, 1], [], []>} : vector<196x768xbf16>, vector<768x384xbf16>, vector<196x384xf32> -> vector<196x384xf32>
    %27 = arith.addf %23, %26 : vector<196x384xf32>
    %c0_15 = arith.constant 0 : index
    %c0_16 = arith.constant 0 : index
    %28 = vector.load %arg7[%c0_15, %c0_16] : memref<196x384xf32, #tpu.memory_space<vmem>>, vector<196x384xf32>
    tpu.vector_store %arg7[%c0_15, %c0_16], %27 {strides = array<i32>} : memref<196x384xf32, #tpu.memory_space<vmem>>, vector<196x384xf32>,
    return
  }
  func.func @transform_0(%arg0: i32, %arg1: i32) -> (i32, i32) {
    %c0_i32 = arith.constant 0 : i32
    %c0_i32_0 = arith.constant 0 : i32
    return %arg0, %c0_i32 : i32, i32
  }
  func.func @transform_1(%arg0: i32, %arg1: i32) -> (i32, i32) {
    %c0_i32 = arith.constant 0 : i32
    %c0_i32_0 = arith.constant 0 : i32
    return %c0_i32, %arg1 : i32, i32
  }
  func.func @transform_2(%arg0: i32, %arg1: i32) -> (i32, i32) {
    %c0_i32 = arith.constant 0 : i32
    %c0_i32_0 = arith.constant 0 : i32
    return %c0_i32, %arg1 : i32, i32
  }
  func.func @transform_3(%arg0: i32, %arg1: i32) -> (i32, i32) {
    %c0_i32 = arith.constant 0 : i32
    %c0_i32_0 = arith.constant 0 : i32
    return %arg1, %c0_i32 : i32, i32
  }
  func.func @transform_4(%arg0: i32, %arg1: i32) -> (i32, i32) {
    %c0_i32 = arith.constant 0 : i32
    %c0_i32_0 = arith.constant 0 : i32
    %c0_i32_1 = arith.constant 0 : i32
    return %c0_i32, %c0_i32_0 : i32, i32
  }
  func.func @transform_5(%arg0: i32, %arg1: i32) -> (i32, i32) {
    %c0_i32 = arith.constant 0 : i32
    %c0_i32_0 = arith.constant 0 : i32
    return %arg0, %c0_i32 : i32, i32
  }
}

</mosaic_0001>

<llo_original>
// kernel: tpu_custom_call.1
$region0: #{tpu_custom_call.1}
  #allocation0 [shape = 'u32[]', space=smem, size = 0x4, offset = 0x4, fixed_abs, tag = 'smem constant byte address 0x4 - core index']
  #allocation1 [shape = 'u32[144,128]{1,0:T(1,128)}', space=vmem, size = 0x12000, scoped, tag = 'internal scratch']
  %s0 = inlined_call_operand.hbm [shape: f32[196,384], index: 0, kind: input, shape index: {}]
  %s1 = inlined_call_operand.hbm [shape: bf16[384,1536], index: 1, kind: input, shape index: {}]
  %s2 = inlined_call_operand.hbm [shape: f32[1,1536], index: 2, kind: input, shape index: {}]
  %s3 = inlined_call_operand.hbm [shape: bf16[1536,384], index: 3, kind: input, shape index: {}]
  %s4 = inlined_call_operand.hbm [shape: f32[1,384], index: 4, kind: input, shape index: {}]
  %s5 = inlined_call_operand.hbm [shape: f32[196,384], index: 5, kind: output, shape index: {}]
  %s6 = sld [smem:[#allocation0]]
  $region77: #{tpu_custom_call.1} parent=0
    _
  %s8 = ssub.s32 1, %s6
  %s9 = scalar_select 0, %s8, %s6
  $region1: #{tpu_custom_call.1} parent=0
    #allocation2 [shape = 'u8[307200]{0}', space=vmem, size = 0x4b000, scoped, tag = 'input window, operand 0, single buffered']
    #allocation3 [shape = 's32[2]{0}', space=sflag, size = 0x8, scoped, tag = 'scoped memory for tpu_custom_call.1']
    #allocation4 [shape = 's32[2]{0}', space=sflag, size = 0x8, scoped, tag = 'scoped memory for tpu_custom_call.1']
    #allocation5 [shape = 'u8[1179648]{0}', space=vmem, size = 0x120000, scoped, tag = 'input window, operand 1']
    #allocation6 [shape = 's32[2]{0}', space=sflag, size = 0x8, scoped, tag = 'scoped memory for tpu_custom_call.1']
    #allocation7 [shape = 'u8[6144]{0}', space=vmem, size = 0x1800, scoped, tag = 'input window, operand 2']
    #allocation8 [shape = 'u8[1179648]{0}', space=vmem, size = 0x120000, scoped, tag = 'input window, operand 3']
    #allocation9 [shape = 's32[2]{0}', space=sflag, size = 0x8, scoped, tag = 'scoped memory for tpu_custom_call.1']
    #allocation10 [shape = 'u8[1536]{0}', space=vmem, size = 0x800, scoped, tag = 'input window, operand 4, single buffered']
    #allocation11 [shape = 'u8[307200]{0}', space=vmem, size = 0x4b000, scoped, tag = 'output window, operand 0, single buffered']
    %10 = vsyncpa [#allocation3], 0
    %11 = vsyncpa [#allocation6], 0
    %s12 = scalar_lea.sflag [#allocation6], 1
    %13 = vsyncpa %s12, 0
    %14 = vsyncpa [#allocation9], 0
    %s15 = scalar_lea.sflag [#allocation9], 1
    %16 = vsyncpa %s15, 0
    %17 = vsyncpa [#allocation4], 0
    loop: start=0, step=1, limit=4
    $region2: #{tpu_custom_call.1} parent=1 // loop_pre_header
      _
    $region3: #{tpu_custom_call.1} parent=1 // loop_header
      %s19 = sphi 0, %s23
      %p20 = scmp.ge.s32.totalorder %s19, 4
      %s26 = sphi 0, %s38
      %s27 = sphi 0, %s34
      %s28 = sphi 0, %s26
      %s29 = sphi 0, %s27
      %s30 = sphi 0, %s28
      %s31 = sphi 0, %s29
      %s41 = sphi 0, %s43
      %s44 = sphi 0, %s41
      %s45 = sphi 0, %s44
      %s61 = sphi 0, %s45
      %s67 = sphi 0, %s69
      %s70 = sphi 0, %s67
      %s71 = sphi 0, %s70
      %s87 = sphi 0, %s71
      %s93 = sphi 0, %s95
      %s96 = sphi 0, %s93
      %s97 = sphi 0, %s96
      %s113 = sphi 0, %s97
      %s119 = sphi 0, %s121
      %s122 = sphi 0, %s119
      %s123 = sphi 0, %s122
      %s139 = sphi 0, %s123
      %s143 = sphi 0, %s143
      %s145 = sphi 0, %s143
      %s146 = sphi 0, %s145
      %s160 = sphi 0, %s146
      %s166 = sphi 0, %s168
      %s169 = sphi 0, %s166
      %s170 = sphi 0, %s169
      %s186 = sphi 0, %s170
    $region4: #{tpu_custom_call.1} parent=1 // loop_header_branch
      %22 = sbr.rel (%p20) target = $region8
    $region5: #{tpu_custom_call.1} parent=1 // loop_body
      %s24 = ssub.s32 %s19, 1
      %s25 = ssub.s32 %s19, 2
      %s32 = sadd.s32 1, %s27
      %p33 = scmp.ge.s32.totalorder %s32, 2
      %s34 = scalar_select %p33, 0, %s32
      %s35 = sadd.s32 1, %s26
      %s36 = scalar_select %p33, %s35, %s26
      %p37 = scmp.ge.s32.totalorder %s36, 1
      %s38 = scalar_select %p37, 0, %s36
      %s39 = ssub.s32 %s26, %s38
      %p40 = scmp.eq.s32.totalorder %s39, 0
      %s42 = sadd.s32 %s41, 1
      %s43 = scalar_select %p40, %s41, %s42
      %p46 = pneg %p40
      %p47 = scmp.eq.s32.totalorder %s19, 1
      %p48 = por %p46, %p47
      %p49 = scmp.ne.s32.totalorder %s41, %s44
      %p50 = scmp.eq.s32.totalorder %s19, 0
      %p51 = por %p49, %p50
      %p52 = scmp.ne.s32.totalorder %s41, %s44
      %p53 = scmp.eq.s32.totalorder %s24, 1
      %p54 = por %p52, %p53
      %p55 = scmp.ne.s32.totalorder %s44, %s45
      %p56 = scmp.eq.s32.totalorder %s24, 0
      %p57 = por %p55, %p56
      %p58 = scmp.ne.s32.totalorder %s44, %s45
      %p59 = scmp.eq.s32.totalorder %s25, 1
      %p60 = por %p58, %p59
      %p62 = scmp.ne.s32.totalorder %s45, %s61
      %p63 = scmp.eq.s32.totalorder %s25, 0
      %p64 = por %p62, %p63
      %s65 = ssub.s32 %s27, %s34
      %p66 = scmp.eq.s32.totalorder %s65, 0
      %s68 = sadd.s32 %s67, 1
      %s69 = scalar_select %p66, %s67, %s68
      %p72 = pneg %p66
      %p73 = scmp.eq.s32.totalorder %s19, 1
      %p74 = por %p72, %p73
      %p75 = scmp.ne.s32.totalorder %s67, %s70
      %p76 = scmp.eq.s32.totalorder %s19, 0
      %p77 = por %p75, %p76
      %p78 = scmp.ne.s32.totalorder %s67, %s70
      %p79 = scmp.eq.s32.totalorder %s24, 1
      %p80 = por %p78, %p79
      %p81 = scmp.ne.s32.totalorder %s70, %s71
      %p82 = scmp.eq.s32.totalorder %s24, 0
      %p83 = por %p81, %p82
      %p84 = scmp.ne.s32.totalorder %s70, %s71
      %p85 = scmp.eq.s32.totalorder %s25, 1
      %p86 = por %p84, %p85
      %p88 = scmp.ne.s32.totalorder %s71, %s87
      %p89 = scmp.eq.s32.totalorder %s25, 0
      %p90 = por %p88, %p89
      %s91 = ssub.s32 %s27, %s34
      %p92 = scmp.eq.s32.totalorder %s91, 0
      %s94 = sadd.s32 %s93, 1
      %s95 = scalar_select %p92, %s93, %s94
      %p98 = pneg %p92
      %p99 = scmp.eq.s32.totalorder %s19, 1
      %p100 = por %p98, %p99
      %p101 = scmp.ne.s32.totalorder %s93, %s96
      %p102 = scmp.eq.s32.totalorder %s19, 0
      %p103 = por %p101, %p102
      %p104 = scmp.ne.s32.totalorder %s93, %s96
      %p105 = scmp.eq.s32.totalorder %s24, 1
      %p106 = por %p104, %p105
      %p107 = scmp.ne.s32.totalorder %s96, %s97
      %p108 = scmp.eq.s32.totalorder %s24, 0
      %p109 = por %p107, %p108
      %p110 = scmp.ne.s32.totalorder %s96, %s97
      %p111 = scmp.eq.s32.totalorder %s25, 1
      %p112 = por %p110, %p111
      %p114 = scmp.ne.s32.totalorder %s97, %s113
      %p115 = scmp.eq.s32.totalorder %s25, 0
      %p116 = por %p114, %p115
      %s117 = ssub.s32 %s27, %s34
      %p118 = scmp.eq.s32.totalorder %s117, 0
      %s120 = sadd.s32 %s119, 1
      %s121 = scalar_select %p118, %s119, %s120
      %p124 = pneg %p118
      %p125 = scmp.eq.s32.totalorder %s19, 1
      %p126 = por %p124, %p125
      %p127 = scmp.ne.s32.totalorder %s119, %s122
      %p128 = scmp.eq.s32.totalorder %s19, 0
      %p129 = por %p127, %p128
      %p130 = scmp.ne.s32.totalorder %s119, %s122
      %p131 = scmp.eq.s32.totalorder %s24, 1
      %p132 = por %p130, %p131
      %p133 = scmp.ne.s32.totalorder %s122, %s123
      %p134 = scmp.eq.s32.totalorder %s24, 0
      %p135 = por %p133, %p134
      %p136 = scmp.ne.s32.totalorder %s122, %s123
      %p137 = scmp.eq.s32.totalorder %s25, 1
      %p138 = por %p136, %p137
      %p140 = scmp.ne.s32.totalorder %s123, %s139
      %p141 = scmp.eq.s32.totalorder %s25, 0
      %p142 = por %p140, %p141
      %s144 = sadd.s32 %s143, 1
      %p147 = scmp.eq.s32.totalorder %s19, 1
      %p148 = scmp.ne.s32.totalorder %s143, %s145
      %p149 = scmp.eq.s32.totalorder %s19, 0
      %p150 = por %p148, %p149
      %p151 = scmp.ne.s32.totalorder %s143, %s145
      %p152 = scmp.eq.s32.totalorder %s24, 1
      %p153 = por %p151, %p152
      %p154 = scmp.ne.s32.totalorder %s145, %s146
      %p155 = scmp.eq.s32.totalorder %s24, 0
      %p156 = por %p154, %p155
      %p157 = scmp.ne.s32.totalorder %s145, %s146
      %p158 = scmp.eq.s32.totalorder %s25, 1
      %p159 = por %p157, %p158
      %p161 = scmp.ne.s32.totalorder %s146, %s160
      %p162 = scmp.eq.s32.totalorder %s25, 0
      %p163 = por %p161, %p162
      %s164 = ssub.s32 %s26, %s38
      %p165 = scmp.eq.s32.totalorder %s164, 0
      %s167 = sadd.s32 %s166, 1
      %s168 = scalar_select %p165, %s166, %s167
      %p171 = pneg %p165
      %p172 = scmp.eq.s32.totalorder %s19, 1
      %p173 = por %p171, %p172
      %p174 = scmp.ne.s32.totalorder %s166, %s169
      %p175 = scmp.eq.s32.totalorder %s19, 0
      %p176 = por %p174, %p175
      %p177 = scmp.ne.s32.totalorder %s166, %s169
      %p178 = scmp.eq.s32.totalorder %s24, 1
      %p179 = por %p177, %p178
      %p180 = scmp.ne.s32.totalorder %s169, %s170
      %p181 = scmp.eq.s32.totalorder %s24, 0
      %p182 = por %p180, %p181
      %p183 = scmp.ne.s32.totalorder %s169, %s170
      %p184 = scmp.eq.s32.totalorder %s25, 1
      %p185 = por %p183, %p184
      %p187 = scmp.ne.s32.totalorder %s170, %s186
      %p188 = scmp.eq.s32.totalorder %s25, 0
      %p189 = por %p187, %p188
      %p190 = scmp.le.s32.totalorder 1, %s19
      %p191 = scmp.lt.s32.totalorder %s19, 3
      %p192 = pnand %p190, %p191
      %p193 = pneg %p192
      // Predicated region
      $region9: #{tpu_custom_call.1} parent=5 // pred_check
        _
      $region10: #{tpu_custom_call.1} parent=5 // pred_check_branch
        %195 = sbr.rel (%p192) target = $region12
      $region11: #{tpu_custom_call.1} parent=5 // pred_region
        %s196 = ssub.s32 %s19, 1
        // Predicated region
        $region13: #{tpu_custom_call.1} parent=11 // pred_check
          %p197 = pneg %p57
        $region14: #{tpu_custom_call.1} parent=11 // pred_check_branch
          %199 = sbr.rel (%p197) target = $region16
        $region15: #{tpu_custom_call.1} parent=11 // pred_region
          %s200 = smul.u32 25, %s28
          %s202 = ssub.s32 9600, 9600
          %203 = vsyncadd [#allocation3], %s202
          %s204 = smul.addr %s200, 3
          %s205 = smul.addr %s204, 128
          %s206 = scalar_lea.hbm %s0, %s205
          %s207 = sshll.u32 [#allocation2], 4
          %s208 = int_to_ptr.vmem [resolvable:$true] %s207
          %213 = dma.hbm_to_vmem [thread:$0]  %s206, 9600, %s208, [#allocation3], 384, 384, 24
        $region16: #{tpu_custom_call.1} parent=11 // pred_fallthru
          _
        // Predicated region
        $region17: #{tpu_custom_call.1} parent=11 // pred_check
          %p214 = pneg %p156
        $region18: #{tpu_custom_call.1} parent=11 // pred_check_branch
          %216 = sbr.rel (%p214) target = $region20
        $region19: #{tpu_custom_call.1} parent=11 // pred_region
          %s218 = ssub.s32 48, 48
          %219 = vsyncadd [#allocation9], %s218
          %s221 = sshll.u32 [#allocation10], 4
          %s222 = int_to_ptr.vmem [resolvable:$true] %s221
          %224 = dma.hbm_to_vmem [thread:$0]  %s4, 48, %s222, [#allocation9]
        $region20: #{tpu_custom_call.1} parent=11 // pred_fallthru
          _
      $region12: #{tpu_custom_call.1} parent=5 // pred_fallthru
        _
      %p225 = scmp.lt.s32.totalorder %s19, 2
      // Predicated region
      $region21: #{tpu_custom_call.1} parent=5 // pred_check
        %p226 = pneg %p225
      $region22: #{tpu_custom_call.1} parent=5 // pred_check_branch
        %228 = sbr.rel (%p226) target = $region24
      $region23: #{tpu_custom_call.1} parent=5 // pred_region
        // Predicated region
        $region25: #{tpu_custom_call.1} parent=23 // pred_check
          %p229 = pneg %p77
        $region26: #{tpu_custom_call.1} parent=23 // pred_check_branch
          %231 = sbr.rel (%p229) target = $region28
        $region27: #{tpu_custom_call.1} parent=23 // pred_region
          %s232 = sand.u32 %s19, 1
          %s233 = scalar_lea.sflag [#allocation6], %s232
          %s234 = sand.u32 %s67, 1
          %s235 = smul.addr %s234, 1152
          %s236 = scalar_lea.vmem [#allocation5], %s235
          %s237 = smul.u32 6, %s27
          %s239 = ssub.s32 18432, 18432
          %240 = vsyncadd %s233, %s239
          %s241 = smul.addr %s237, 64
          %s242 = scalar_lea.hbm %s1, %s241
          %s243 = sshll.u32 %s236, 4
          %s244 = int_to_ptr.vmem [resolvable:$true] %s243
          %249 = dma.hbm_to_vmem [thread:$0]  %s242, 18432, %s244, %s233, 768, 384, 24
        $region28: #{tpu_custom_call.1} parent=23 // pred_fallthru
          _
        // Predicated region
        $region29: #{tpu_custom_call.1} parent=23 // pred_check
          %p250 = pneg %p103
        $region30: #{tpu_custom_call.1} parent=23 // pred_check_branch
          %252 = sbr.rel (%p250) target = $region32
        $region31: #{tpu_custom_call.1} parent=23 // pred_region
          %s253 = sand.u32 %s19, 1
          %s254 = scalar_lea.sflag [#allocation6], %s253
          %s255 = sand.u32 %s93, 1
          %s256 = smul.addr %s255, 6
          %s257 = scalar_lea.vmem [#allocation7], %s256
          %s258 = smul.u32 6, %s27
          %s260 = ssub.s32 96, 96
          %261 = vsyncadd %s254, %s260
          %s262 = smul.addr %s258, 16
          %s263 = scalar_lea.hbm %s2, %s262
          %s265 = sshll.u32 %s257, 4
          %s266 = int_to_ptr.vmem [resolvable:$true] %s265
          %268 = dma.hbm_to_vmem [thread:$0]  %s263, 96, %s266, %s254
        $region32: #{tpu_custom_call.1} parent=23 // pred_fallthru
          _
        // Predicated region
        $region33: #{tpu_custom_call.1} parent=23 // pred_check
          %p269 = pneg %p129
        $region34: #{tpu_custom_call.1} parent=23 // pred_check_branch
          %271 = sbr.rel (%p269) target = $region36
        $region35: #{tpu_custom_call.1} parent=23 // pred_region
          %s272 = sand.u32 %s19, 1
          %s273 = scalar_lea.sflag [#allocation9], %s272
          %s274 = sand.u32 %s119, 1
          %s275 = smul.addr %s274, 1152
          %s276 = scalar_lea.vmem [#allocation8], %s275
          %s277 = smul.u32 96, %s27
          %s279 = ssub.s32 18432, 18432
          %280 = vsyncadd %s273, %s279
          %s281 = smul.addr %s277, 3
          %s282 = smul.addr %s281, 64
          %s283 = scalar_lea.hbm %s3, %s282
          %s284 = sshll.u32 %s276, 4
          %s285 = int_to_ptr.vmem [resolvable:$true] %s284
          %290 = dma.hbm_to_vmem [thread:$0]  %s283, 18432, %s285, %s273, 192, 192, 12
        $region36: #{tpu_custom_call.1} parent=23 // pred_fallthru
          _
      $region24: #{tpu_custom_call.1} parent=5 // pred_fallthru
        _
      %p291 = scmp.le.s32.totalorder 1, %s19
      %p292 = scmp.lt.s32.totalorder %s19, 3
      %p293 = pnand %p291, %p292
      %p294 = pneg %p293
      // Predicated region
      $region37: #{tpu_custom_call.1} parent=5 // pred_check
        _
      $region38: #{tpu_custom_call.1} parent=5 // pred_check_branch
        %296 = sbr.rel (%p293) target = $region40
      $region39: #{tpu_custom_call.1} parent=5 // pred_region
        %s297 = ssub.s32 %s19, 1
        // Predicated region
        $region41: #{tpu_custom_call.1} parent=39 // pred_check
          %p298 = pneg %p57
        $region42: #{tpu_custom_call.1} parent=39 // pred_check_branch
          %300 = sbr.rel (%p298) target = $region44
        $region43: #{tpu_custom_call.1} parent=39 // pred_region
          %301 = dma.done [#allocation3], 9600
        $region44: #{tpu_custom_call.1} parent=39 // pred_fallthru
          _
        %s302 = sand.u32 %s24, 1
        %s303 = scalar_lea.sflag [#allocation6], %s302
        %s304 = sand.u32 %s70, 1
        %s305 = smul.addr %s304, 1152
        %s306 = scalar_lea.vmem [#allocation5], %s305
        // Predicated region
        $region45: #{tpu_custom_call.1} parent=39 // pred_check
          %p307 = pneg %p83
        $region46: #{tpu_custom_call.1} parent=39 // pred_check_branch
          %309 = sbr.rel (%p307) target = $region48
        $region47: #{tpu_custom_call.1} parent=39 // pred_region
          %310 = dma.done %s303, 18432
        $region48: #{tpu_custom_call.1} parent=39 // pred_fallthru
          _
        %s311 = sand.u32 %s24, 1
        %s312 = scalar_lea.sflag [#allocation6], %s311
        %s313 = sand.u32 %s96, 1
        %s314 = smul.addr %s313, 6
        %s315 = scalar_lea.vmem [#allocation7], %s314
        // Predicated region
        $region49: #{tpu_custom_call.1} parent=39 // pred_check
          %p316 = pneg %p109
        $region50: #{tpu_custom_call.1} parent=39 // pred_check_branch
          %318 = sbr.rel (%p316) target = $region52
        $region51: #{tpu_custom_call.1} parent=39 // pred_region
          %319 = dma.done %s312, 96
        $region52: #{tpu_custom_call.1} parent=39 // pred_fallthru
          _
        %s320 = sand.u32 %s24, 1
        %s321 = scalar_lea.sflag [#allocation9], %s320
        %s322 = sand.u32 %s122, 1
        %s323 = smul.addr %s322, 1152
        %s324 = scalar_lea.vmem [#allocation8], %s323
        // Predicated region
        $region53: #{tpu_custom_call.1} parent=39 // pred_check
          %p325 = pneg %p135
        $region54: #{tpu_custom_call.1} parent=39 // pred_check_branch
          %327 = sbr.rel (%p325) target = $region56
        $region55: #{tpu_custom_call.1} parent=39 // pred_region
          %328 = dma.done %s321, 18432
        $region56: #{tpu_custom_call.1} parent=39 // pred_fallthru
          _
        // Predicated region
        $region57: #{tpu_custom_call.1} parent=39 // pred_check
          %p329 = pneg %p156
        $region58: #{tpu_custom_call.1} parent=39 // pred_check_branch
          %331 = sbr.rel (%p329) target = $region60
        $region59: #{tpu_custom_call.1} parent=39 // pred_region
          %332 = dma.done [#allocation9], 48
        $region60: #{tpu_custom_call.1} parent=39 // pred_fallthru
          _
        %p333 = pneg %p57
        %p334 = pneg %p54
        %s335 = sand.u32 %s24, 1
        %s336 = scalar_lea.sflag [#allocation6], %s335
        %s337 = sand.u32 %s70, 1
        %s338 = smul.addr %s337, 1152
        %s339 = scalar_lea.vmem [#allocation5], %s338
        %p340 = pneg %p83
        %p341 = pneg %p80
        %s342 = sand.u32 %s24, 1
        %s343 = scalar_lea.sflag [#allocation6], %s342
        %s344 = sand.u32 %s96, 1
        %s345 = smul.addr %s344, 6
        %s346 = scalar_lea.vmem [#allocation7], %s345
        %p347 = pneg %p109
        %p348 = pneg %p106
        %s349 = sand.u32 %s24, 1
        %s350 = scalar_lea.sflag [#allocation9], %s349
        %s351 = sand.u32 %s122, 1
        %s352 = smul.addr %s351, 1152
        %s353 = scalar_lea.vmem [#allocation8], %s352
        %p354 = pneg %p135
        %p355 = pneg %p132
        %p356 = pneg %p156
        %p357 = pneg %p153
        %p358 = pneg %p182
        %p359 = pneg %p179
        %s360 = smul.u32 25, %s28
        %s361 = smul.u32 6, %s29
        %s362 = smul.u32 6, %s29
        %s363 = smul.u32 96, %s29
        %s364 = smul.u32 25, %s28
        %p366 = scmp.eq.s32.totalorder %s29, 0
        // Predicated region
        $region61: #{tpu_custom_call.1} parent=39 // pred_check
          %p367 = pneg %p366
        $region62: #{tpu_custom_call.1} parent=39 // pred_check_branch
          %369 = sbr.rel (%p367) target = $region64
        $region63: #{tpu_custom_call.1} parent=39 // pred_region
          %v370 = vld [vmem:[#allocation10] sm:$0x7]
          %v372 = vlaneseq
          %v373 = vshrl.u32 %v372, 7
          %v374 = vsub.s32 0, %v373
          %v375 = vrot.slane %v370, %v374
          %v376 = vlaneseq
          %v377 = vshrl.u32 %v376, 7
          %v378 = vsub.s32 1, %v377
          %v379 = vrot.slane %v370, %v378
          %v380 = vlaneseq
          %v381 = vshrl.u32 %v380, 7
          %v382 = vsub.s32 2, %v381
          %v383 = vrot.slane %v370, %v382
          %387 = vst [vmem:[#allocation11] sm:$0xff] %v375
          %388 = vst [vmem:[#allocation11 + $0x8] sm:$0xff] %v379
          %389 = vst [vmem:[#allocation11 + $0x10] sm:$0xff] %v383
          %390 = vst [vmem:[#allocation11 + $0x18] sm:$0xff] %v375
          %391 = vst [vmem:[#allocation11 + $0x20] sm:$0xff] %v379
          %392 = vst [vmem:[#allocation11 + $0x28] sm:$0xff] %v383
          %393 = vst [vmem:[#allocation11 + $0x30] sm:$0xff] %v375
          %394 = vst [vmem:[#allocation11 + $0x38] sm:$0xff] %v379
          %395 = vst [vmem:[#allocation11 + $0x40] sm:$0xff] %v383
          %396 = vst [vmem:[#allocation11 + $0x48] sm:$0xff] %v375
          %397 = vst [vmem:[#allocation11 + $0x50] sm:$0xff] %v379
          %398 = vst [vmem:[#allocation11 + $0x58] sm:$0xff] %v383
          %399 = vst [vmem:[#allocation11 + $0x60] sm:$0xff] %v375
          %400 = vst [vmem:[#allocation11 + $0x68] sm:$0xff] %v379
          %401 = vst [vmem:[#allocation11 + $0x70] sm:$0xff] %v383
          %402 = vst [vmem:[#allocation11 + $0x78] sm:$0xff] %v375
          %403 = vst [vmem:[#allocation11 + $0x80] sm:$0xff] %v379
          %404 = vst [vmem:[#allocation11 + $0x88] sm:$0xff] %v383
          %405 = vst [vmem:[#allocation11 + $0x90] sm:$0xff] %v375
          %406 = vst [vmem:[#allocation11 + $0x98] sm:$0xff] %v379
          %407 = vst [vmem:[#allocation11 + $0xa0] sm:$0xff] %v383
          %408 = vst [vmem:[#allocation11 + $0xa8] sm:$0xff] %v375
          %409 = vst [vmem:[#allocation11 + $0xb0] sm:$0xff] %v379
          %410 = vst [vmem:[#allocation11 + $0xb8] sm:$0xff] %v383
          %411 = vst [vmem:[#allocation11 + $0xc0] sm:$0xff] %v375
          %412 = vst [vmem:[#allocation11 + $0xc8] sm:$0xff] %v379
          %413 = vst [vmem:[#allocation11 + $0xd0] sm:$0xff] %v383
          %414 = vst [vmem:[#allocation11 + $0xd8] sm:$0xff] %v375
          %415 = vst [vmem:[#allocation11 + $0xe0] sm:$0xff] %v379
          %416 = vst [vmem:[#allocation11 + $0xe8] sm:$0xff] %v383
          %417 = vst [vmem:[#allocation11 + $0xf0] sm:$0xff] %v375
          %418 = vst [vmem:[#allocation11 + $0xf8] sm:$0xff] %v379
          %419 = vst [vmem:[#allocation11 + $0x100] sm:$0xff] %v383
          %420 = vst [vmem:[#allocation11 + $0x108] sm:$0xff] %v375
          %421 = vst [vmem:[#allocation11 + $0x110] sm:$0xff] %v379
          %422 = vst [vmem:[#allocation11 + $0x118] sm:$0xff] %v383
          %423 = vst [vmem:[#allocation11 + $0x120] sm:$0xff] %v375
          %424 = vst [vmem:[#allocation11 + $0x128] sm:$0xff] %v379
          %425 = vst [vmem:[#allocation11 + $0x130] sm:$0xff] %v383
          %426 = vst [vmem:[#allocation11 + $0x138] sm:$0xff] %v375
          %427 = vst [vmem:[#allocation11 + $0x140] sm:$0xff] %v379
          %428 = vst [vmem:[#allocation11 + $0x148] sm:$0xff] %v383
          %429 = vst [vmem:[#allocation11 + $0x150] sm:$0xff] %v375
          %430 = vst [vmem:[#allocation11 + $0x158] sm:$0xff] %v379
          %431 = vst [vmem:[#allocation11 + $0x160] sm:$0xff] %v383
          %432 = vst [vmem:[#allocation11 + $0x168] sm:$0xff] %v375
          %433 = vst [vmem:[#allocation11 + $0x170] sm:$0xff] %v379
          %434 = vst [vmem:[#allocation11 + $0x178] sm:$0xff] %v383
          %435 = vst [vmem:[#allocation11 + $0x180] sm:$0xff] %v375
          %436 = vst [vmem:[#allocation11 + $0x188] sm:$0xff] %v379
          %437 = vst [vmem:[#allocation11 + $0x190] sm:$0xff] %v383
          %438 = vst [vmem:[#allocation11 + $0x198] sm:$0xff] %v375
          %439 = vst [vmem:[#allocation11 + $0x1a0] sm:$0xff] %v379
          %440 = vst [vmem:[#allocation11 + $0x1a8] sm:$0xff] %v383
          %441 = vst [vmem:[#allocation11 + $0x1b0] sm:$0xff] %v375
          %442 = vst [vmem:[#allocation11 + $0x1b8] sm:$0xff] %v379
          %443 = vst [vmem:[#allocation11 + $0x1c0] sm:$0xff] %v383
          %444 = vst [vmem:[#allocation11 + $0x1c8] sm:$0xff] %v375
          %445 = vst [vmem:[#allocation11 + $0x1d0] sm:$0xff] %v379
          %446 = vst [vmem:[#allocation11 + $0x1d8] sm:$0xff] %v383
          %447 = vst [vmem:[#allocation11 + $0x1e0] sm:$0xff] %v375
          %448 = vst [vmem:[#allocation11 + $0x1e8] sm:$0xff] %v379
          %449 = vst [vmem:[#allocation11 + $0x1f0] sm:$0xff] %v383
          %450 = vst [vmem:[#allocation11 + $0x1f8] sm:$0xff] %v375
          %451 = vst [vmem:[#allocation11 + $0x200] sm:$0xff] %v379
          %452 = vst [vmem:[#allocation11 + $0x208] sm:$0xff] %v383
          %453 = vst [vmem:[#allocation11 + $0x210] sm:$0xff] %v375
          %454 = vst [vmem:[#allocation11 + $0x218] sm:$0xff] %v379
          %455 = vst [vmem:[#allocation11 + $0x220] sm:$0xff] %v383
          %456 = vst [vmem:[#allocation11 + $0x228] sm:$0xff] %v375
          %457 = vst [vmem:[#allocation11 + $0x230] sm:$0xff] %v379
          %458 = vst [vmem:[#allocation11 + $0x238] sm:$0xff] %v383
          %459 = vst [vmem:[#allocation11 + $0x240] sm:$0xf] %v375
          %460 = vst [vmem:[#allocation11 + $0x248] sm:$0xf] %v379
          %461 = vst [vmem:[#allocation11 + $0x250] sm:$0xf] %v383
        $region64: #{tpu_custom_call.1} parent=39 // pred_fallthru
          _
        %v462 = vld [vmem:[#allocation2] sm:$0xff]
        %v463 = vld [vmem:[#allocation2 + $0x8] sm:$0xff]
        %v464 = vld [vmem:[#allocation2 + $0x10] sm:$0xff]
        %v465 = vld [vmem:[#allocation2 + $0x18] sm:$0xff]
        %v466 = vld [vmem:[#allocation2 + $0x20] sm:$0xff]
        %v467 = vld [vmem:[#allocation2 + $0x28] sm:$0xff]
        %v468 = vld [vmem:[#allocation2 + $0x30] sm:$0xff]
        %v469 = vld [vmem:[#allocation2 + $0x38] sm:$0xff]
        %v470 = vld [vmem:[#allocation2 + $0x40] sm:$0xff]
        %v471 = vld [vmem:[#allocation2 + $0x48] sm:$0xff]
        %v472 = vld [vmem:[#allocation2 + $0x50] sm:$0xff]
        %v473 = vld [vmem:[#allocation2 + $0x58] sm:$0xff]
        %v474 = vld [vmem:[#allocation2 + $0x60] sm:$0xff]
        %v475 = vld [vmem:[#allocation2 + $0x68] sm:$0xff]
        %v476 = vld [vmem:[#allocation2 + $0x70] sm:$0xff]
        %v477 = vld [vmem:[#allocation2 + $0x78] sm:$0xff]
        %v478 = vld [vmem:[#allocation2 + $0x80] sm:$0xff]
        %v479 = vld [vmem:[#allocation2 + $0x88] sm:$0xff]
        %v480 = vld [vmem:[#allocation2 + $0x90] sm:$0xff]
        %v481 = vld [vmem:[#allocation2 + $0x98] sm:$0xff]
        %v482 = vld [vmem:[#allocation2 + $0xa0] sm:$0xff]
        %v483 = vld [vmem:[#allocation2 + $0xa8] sm:$0xff]
        %v484 = vld [vmem:[#allocation2 + $0xb0] sm:$0xff]
        %v485 = vld [vmem:[#allocation2 + $0xb8] sm:$0xff]
        %v486 = vld [vmem:[#allocation2 + $0xc0] sm:$0xff]
        %v487 = vld [vmem:[#allocation2 + $0xc8] sm:$0xff]
        %v488 = vld [vmem:[#allocation2 + $0xd0] sm:$0xff]
        %v489 = vld [vmem:[#allocation2 + $0xd8] sm:$0xff]
        %v490 = vld [vmem:[#allocation2 + $0xe0] sm:$0xff]
        %v491 = vld [vmem:[#allocation2 + $0xe8] sm:$0xff]
        %v492 = vld [vmem:[#allocation2 + $0xf0] sm:$0xff]
        %v493 = vld [vmem:[#allocation2 + $0xf8] sm:$0xff]
        %v494 = vld [vmem:[#allocation2 + $0x100] sm:$0xff]
        %v495 = vld [vmem:[#allocation2 + $0x108] sm:$0xff]
        %v496 = vld [vmem:[#allocation2 + $0x110] sm:$0xff]
        %v497 = vld [vmem:[#allocation2 + $0x118] sm:$0xff]
        %v498 = vld [vmem:[#allocation2 + $0x120] sm:$0xff]
        %v499 = vld [vmem:[#allocation2 + $0x128] sm:$0xff]
        %v500 = vld [vmem:[#allocation2 + $0x130] sm:$0xff]
        %v501 = vld [vmem:[#allocation2 + $0x138] sm:$0xff]
        %v502 = vld [vmem:[#allocation2 + $0x140] sm:$0xff]
        %v503 = vld [vmem:[#allocation2 + $0x148] sm:$0xff]
        %v504 = vld [vmem:[#allocation2 + $0x150] sm:$0xff]
        %v505 = vld [vmem:[#allocation2 + $0x158] sm:$0xff]
        %v506 = vld [vmem:[#allocation2 + $0x160] sm:$0xff]
        %v507 = vld [vmem:[#allocation2 + $0x168] sm:$0xff]
        %v508 = vld [vmem:[#allocation2 + $0x170] sm:$0xff]
        %v509 = vld [vmem:[#allocation2 + $0x178] sm:$0xff]
        %v510 = vld [vmem:[#allocation2 + $0x180] sm:$0xff]
        %v511 = vld [vmem:[#allocation2 + $0x188] sm:$0xff]
        %v512 = vld [vmem:[#allocation2 + $0x190] sm:$0xff]
        %v513 = vld [vmem:[#allocation2 + $0x198] sm:$0xff]
        %v514 = vld [vmem:[#allocation2 + $0x1a0] sm:$0xff]
        %v515 = vld [vmem:[#allocation2 + $0x1a8] sm:$0xff]
        %v516 = vld [vmem:[#allocation2 + $0x1b0] sm:$0xff]
        %v517 = vld [vmem:[#allocation2 + $0x1b8] sm:$0xff]
        %v518 = vld [vmem:[#allocation2 + $0x1c0] sm:$0xff]
        %v519 = vld [vmem:[#allocation2 + $0x1c8] sm:$0xff]
        %v520 = vld [vmem:[#allocation2 + $0x1d0] sm:$0xff]
        %v521 = vld [vmem:[#allocation2 + $0x1d8] sm:$0xff]
        %v522 = vld [vmem:[#allocation2 + $0x1e0] sm:$0xff]
        %v523 = vld [vmem:[#allocation2 + $0x1e8] sm:$0xff]
        %v524 = vld [vmem:[#allocation2 + $0x1f0] sm:$0xff]
        %v525 = vld [vmem:[#allocation2 + $0x1f8] sm:$0xff]
        %v526 = vld [vmem:[#allocation2 + $0x200] sm:$0xff]
        %v527 = vld [vmem:[#allocation2 + $0x208] sm:$0xff]
        %v528 = vld [vmem:[#allocation2 + $0x210] sm:$0xff]
        %v529 = vld [vmem:[#allocation2 + $0x218] sm:$0xff]
        %v530 = vld [vmem:[#allocation2 + $0x220] sm:$0xff]
        %v531 = vld [vmem:[#allocation2 + $0x228] sm:$0xff]
        %v532 = vld [vmem:[#allocation2 + $0x230] sm:$0xff]
        %v533 = vld [vmem:[#allocation2 + $0x238] sm:$0xff]
        %v534 = vld [vmem:[#allocation2 + $0x240] sm:$0xf]
        %v535 = vld [vmem:[#allocation2 + $0x248] sm:$0xf]
        %v536 = vld [vmem:[#allocation2 + $0x250] sm:$0xf]
        %v537 = vpack.c.bf16 %v465, %v462
        %v538 = vpack.c.bf16 %v466, %v463
        %v539 = vpack.c.bf16 %v467, %v464
        %v540 = vpack.c.bf16 %v471, %v468
        %v541 = vpack.c.bf16 %v472, %v469
        %v542 = vpack.c.bf16 %v473, %v470
        %v543 = vpack.c.bf16 %v477, %v474
        %v544 = vpack.c.bf16 %v478, %v475
        %v545 = vpack.c.bf16 %v479, %v476
        %v546 = vpack.c.bf16 %v483, %v480
        %v547 = vpack.c.bf16 %v484, %v481
        %v548 = vpack.c.bf16 %v485, %v482
        %v549 = vpack.c.bf16 %v489, %v486
        %v550 = vpack.c.bf16 %v490, %v487
        %v551 = vpack.c.bf16 %v491, %v488
        %v552 = vpack.c.bf16 %v495, %v492
        %v553 = vpack.c.bf16 %v496, %v493
        %v554 = vpack.c.bf16 %v497, %v494
        %v555 = vpack.c.bf16 %v501, %v498
        %v556 = vpack.c.bf16 %v502, %v499
        %v557 = vpack.c.bf16 %v503, %v500
        %v558 = vpack.c.bf16 %v507, %v504
        %v559 = vpack.c.bf16 %v508, %v505
        %v560 = vpack.c.bf16 %v509, %v506
        %v561 = vpack.c.bf16 %v513, %v510
        %v562 = vpack.c.bf16 %v514, %v511
        %v563 = vpack.c.bf16 %v515, %v512
        %v564 = vpack.c.bf16 %v519, %v516
        %v565 = vpack.c.bf16 %v520, %v517
        %v566 = vpack.c.bf16 %v521, %v518
        %v567 = vpack.c.bf16 %v525, %v522
        %v568 = vpack.c.bf16 %v526, %v523
        %v569 = vpack.c.bf16 %v527, %v524
        %v570 = vpack.c.bf16 %v531, %v528
        %v571 = vpack.c.bf16 %v532, %v529
        %v572 = vpack.c.bf16 %v533, %v530
        %v573 = vpack.c.bf16 %v534, %v534
        %v574 = vpack.c.bf16 %v535, %v535
        %v575 = vpack.c.bf16 %v536, %v536
        %v576 = vld [vmem:[%s306] sm:$0xff]
        %v577 = vld [vmem:[%s306 + $0x8] sm:$0xff]
        %v578 = vld [vmem:[%s306 + $0x10] sm:$0xff]
        %v579 = vld [vmem:[%s306 + $0x18] sm:$0xff]
        %v580 = vld [vmem:[%s306 + $0x20] sm:$0xff]
        %v581 = vld [vmem:[%s306 + $0x28] sm:$0xff]
        %v582 = vld [vmem:[%s306 + $0x30] sm:$0xff]
        %v583 = vld [vmem:[%s306 + $0x38] sm:$0xff]
        %v584 = vld [vmem:[%s306 + $0x40] sm:$0xff]
        %v585 = vld [vmem:[%s306 + $0x48] sm:$0xff]
        %v586 = vld [vmem:[%s306 + $0x50] sm:$0xff]
        %v587 = vld [vmem:[%s306 + $0x58] sm:$0xff]
        %v588 = vld [vmem:[%s306 + $0x60] sm:$0xff]
        %v589 = vld [vmem:[%s306 + $0x68] sm:$0xff]
        %v590 = vld [vmem:[%s306 + $0x70] sm:$0xff]
        %v591 = vld [vmem:[%s306 + $0x78] sm:$0xff]
        %v592 = vld [vmem:[%s306 + $0x80] sm:$0xff]
        %v593 = vld [vmem:[%s306 + $0x88] sm:$0xff]
        %v594 = vld [vmem:[%s306 + $0x90] sm:$0xff]
        %v595 = vld [vmem:[%s306 + $0x98] sm:$0xff]
        %v596 = vld [vmem:[%s306 + $0xa0] sm:$0xff]
        %v597 = vld [vmem:[%s306 + $0xa8] sm:$0xff]
        %v598 = vld [vmem:[%s306 + $0xb0] sm:$0xff]
        %v599 = vld [vmem:[%s306 + $0xb8] sm:$0xff]
        %v600 = vld [vmem:[%s306 + $0xc0] sm:$0xff]
        %v601 = vld [vmem:[%s306 + $0xc8] sm:$0xff]
        %v602 = vld [vmem:[%s306 + $0xd0] sm:$0xff]
        %v603 = vld [vmem:[%s306 + $0xd8] sm:$0xff]
        %v604 = vld [vmem:[%s306 + $0xe0] sm:$0xff]
        %v605 = vld [vmem:[%s306 + $0xe8] sm:$0xff]
        %v606 = vld [vmem:[%s306 + $0xf0] sm:$0xff]
        %v607 = vld [vmem:[%s306 + $0xf8] sm:$0xff]
        %v608 = vld [vmem:[%s306 + $0x100] sm:$0xff]
        %v609 = vld [vmem:[%s306 + $0x108] sm:$0xff]
        %v610 = vld [vmem:[%s306 + $0x110] sm:$0xff]
        %v611 = vld [vmem:[%s306 + $0x118] sm:$0xff]
        %v612 = vld [vmem:[%s306 + $0x120] sm:$0xff]
        %v613 = vld [vmem:[%s306 + $0x128] sm:$0xff]
        %v614 = vld [vmem:[%s306 + $0x130] sm:$0xff]
        %v615 = vld [vmem:[%s306 + $0x138] sm:$0xff]
        %v616 = vld [vmem:[%s306 + $0x140] sm:$0xff]
        %v617 = vld [vmem:[%s306 + $0x148] sm:$0xff]
        %v618 = vld [vmem:[%s306 + $0x150] sm:$0xff]
        %v619 = vld [vmem:[%s306 + $0x158] sm:$0xff]
        %v620 = vld [vmem:[%s306 + $0x160] sm:$0xff]
        %v621 = vld [vmem:[%s306 + $0x168] sm:$0xff]
        %v622 = vld [vmem:[%s306 + $0x170] sm:$0xff]
        %v623 = vld [vmem:[%s306 + $0x178] sm:$0xff]
        %v624 = vld [vmem:[%s306 + $0x180] sm:$0xff]
        %v625 = vld [vmem:[%s306 + $0x188] sm:$0xff]
        %v626 = vld [vmem:[%s306 + $0x190] sm:$0xff]
        %v627 = vld [vmem:[%s306 + $0x198] sm:$0xff]
        %v628 = vld [vmem:[%s306 + $0x1a0] sm:$0xff]
        %v629 = vld [vmem:[%s306 + $0x1a8] sm:$0xff]
        %v630 = vld [vmem:[%s306 + $0x1b0] sm:$0xff]
        %v631 = vld [vmem:[%s306 + $0x1b8] sm:$0xff]
        %v632 = vld [vmem:[%s306 + $0x1c0] sm:$0xff]
        %v633 = vld [vmem:[%s306 + $0x1c8] sm:$0xff]
        %v634 = vld [vmem:[%s306 + $0x1d0] sm:$0xff]
        %v635 = vld [vmem:[%s306 + $0x1d8] sm:$0xff]
        %v636 = vld [vmem:[%s306 + $0x1e0] sm:$0xff]
        %v637 = vld [vmem:[%s306 + $0x1e8] sm:$0xff]
        %v638 = vld [vmem:[%s306 + $0x1f0] sm:$0xff]
        %v639 = vld [vmem:[%s306 + $0x1f8] sm:$0xff]
        %v640 = vld [vmem:[%s306 + $0x200] sm:$0xff]
        %v641 = vld [vmem:[%s306 + $0x208] sm:$0xff]
        %v642 = vld [vmem:[%s306 + $0x210] sm:$0xff]
        %v643 = vld [vmem:[%s306 + $0x218] sm:$0xff]
        %v644 = vld [vmem:[%s306 + $0x220] sm:$0xff]
        %v645 = vld [vmem:[%s306 + $0x228] sm:$0xff]
        %v646 = vld [vmem:[%s306 + $0x230] sm:$0xff]
        %v647 = vld [vmem:[%s306 + $0x238] sm:$0xff]
        %v648 = vld [vmem:[%s306 + $0x240] sm:$0xff]
        %v649 = vld [vmem:[%s306 + $0x248] sm:$0xff]
        %v650 = vld [vmem:[%s306 + $0x250] sm:$0xff]
        %v651 = vld [vmem:[%s306 + $0x258] sm:$0xff]
        %v652 = vld [vmem:[%s306 + $0x260] sm:$0xff]
        %v653 = vld [vmem:[%s306 + $0x268] sm:$0xff]
        %v654 = vld [vmem:[%s306 + $0x270] sm:$0xff]
        %v655 = vld [vmem:[%s306 + $0x278] sm:$0xff]
        %v656 = vld [vmem:[%s306 + $0x280] sm:$0xff]
        %v657 = vld [vmem:[%s306 + $0x288] sm:$0xff]
        %v658 = vld [vmem:[%s306 + $0x290] sm:$0xff]
        %v659 = vld [vmem:[%s306 + $0x298] sm:$0xff]
        %v660 = vld [vmem:[%s306 + $0x2a0] sm:$0xff]
        %v661 = vld [vmem:[%s306 + $0x2a8] sm:$0xff]
        %v662 = vld [vmem:[%s306 + $0x2b0] sm:$0xff]
        %v663 = vld [vmem:[%s306 + $0x2b8] sm:$0xff]
        %v664 = vld [vmem:[%s306 + $0x2c0] sm:$0xff]
        %v665 = vld [vmem:[%s306 + $0x2c8] sm:$0xff]
        %v666 = vld [vmem:[%s306 + $0x2d0] sm:$0xff]
        %v667 = vld [vmem:[%s306 + $0x2d8] sm:$0xff]
        %v668 = vld [vmem:[%s306 + $0x2e0] sm:$0xff]
        %v669 = vld [vmem:[%s306 + $0x2e8] sm:$0xff]
        %v670 = vld [vmem:[%s306 + $0x2f0] sm:$0xff]
        %v671 = vld [vmem:[%s306 + $0x2f8] sm:$0xff]
        %v672 = vld [vmem:[%s306 + $0x300] sm:$0xff]
        %v673 = vld [vmem:[%s306 + $0x308] sm:$0xff]
        %v674 = vld [vmem:[%s306 + $0x310] sm:$0xff]
        %v675 = vld [vmem:[%s306 + $0x318] sm:$0xff]
        %v676 = vld [vmem:[%s306 + $0x320] sm:$0xff]
        %v677 = vld [vmem:[%s306 + $0x328] sm:$0xff]
        %v678 = vld [vmem:[%s306 + $0x330] sm:$0xff]
        %v679 = vld [vmem:[%s306 + $0x338] sm:$0xff]
        %v680 = vld [vmem:[%s306 + $0x340] sm:$0xff]
        %v681 = vld [vmem:[%s306 + $0x348] sm:$0xff]
        %v682 = vld [vmem:[%s306 + $0x350] sm:$0xff]
        %v683 = vld [vmem:[%s306 + $0x358] sm:$0xff]
        %v684 = vld [vmem:[%s306 + $0x360] sm:$0xff]
        %v685 = vld [vmem:[%s306 + $0x368] sm:$0xff]
        %v686 = vld [vmem:[%s306 + $0x370] sm:$0xff]
        %v687 = vld [vmem:[%s306 + $0x378] sm:$0xff]
        %v688 = vld [vmem:[%s306 + $0x380] sm:$0xff]
        %v689 = vld [vmem:[%s306 + $0x388] sm:$0xff]
        %v690 = vld [vmem:[%s306 + $0x390] sm:$0xff]
        %v691 = vld [vmem:[%s306 + $0x398] sm:$0xff]
        %v692 = vld [vmem:[%s306 + $0x3a0] sm:$0xff]
        %v693 = vld [vmem:[%s306 + $0x3a8] sm:$0xff]
        %v694 = vld [vmem:[%s306 + $0x3b0] sm:$0xff]
        %v695 = vld [vmem:[%s306 + $0x3b8] sm:$0xff]
        %v696 = vld [vmem:[%s306 + $0x3c0] sm:$0xff]
        %v697 = vld [vmem:[%s306 + $0x3c8] sm:$0xff]
        %v698 = vld [vmem:[%s306 + $0x3d0] sm:$0xff]
        %v699 = vld [vmem:[%s306 + $0x3d8] sm:$0xff]
        %v700 = vld [vmem:[%s306 + $0x3e0] sm:$0xff]
        %v701 = vld [vmem:[%s306 + $0x3e8] sm:$0xff]
        %v702 = vld [vmem:[%s306 + $0x3f0] sm:$0xff]
        %v703 = vld [vmem:[%s306 + $0x3f8] sm:$0xff]
        %v704 = vld [vmem:[%s306 + $0x400] sm:$0xff]
        %v705 = vld [vmem:[%s306 + $0x408] sm:$0xff]
        %v706 = vld [vmem:[%s306 + $0x410] sm:$0xff]
        %v707 = vld [vmem:[%s306 + $0x418] sm:$0xff]
        %v708 = vld [vmem:[%s306 + $0x420] sm:$0xff]
        %v709 = vld [vmem:[%s306 + $0x428] sm:$0xff]
        %v710 = vld [vmem:[%s306 + $0x430] sm:$0xff]
        %v711 = vld [vmem:[%s306 + $0x438] sm:$0xff]
        %v712 = vld [vmem:[%s306 + $0x440] sm:$0xff]
        %v713 = vld [vmem:[%s306 + $0x448] sm:$0xff]
        %v714 = vld [vmem:[%s306 + $0x450] sm:$0xff]
        %v715 = vld [vmem:[%s306 + $0x458] sm:$0xff]
        %v716 = vld [vmem:[%s306 + $0x460] sm:$0xff]
        %v717 = vld [vmem:[%s306 + $0x468] sm:$0xff]
        %v718 = vld [vmem:[%s306 + $0x470] sm:$0xff]
        %v719 = vld [vmem:[%s306 + $0x478] sm:$0xff]
        %v720 = vld [vmem:[%s315] sm:$0x3f]
        %v722 = vlaneseq
        %v723 = vshrl.u32 %v722, 7
        %v724 = vsub.s32 0, %v723
        %v725 = vrot.slane %v720, %v724
        %v726 = vlaneseq
        %v727 = vshrl.u32 %v726, 7
        %v728 = vsub.s32 1, %v727
        %v729 = vrot.slane %v720, %v728
        %v730 = vlaneseq
        %v731 = vshrl.u32 %v730, 7
        %v732 = vsub.s32 2, %v731
        %v733 = vrot.slane %v720, %v732
        %v734 = vlaneseq
        %v735 = vshrl.u32 %v734, 7
        %v736 = vsub.s32 3, %v735
        %v737 = vrot.slane %v720, %v736
        %v738 = vlaneseq
        %v739 = vshrl.u32 %v738, 7
        %v740 = vsub.s32 4, %v739
        %v741 = vrot.slane %v720, %v740
        %v742 = vlaneseq
        %v743 = vshrl.u32 %v742, 7
        %v744 = vsub.s32 5, %v743
        %v745 = vrot.slane %v720, %v744
        %v896 = vunpack.c.l.b16 %v576
        %v897 = vunpack.c.h.b16 %v576
        %v898 = vunpack.c.l.b16 %v577
        %v899 = vunpack.c.h.b16 %v577
        %v900 = vunpack.c.l.b16 %v578
        %v901 = vunpack.c.h.b16 %v578
        %v902 = vunpack.c.l.b16 %v579
        %v903 = vunpack.c.h.b16 %v579
        %v904 = vunpack.c.l.b16 %v580
        %v905 = vunpack.c.h.b16 %v580
        %v906 = vunpack.c.l.b16 %v581
        %v907 = vunpack.c.h.b16 %v581
        %v908 = vunpack.c.l.b16 %v582
        %v909 = vunpack.c.h.b16 %v582
        %v910 = vunpack.c.l.b16 %v583
        %v911 = vunpack.c.h.b16 %v583
        %v912 = vunpack.c.l.b16 %v584
        %v913 = vunpack.c.h.b16 %v584
        %v914 = vunpack.c.l.b16 %v585
        %v915 = vunpack.c.h.b16 %v585
        %v916 = vunpack.c.l.b16 %v586
        %v917 = vunpack.c.h.b16 %v586
        %v918 = vunpack.c.l.b16 %v587
        %v919 = vunpack.c.h.b16 %v587
        %v920 = vunpack.c.l.b16 %v588
        %v921 = vunpack.c.h.b16 %v588
        %v922 = vunpack.c.l.b16 %v589
        %v923 = vunpack.c.h.b16 %v589
        %v924 = vunpack.c.l.b16 %v590
        %v925 = vunpack.c.h.b16 %v590
        %v926 = vunpack.c.l.b16 %v591
        %v927 = vunpack.c.h.b16 %v591
        %v928 = vunpack.c.l.b16 %v592
        %v929 = vunpack.c.h.b16 %v592
        %v930 = vunpack.c.l.b16 %v593
        %v931 = vunpack.c.h.b16 %v593
        %v932 = vunpack.c.l.b16 %v594
        %v933 = vunpack.c.h.b16 %v594
        %v934 = vunpack.c.l.b16 %v595
        %v935 = vunpack.c.h.b16 %v595
        %v936 = vunpack.c.l.b16 %v596
        %v937 = vunpack.c.h.b16 %v596
        %v938 = vunpack.c.l.b16 %v597
        %v939 = vunpack.c.h.b16 %v597
        %v940 = vunpack.c.l.b16 %v598
        %v941 = vunpack.c.h.b16 %v598
        %v942 = vunpack.c.l.b16 %v599
        %v943 = vunpack.c.h.b16 %v599
        %v944 = vunpack.c.l.b16 %v600
        %v945 = vunpack.c.h.b16 %v600
        %v946 = vunpack.c.l.b16 %v601
        %v947 = vunpack.c.h.b16 %v601
        %v948 = vunpack.c.l.b16 %v602
        %v949 = vunpack.c.h.b16 %v602
        %v950 = vunpack.c.l.b16 %v603
        %v951 = vunpack.c.h.b16 %v603
        %v952 = vunpack.c.l.b16 %v604
        %v953 = vunpack.c.h.b16 %v604
        %v954 = vunpack.c.l.b16 %v605
        %v955 = vunpack.c.h.b16 %v605
        %v956 = vunpack.c.l.b16 %v606
        %v957 = vunpack.c.h.b16 %v606
        %v958 = vunpack.c.l.b16 %v607
        %v959 = vunpack.c.h.b16 %v607
        %v960 = vunpack.c.l.b16 %v608
        %v961 = vunpack.c.h.b16 %v608
        %v962 = vunpack.c.l.b16 %v609
        %v963 = vunpack.c.h.b16 %v609
        %v964 = vunpack.c.l.b16 %v610
        %v965 = vunpack.c.h.b16 %v610
        %v966 = vunpack.c.l.b16 %v611
        %v967 = vunpack.c.h.b16 %v611
        %v968 = vunpack.c.l.b16 %v612
        %v969 = vunpack.c.h.b16 %v612
        %v970 = vunpack.c.l.b16 %v613
        %v971 = vunpack.c.h.b16 %v613
        %v972 = vunpack.c.l.b16 %v614
        %v973 = vunpack.c.h.b16 %v614
        %v974 = vunpack.c.l.b16 %v615
        %v975 = vunpack.c.h.b16 %v615
        %v976 = vunpack.c.l.b16 %v616
        %v977 = vunpack.c.h.b16 %v616
        %v978 = vunpack.c.l.b16 %v617
        %v979 = vunpack.c.h.b16 %v617
        %v980 = vunpack.c.l.b16 %v618
        %v981 = vunpack.c.h.b16 %v618
        %v982 = vunpack.c.l.b16 %v619
        %v983 = vunpack.c.h.b16 %v619
        %v984 = vunpack.c.l.b16 %v620
        %v985 = vunpack.c.h.b16 %v620
        %v986 = vunpack.c.l.b16 %v621
        %v987 = vunpack.c.h.b16 %v621
        %v988 = vunpack.c.l.b16 %v622
        %v989 = vunpack.c.h.b16 %v622
        %v990 = vunpack.c.l.b16 %v623
        %v991 = vunpack.c.h.b16 %v623
        %v992 = vunpack.c.l.b16 %v624
        %v993 = vunpack.c.h.b16 %v624
        %v994 = vunpack.c.l.b16 %v625
        %v995 = vunpack.c.h.b16 %v625
        %v996 = vunpack.c.l.b16 %v626
        %v997 = vunpack.c.h.b16 %v626
        %v998 = vunpack.c.l.b16 %v627
        %v999 = vunpack.c.h.b16 %v627
        %v1000 = vunpack.c.l.b16 %v628
        %v1001 = vunpack.c.h.b16 %v628
        %v1002 = vunpack.c.l.b16 %v629
        %v1003 = vunpack.c.h.b16 %v629
        %v1004 = vunpack.c.l.b16 %v630
        %v1005 = vunpack.c.h.b16 %v630
        %v1006 = vunpack.c.l.b16 %v631
        %v1007 = vunpack.c.h.b16 %v631
        %v1008 = vunpack.c.l.b16 %v632
        %v1009 = vunpack.c.h.b16 %v632
        %v1010 = vunpack.c.l.b16 %v633
        %v1011 = vunpack.c.h.b16 %v633
        %v1012 = vunpack.c.l.b16 %v634
        %v1013 = vunpack.c.h.b16 %v634
        %v1014 = vunpack.c.l.b16 %v635
        %v1015 = vunpack.c.h.b16 %v635
        %v1016 = vunpack.c.l.b16 %v636
        %v1017 = vunpack.c.h.b16 %v636
        %v1018 = vunpack.c.l.b16 %v637
        %v1019 = vunpack.c.h.b16 %v637
        %v1020 = vunpack.c.l.b16 %v638
        %v1021 = vunpack.c.h.b16 %v638
        %v1022 = vunpack.c.l.b16 %v639
        %v1023 = vunpack.c.h.b16 %v639
        %v1024 = vunpack.c.l.b16 %v640
        %v1025 = vunpack.c.h.b16 %v640
        %v1026 = vunpack.c.l.b16 %v641
        %v1027 = vunpack.c.h.b16 %v641
        %v1028 = vunpack.c.l.b16 %v642
        %v1029 = vunpack.c.h.b16 %v642
        %v1030 = vunpack.c.l.b16 %v643
        %v1031 = vunpack.c.h.b16 %v643
        %v1032 = vunpack.c.l.b16 %v644
        %v1033 = vunpack.c.h.b16 %v644
        %v1034 = vunpack.c.l.b16 %v645
        %v1035 = vunpack.c.h.b16 %v645
        %v1036 = vunpack.c.l.b16 %v646
        %v1037 = vunpack.c.h.b16 %v646
        %v1038 = vunpack.c.l.b16 %v647
        %v1039 = vunpack.c.h.b16 %v647
        %v1040 = vunpack.c.l.b16 %v648
        %v1041 = vunpack.c.h.b16 %v648
        %v1042 = vunpack.c.l.b16 %v649
        %v1043 = vunpack.c.h.b16 %v649
        %v1044 = vunpack.c.l.b16 %v650
        %v1045 = vunpack.c.h.b16 %v650
        %v1046 = vunpack.c.l.b16 %v651
        %v1047 = vunpack.c.h.b16 %v651
        %v1048 = vunpack.c.l.b16 %v652
        %v1049 = vunpack.c.h.b16 %v652
        %v1050 = vunpack.c.l.b16 %v653
        %v1051 = vunpack.c.h.b16 %v653
        %v1052 = vunpack.c.l.b16 %v654
        %v1053 = vunpack.c.h.b16 %v654
        %v1054 = vunpack.c.l.b16 %v655
        %v1055 = vunpack.c.h.b16 %v655
        %v1056 = vunpack.c.l.b16 %v656
        %v1057 = vunpack.c.h.b16 %v656
        %v1058 = vunpack.c.l.b16 %v657
        %v1059 = vunpack.c.h.b16 %v657
        %v1060 = vunpack.c.l.b16 %v658
        %v1061 = vunpack.c.h.b16 %v658
        %v1062 = vunpack.c.l.b16 %v659
        %v1063 = vunpack.c.h.b16 %v659
        %v1064 = vunpack.c.l.b16 %v660
        %v1065 = vunpack.c.h.b16 %v660
        %v1066 = vunpack.c.l.b16 %v661
        %v1067 = vunpack.c.h.b16 %v661
        %v1068 = vunpack.c.l.b16 %v662
        %v1069 = vunpack.c.h.b16 %v662
        %v1070 = vunpack.c.l.b16 %v663
        %v1071 = vunpack.c.h.b16 %v663
        %v1072 = vunpack.c.l.b16 %v664
        %v1073 = vunpack.c.h.b16 %v664
        %v1074 = vunpack.c.l.b16 %v665
        %v1075 = vunpack.c.h.b16 %v665
        %v1076 = vunpack.c.l.b16 %v666
        %v1077 = vunpack.c.h.b16 %v666
        %v1078 = vunpack.c.l.b16 %v667
        %v1079 = vunpack.c.h.b16 %v667
        %v1080 = vunpack.c.l.b16 %v668
        %v1081 = vunpack.c.h.b16 %v668
        %v1082 = vunpack.c.l.b16 %v669
        %v1083 = vunpack.c.h.b16 %v669
        %v1084 = vunpack.c.l.b16 %v670
        %v1085 = vunpack.c.h.b16 %v670
        %v1086 = vunpack.c.l.b16 %v671
        %v1087 = vunpack.c.h.b16 %v671
        %v1088 = vunpack.c.l.b16 %v672
        %v1089 = vunpack.c.h.b16 %v672
        %v1090 = vunpack.c.l.b16 %v673
        %v1091 = vunpack.c.h.b16 %v673
        %v1092 = vunpack.c.l.b16 %v674
        %v1093 = vunpack.c.h.b16 %v674
        %v1094 = vunpack.c.l.b16 %v675
        %v1095 = vunpack.c.h.b16 %v675
        %v1096 = vunpack.c.l.b16 %v676
        %v1097 = vunpack.c.h.b16 %v676
        %v1098 = vunpack.c.l.b16 %v677
        %v1099 = vunpack.c.h.b16 %v677
        %v1100 = vunpack.c.l.b16 %v678
        %v1101 = vunpack.c.h.b16 %v678
        %v1102 = vunpack.c.l.b16 %v679
        %v1103 = vunpack.c.h.b16 %v679
        %v1104 = vunpack.c.l.b16 %v680
        %v1105 = vunpack.c.h.b16 %v680
        %v1106 = vunpack.c.l.b16 %v681
        %v1107 = vunpack.c.h.b16 %v681
        %v1108 = vunpack.c.l.b16 %v682
        %v1109 = vunpack.c.h.b16 %v682
        %v1110 = vunpack.c.l.b16 %v683
        %v1111 = vunpack.c.h.b16 %v683
        %v1112 = vunpack.c.l.b16 %v684
        %v1113 = vunpack.c.h.b16 %v684
        %v1114 = vunpack.c.l.b16 %v685
        %v1115 = vunpack.c.h.b16 %v685
        %v1116 = vunpack.c.l.b16 %v686
        %v1117 = vunpack.c.h.b16 %v686
        %v1118 = vunpack.c.l.b16 %v687
        %v1119 = vunpack.c.h.b16 %v687
        %v1120 = vunpack.c.l.b16 %v688
        %v1121 = vunpack.c.h.b16 %v688
        %v1122 = vunpack.c.l.b16 %v689
        %v1123 = vunpack.c.h.b16 %v689
        %v1124 = vunpack.c.l.b16 %v690
        %v1125 = vunpack.c.h.b16 %v690
        %v1126 = vunpack.c.l.b16 %v691
        %v1127 = vunpack.c.h.b16 %v691
        %v1128 = vunpack.c.l.b16 %v692
        %v1129 = vunpack.c.h.b16 %v692
        %v1130 = vunpack.c.l.b16 %v693
        %v1131 = vunpack.c.h.b16 %v693
        %v1132 = vunpack.c.l.b16 %v694
        %v1133 = vunpack.c.h.b16 %v694
        %v1134 = vunpack.c.l.b16 %v695
        %v1135 = vunpack.c.h.b16 %v695
        %v1136 = vunpack.c.l.b16 %v696
        %v1137 = vunpack.c.h.b16 %v696
        %v1138 = vunpack.c.l.b16 %v697
        %v1139 = vunpack.c.h.b16 %v697
        %v1140 = vunpack.c.l.b16 %v698
        %v1141 = vunpack.c.h.b16 %v698
        %v1142 = vunpack.c.l.b16 %v699
        %v1143 = vunpack.c.h.b16 %v699
        %v1144 = vunpack.c.l.b16 %v700
        %v1145 = vunpack.c.h.b16 %v700
        %v1146 = vunpack.c.l.b16 %v701
        %v1147 = vunpack.c.h.b16 %v701
        %v1148 = vunpack.c.l.b16 %v702
        %v1149 = vunpack.c.h.b16 %v702
        %v1150 = vunpack.c.l.b16 %v703
        %v1151 = vunpack.c.h.b16 %v703
        %v1152 = vunpack.c.l.b16 %v704
        %v1153 = vunpack.c.h.b16 %v704
        %v1154 = vunpack.c.l.b16 %v705
        %v1155 = vunpack.c.h.b16 %v705
        %v1156 = vunpack.c.l.b16 %v706
        %v1157 = vunpack.c.h.b16 %v706
        %v1158 = vunpack.c.l.b16 %v707
        %v1159 = vunpack.c.h.b16 %v707
        %v1160 = vunpack.c.l.b16 %v708
        %v1161 = vunpack.c.h.b16 %v708
        %v1162 = vunpack.c.l.b16 %v709
        %v1163 = vunpack.c.h.b16 %v709
        %v1164 = vunpack.c.l.b16 %v710
        %v1165 = vunpack.c.h.b16 %v710
        %v1166 = vunpack.c.l.b16 %v711
        %v1167 = vunpack.c.h.b16 %v711
        %v1168 = vunpack.c.l.b16 %v712
        %v1169 = vunpack.c.h.b16 %v712
        %v1170 = vunpack.c.l.b16 %v713
        %v1171 = vunpack.c.h.b16 %v713
        %v1172 = vunpack.c.l.b16 %v714
        %v1173 = vunpack.c.h.b16 %v714
        %v1174 = vunpack.c.l.b16 %v715
        %v1175 = vunpack.c.h.b16 %v715
        %v1176 = vunpack.c.l.b16 %v716
        %v1177 = vunpack.c.h.b16 %v716
        %v1178 = vunpack.c.l.b16 %v717
        %v1179 = vunpack.c.h.b16 %v717
        %v1180 = vunpack.c.l.b16 %v718
        %v1181 = vunpack.c.h.b16 %v718
        %v1182 = vunpack.c.l.b16 %v719
        %v1183 = vunpack.c.h.b16 %v719
        %v1184 = vpack.c.b16 %v902, %v896
        %v1185 = vpack.c.b16 %v903, %v897
        %v1186 = vpack.c.b16 %v904, %v898
        %v1187 = vpack.c.b16 %v905, %v899
        %v1188 = vpack.c.b16 %v906, %v900
        %v1189 = vpack.c.b16 %v907, %v901
        %v1190 = vpack.c.b16 %v914, %v908
        %v1191 = vpack.c.b16 %v915, %v909
        %v1192 = vpack.c.b16 %v916, %v910
        %v1193 = vpack.c.b16 %v917, %v911
        %v1194 = vpack.c.b16 %v918, %v912
        %v1195 = vpack.c.b16 %v919, %v913
        %v1196 = vpack.c.b16 %v926, %v920
        %v1197 = vpack.c.b16 %v927, %v921
        %v1198 = vpack.c.b16 %v928, %v922
        %v1199 = vpack.c.b16 %v929, %v923
        %v1200 = vpack.c.b16 %v930, %v924
        %v1201 = vpack.c.b16 %v931, %v925
        %v1202 = vpack.c.b16 %v938, %v932
        %v1203 = vpack.c.b16 %v939, %v933
        %v1204 = vpack.c.b16 %v940, %v934
        %v1205 = vpack.c.b16 %v941, %v935
        %v1206 = vpack.c.b16 %v942, %v936
        %v1207 = vpack.c.b16 %v943, %v937
        %v1208 = vpack.c.b16 %v950, %v944
        %v1209 = vpack.c.b16 %v951, %v945
        %v1210 = vpack.c.b16 %v952, %v946
        %v1211 = vpack.c.b16 %v953, %v947
        %v1212 = vpack.c.b16 %v954, %v948
        %v1213 = vpack.c.b16 %v955, %v949
        %v1214 = vpack.c.b16 %v962, %v956
        %v1215 = vpack.c.b16 %v963, %v957
        %v1216 = vpack.c.b16 %v964, %v958
        %v1217 = vpack.c.b16 %v965, %v959
        %v1218 = vpack.c.b16 %v966, %v960
        %v1219 = vpack.c.b16 %v967, %v961
        %v1220 = vpack.c.b16 %v974, %v968
        %v1221 = vpack.c.b16 %v975, %v969
        %v1222 = vpack.c.b16 %v976, %v970
        %v1223 = vpack.c.b16 %v977, %v971
        %v1224 = vpack.c.b16 %v978, %v972
        %v1225 = vpack.c.b16 %v979, %v973
        %v1226 = vpack.c.b16 %v986, %v980
        %v1227 = vpack.c.b16 %v987, %v981
        %v1228 = vpack.c.b16 %v988, %v982
        %v1229 = vpack.c.b16 %v989, %v983
        %v1230 = vpack.c.b16 %v990, %v984
        %v1231 = vpack.c.b16 %v991, %v985
        %v1232 = vpack.c.b16 %v998, %v992
        %v1233 = vpack.c.b16 %v999, %v993
        %v1234 = vpack.c.b16 %v1000, %v994
        %v1235 = vpack.c.b16 %v1001, %v995
        %v1236 = vpack.c.b16 %v1002, %v996
        %v1237 = vpack.c.b16 %v1003, %v997
        %v1238 = vpack.c.b16 %v1010, %v1004
        %v1239 = vpack.c.b16 %v1011, %v1005
        %v1240 = vpack.c.b16 %v1012, %v1006
        %v1241 = vpack.c.b16 %v1013, %v1007
        %v1242 = vpack.c.b16 %v1014, %v1008
        %v1243 = vpack.c.b16 %v1015, %v1009
        %v1244 = vpack.c.b16 %v1022, %v1016
        %v1245 = vpack.c.b16 %v1023, %v1017
        %v1246 = vpack.c.b16 %v1024, %v1018
        %v1247 = vpack.c.b16 %v1025, %v1019
        %v1248 = vpack.c.b16 %v1026, %v1020
        %v1249 = vpack.c.b16 %v1027, %v1021
        %v1250 = vpack.c.b16 %v1034, %v1028
        %v1251 = vpack.c.b16 %v1035, %v1029
        %v1252 = vpack.c.b16 %v1036, %v1030
        %v1253 = vpack.c.b16 %v1037, %v1031
        %v1254 = vpack.c.b16 %v1038, %v1032
        %v1255 = vpack.c.b16 %v1039, %v1033
        %v1256 = vpack.c.b16 %v1046, %v1040
        %v1257 = vpack.c.b16 %v1047, %v1041
        %v1258 = vpack.c.b16 %v1048, %v1042
        %v1259 = vpack.c.b16 %v1049, %v1043
        %v1260 = vpack.c.b16 %v1050, %v1044
        %v1261 = vpack.c.b16 %v1051, %v1045
        %v1262 = vpack.c.b16 %v1058, %v1052
        %v1263 = vpack.c.b16 %v1059, %v1053
        %v1264 = vpack.c.b16 %v1060, %v1054
        %v1265 = vpack.c.b16 %v1061, %v1055
        %v1266 = vpack.c.b16 %v1062, %v1056
        %v1267 = vpack.c.b16 %v1063, %v1057
        %v1268 = vpack.c.b16 %v1070, %v1064
        %v1269 = vpack.c.b16 %v1071, %v1065
        %v1270 = vpack.c.b16 %v1072, %v1066
        %v1271 = vpack.c.b16 %v1073, %v1067
        %v1272 = vpack.c.b16 %v1074, %v1068
        %v1273 = vpack.c.b16 %v1075, %v1069
        %v1274 = vpack.c.b16 %v1082, %v1076
        %v1275 = vpack.c.b16 %v1083, %v1077
        %v1276 = vpack.c.b16 %v1084, %v1078
        %v1277 = vpack.c.b16 %v1085, %v1079
        %v1278 = vpack.c.b16 %v1086, %v1080
        %v1279 = vpack.c.b16 %v1087, %v1081
        %v1280 = vpack.c.b16 %v1094, %v1088
        %v1281 = vpack.c.b16 %v1095, %v1089
        %v1282 = vpack.c.b16 %v1096, %v1090
        %v1283 = vpack.c.b16 %v1097, %v1091
        %v1284 = vpack.c.b16 %v1098, %v1092
        %v1285 = vpack.c.b16 %v1099, %v1093
        %v1286 = vpack.c.b16 %v1106, %v1100
        %v1287 = vpack.c.b16 %v1107, %v1101
        %v1288 = vpack.c.b16 %v1108, %v1102
        %v1289 = vpack.c.b16 %v1109, %v1103
        %v1290 = vpack.c.b16 %v1110, %v1104
        %v1291 = vpack.c.b16 %v1111, %v1105
        %v1292 = vpack.c.b16 %v1118, %v1112
        %v1293 = vpack.c.b16 %v1119, %v1113
        %v1294 = vpack.c.b16 %v1120, %v1114
        %v1295 = vpack.c.b16 %v1121, %v1115
        %v1296 = vpack.c.b16 %v1122, %v1116
        %v1297 = vpack.c.b16 %v1123, %v1117
        %v1298 = vpack.c.b16 %v1130, %v1124
        %v1299 = vpack.c.b16 %v1131, %v1125
        %v1300 = vpack.c.b16 %v1132, %v1126
        %v1301 = vpack.c.b16 %v1133, %v1127
        %v1302 = vpack.c.b16 %v1134, %v1128
        %v1303 = vpack.c.b16 %v1135, %v1129
        %v1304 = vpack.c.b16 %v1142, %v1136
        %v1305 = vpack.c.b16 %v1143, %v1137
        %v1306 = vpack.c.b16 %v1144, %v1138
        %v1307 = vpack.c.b16 %v1145, %v1139
        %v1308 = vpack.c.b16 %v1146, %v1140
        %v1309 = vpack.c.b16 %v1147, %v1141
        %v1310 = vpack.c.b16 %v1154, %v1148
        %v1311 = vpack.c.b16 %v1155, %v1149
        %v1312 = vpack.c.b16 %v1156, %v1150
        %v1313 = vpack.c.b16 %v1157, %v1151
        %v1314 = vpack.c.b16 %v1158, %v1152
        %v1315 = vpack.c.b16 %v1159, %v1153
        %v1316 = vpack.c.b16 %v1166, %v1160
        %v1317 = vpack.c.b16 %v1167, %v1161
        %v1318 = vpack.c.b16 %v1168, %v1162
        %v1319 = vpack.c.b16 %v1169, %v1163
        %v1320 = vpack.c.b16 %v1170, %v1164
        %v1321 = vpack.c.b16 %v1171, %v1165
        %v1322 = vpack.c.b16 %v1178, %v1172
        %v1323 = vpack.c.b16 %v1179, %v1173
        %v1324 = vpack.c.b16 %v1180, %v1174
        %v1325 = vpack.c.b16 %v1181, %v1175
        %v1326 = vpack.c.b16 %v1182, %v1176
        %v1327 = vpack.c.b16 %v1183, %v1177
        %1472 = vmatprep.subr.bf16.mxu0 %v1185
        %1473 = vmatpush1.bf16.msra.mxu0 %v1184
        %1474 = vmatprep.subr.bf16.mxu0 %v1191
        %1475 = vmatpush1.bf16.msra.mxu0 %v1190
        %1476 = vmatprep.subr.bf16.mxu0 %v1197
        %1477 = vmatpush1.bf16.msra.mxu0 %v1196
        %1478 = vmatprep.subr.bf16.mxu0 %v1203
        %1479 = vmatpush1.bf16.msra.mxu0 %v1202
        %1480 = vmatprep.subr.bf16.mxu0 %v1209
        %1481 = vmatpush1.bf16.msra.mxu0 %v1208
        %1482 = vmatprep.subr.bf16.mxu0 %v1215
        %1483 = vmatpush1.bf16.msra.mxu0 %v1214
        %1484 = vmatprep.subr.bf16.mxu0 %v1221
        %1485 = vmatpush1.bf16.msra.mxu0 %v1220
        %1486 = vmatprep.subr.bf16.mxu0 %v1227
        %1487 = vmatpush1.bf16.msra.mxu0 %v1226
        %1488 = vmatprep.subr.bf16.mxu0 %v1233
        %1489 = vmatpush1.bf16.msra.mxu0 %v1232
        %1490 = vmatprep.subr.bf16.mxu0 %v1239
        %1491 = vmatpush1.bf16.msra.mxu0 %v1238
        %1492 = vmatprep.subr.bf16.mxu0 %v1245
        %1493 = vmatpush1.bf16.msra.mxu0 %v1244
        %1494 = vmatprep.subr.bf16.mxu0 %v1251
        %1495 = vmatpush1.bf16.msra.mxu0 %v1250
        %1496 = vmatprep.subr.bf16.mxu0 %v1257
        %1497 = vmatpush1.bf16.msra.mxu0 %v1256
        %1498 = vmatprep.subr.bf16.mxu0 %v1263
        %1499 = vmatpush1.bf16.msra.mxu0 %v1262
        %1500 = vmatprep.subr.bf16.mxu0 %v1269
        %1501 = vmatpush1.bf16.msra.mxu0 %v1268
        %1502 = vmatprep.subr.bf16.mxu0 %v1275
        %1503 = vmatpush1.bf16.msra.mxu0 %v1274
        %1504 = vmatprep.mubr.bf16.mxu0 %v538
        %1505 = vmatmul.mubr.bf16.gmra.mrb[0].mxu0 %v537
        %v1506 = vpop.f32.mrb[0].mxu0
        %v1507 = vadd.f32 %v725, %v1506
        %v1508 = vpop.f32.mrb[0].mxu0
        %v1509 = vadd.f32 %v729, %v1508
        %v1510 = vpop.f32.mrb[0].mxu0
        %v1511 = vadd.f32 %v725, %v1510
        %v1512 = vpop.f32.mrb[0].mxu0
        %v1513 = vadd.f32 %v729, %v1512
        %1514 = vmatprep.mubr.bf16.mxu0 %v541
        %1515 = vmatmul.mubr.bf16.gmra.mrb[0].mxu0 %v540
        %v1516 = vpop.f32.mrb[0].mxu0
        %v1517 = vadd.f32 %v725, %v1516
        %v1518 = vpop.f32.mrb[0].mxu0
        %v1519 = vadd.f32 %v729, %v1518
        %v1520 = vpop.f32.mrb[0].mxu0
        %v1521 = vadd.f32 %v725, %v1520
        %v1522 = vpop.f32.mrb[0].mxu0
        %v1523 = vadd.f32 %v729, %v1522
        %1524 = vmatprep.mubr.bf16.mxu0 %v544
        %1525 = vmatmul.mubr.bf16.gmra.mrb[0].mxu0 %v543
        %v1526 = vpop.f32.mrb[0].mxu0
        %v1527 = vadd.f32 %v725, %v1526
        %v1528 = vpop.f32.mrb[0].mxu0
        %v1529 = vadd.f32 %v729, %v1528
        %v1530 = vpop.f32.mrb[0].mxu0
        %v1531 = vadd.f32 %v725, %v1530
        %v1532 = vpop.f32.mrb[0].mxu0
        %v1533 = vadd.f32 %v729, %v1532
        %1534 = vmatprep.mubr.bf16.mxu0 %v547
        %1535 = vmatmul.mubr.bf16.gmra.mrb[0].mxu0 %v546
        %v1536 = vpop.f32.mrb[0].mxu0
        %v1537 = vadd.f32 %v725, %v1536
        %v1538 = vpop.f32.mrb[0].mxu0
        %v1539 = vadd.f32 %v729, %v1538
        %v1540 = vpop.f32.mrb[0].mxu0
        %v1541 = vadd.f32 %v725, %v1540
        %v1542 = vpop.f32.mrb[0].mxu0
        %v1543 = vadd.f32 %v729, %v1542
        %1544 = vmatprep.mubr.bf16.mxu0 %v550
        %1545 = vmatmul.mubr.bf16.gmra.mrb[0].mxu0 %v549
        %v1546 = vpop.f32.mrb[0].mxu0
        %v1547 = vadd.f32 %v725, %v1546
        %v1548 = vpop.f32.mrb[0].mxu0
        %v1549 = vadd.f32 %v729, %v1548
        %v1550 = vpop.f32.mrb[0].mxu0
        %v1551 = vadd.f32 %v725, %v1550
        %v1552 = vpop.f32.mrb[0].mxu0
        %v1553 = vadd.f32 %v729, %v1552
        %1554 = vmatprep.mubr.bf16.mxu0 %v553
        %1555 = vmatmul.mubr.bf16.gmra.mrb[0].mxu0 %v552
        %v1556 = vpop.f32.mrb[0].mxu0
        %v1557 = vadd.f32 %v725, %v1556
        %v1558 = vpop.f32.mrb[0].mxu0
        %v1559 = vadd.f32 %v729, %v1558
        %v1560 = vpop.f32.mrb[0].mxu0
        %v1561 = vadd.f32 %v725, %v1560
        %v1562 = vpop.f32.mrb[0].mxu0
        %v1563 = vadd.f32 %v729, %v1562
        %1564 = vmatprep.mubr.bf16.mxu0 %v556
        %1565 = vmatmul.mubr.bf16.gmra.mrb[0].mxu0 %v555
        %v1566 = vpop.f32.mrb[0].mxu0
        %v1567 = vadd.f32 %v725, %v1566
        %v1568 = vpop.f32.mrb[0].mxu0
        %v1569 = vadd.f32 %v729, %v1568
        %v1570 = vpop.f32.mrb[0].mxu0
        %v1571 = vadd.f32 %v725, %v1570
        %v1572 = vpop.f32.mrb[0].mxu0
        %v1573 = vadd.f32 %v729, %v1572
        %1574 = vmatprep.mubr.bf16.mxu0 %v559
        %1575 = vmatmul.mubr.bf16.gmra.mrb[0].mxu0 %v558
        %v1576 = vpop.f32.mrb[0].mxu0
        %v1577 = vadd.f32 %v725, %v1576
        %v1578 = vpop.f32.mrb[0].mxu0
        %v1579 = vadd.f32 %v729, %v1578
        %v1580 = vpop.f32.mrb[0].mxu0
        %v1581 = vadd.f32 %v725, %v1580
        %v1582 = vpop.f32.mrb[0].mxu0
        %v1583 = vadd.f32 %v729, %v1582
        %1584 = vmatprep.mubr.bf16.mxu0 %v562
        %1585 = vmatmul.mubr.bf16.gmra.mrb[0].mxu0 %v561
        %v1586 = vpop.f32.mrb[0].mxu0
        %v1587 = vadd.f32 %v725, %v1586
        %v1588 = vpop.f32.mrb[0].mxu0
        %v1589 = vadd.f32 %v729, %v1588
        %v1590 = vpop.f32.mrb[0].mxu0
        %v1591 = vadd.f32 %v725, %v1590
        %v1592 = vpop.f32.mrb[0].mxu0
        %v1593 = vadd.f32 %v729, %v1592
        %1594 = vmatprep.mubr.bf16.mxu0 %v565
        %1595 = vmatmul.mubr.bf16.gmra.mrb[0].mxu0 %v564
        %v1596 = vpop.f32.mrb[0].mxu0
        %v1597 = vadd.f32 %v725, %v1596
        %v1598 = vpop.f32.mrb[0].mxu0
        %v1599 = vadd.f32 %v729, %v1598
        %v1600 = vpop.f32.mrb[0].mxu0
        %v1601 = vadd.f32 %v725, %v1600
        %v1602 = vpop.f32.mrb[0].mxu0
        %v1603 = vadd.f32 %v729, %v1602
        %1604 = vmatprep.mubr.bf16.mxu0 %v568
        %1605 = vmatmul.mubr.bf16.gmra.mrb[0].mxu0 %v567
        %v1606 = vpop.f32.mrb[0].mxu0
        %v1607 = vadd.f32 %v725, %v1606
        %v1608 = vpop.f32.mrb[0].mxu0
        %v1609 = vadd.f32 %v729, %v1608
        %v1610 = vpop.f32.mrb[0].mxu0
        %v1611 = vadd.f32 %v725, %v1610
        %v1612 = vpop.f32.mrb[0].mxu0
        %v1613 = vadd.f32 %v729, %v1612
        %1614 = vmatprep.mubr.bf16.mxu0 %v571
        %1615 = vmatmul.mubr.bf16.gmra.mrb[0].mxu0 %v570
        %v1616 = vpop.f32.mrb[0].mxu0
        %v1617 = vadd.f32 %v725, %v1616
        %v1618 = vpop.f32.mrb[0].mxu0
        %v1619 = vadd.f32 %v729, %v1618
        %v1620 = vpop.f32.mrb[0].mxu0
        %v1621 = vadd.f32 %v725, %v1620
        %v1622 = vpop.f32.mrb[0].mxu0
        %v1623 = vadd.f32 %v729, %v1622
        %1624 = vmatprep.mubr.bf16.mxu0 %v574
        %1625 = vmatmul.mubr.bf16.gmra.mrb[0].mxu0 %v573
        %v1626 = vpop.f32.mrb[0].mxu0
        %v1627 = vadd.f32 %v725, %v1626
        %v1628 = vpop.f32.mrb[0].mxu0
        %v1629 = vadd.f32 %v729, %v1628
        %v1630 = vpop.f32.mrb[0].mxu0
        %v1631 = vpop.f32.mrb[0].mxu0
        %1632 = vdwg.mxu0
        %1633 = vmatprep.subr.bf16.mxu0 %v1281
        %1634 = vmatpush1.bf16.msra.mxu0 %v1280
        %1635 = vmatprep.subr.bf16.mxu0 %v1287
        %1636 = vmatpush1.bf16.msra.mxu0 %v1286
        %1637 = vmatprep.subr.bf16.mxu0 %v1293
        %1638 = vmatpush1.bf16.msra.mxu0 %v1292
        %1639 = vmatprep.subr.bf16.mxu0 %v1299
        %1640 = vmatpush1.bf16.msra.mxu0 %v1298
        %1641 = vmatprep.subr.bf16.mxu0 %v1305
        %1642 = vmatpush1.bf16.msra.mxu0 %v1304
        %1643 = vmatprep.subr.bf16.mxu0 %v1311
        %1644 = vmatpush1.bf16.msra.mxu0 %v1310
        %1645 = vmatprep.subr.bf16.mxu0 %v1317
        %1646 = vmatpush1.bf16.msra.mxu0 %v1316
        %1647 = vmatprep.subr.bf16.mxu0 %v1323
        %1648 = vmatpush1.bf16.msra.mxu0 %v1322
        %1649 = vmatprep.subr.bf16.mxu0 0
        %1650 = vmatpush1.bf16.msra.mxu0 0
        %1651 = vmatprep.subr.bf16.mxu0 0
        %1652 = vmatpush1.bf16.msra.mxu0 0
        %1653 = vmatprep.subr.bf16.mxu0 0
        %1654 = vmatpush1.bf16.msra.mxu0 0
        %1655 = vmatprep.subr.bf16.mxu0 0
        %1656 = vmatpush1.bf16.msra.mxu0 0
        %1657 = vmatprep.subr.bf16.mxu0 0
        %1658 = vmatpush1.bf16.msra.mxu0 0
        %1659 = vmatprep.subr.bf16.mxu0 0
        %1660 = vmatpush1.bf16.msra.mxu0 0
        %1661 = vmatprep.subr.bf16.mxu0 0
        %1662 = vmatpush1.bf16.msra.mxu0 0
        %1663 = vmatprep.subr.bf16.mxu0 0
        %1664 = vmatpush1.bf16.msra.mxu0 0
        %1665 = vmatprep.mubr.bf16.mxu0 0
        %1666 = vmatmul.mubr.bf16.gmra.mrb[0].mxu0 %v539
        %v1667 = vpop.f32.mrb[0].mxu0
        %v1668 = vadd.f32 %v1507, %v1667
        %v1669 = vpop.f32.mrb[0].mxu0
        %v1670 = vadd.f32 %v1509, %v1669
        %v1671 = vpop.f32.mrb[0].mxu0
        %v1672 = vadd.f32 %v1511, %v1671
        %v1673 = vpop.f32.mrb[0].mxu0
        %v1674 = vadd.f32 %v1513, %v1673
        %1675 = vmatprep.mubr.bf16.mxu0 0
        %1676 = vmatmul.mubr.bf16.gmra.mrb[0].mxu0 %v542
        %v1677 = vpop.f32.mrb[0].mxu0
        %v1678 = vadd.f32 %v1517, %v1677
        %v1679 = vpop.f32.mrb[0].mxu0
        %v1680 = vadd.f32 %v1519, %v1679
        %v1681 = vpop.f32.mrb[0].mxu0
        %v1682 = vadd.f32 %v1521, %v1681
        %v1683 = vpop.f32.mrb[0].mxu0
        %v1684 = vadd.f32 %v1523, %v1683
        %1685 = vmatprep.mubr.bf16.mxu0 0
        %1686 = vmatmul.mubr.bf16.gmra.mrb[0].mxu0 %v545
        %v1687 = vpop.f32.mrb[0].mxu0
        %v1688 = vadd.f32 %v1527, %v1687
        %v1689 = vpop.f32.mrb[0].mxu0
        %v1690 = vadd.f32 %v1529, %v1689
        %v1691 = vpop.f32.mrb[0].mxu0
        %v1692 = vadd.f32 %v1531, %v1691
        %v1693 = vpop.f32.mrb[0].mxu0
        %v1694 = vadd.f32 %v1533, %v1693
        %1695 = vmatprep.mubr.bf16.mxu0 0
        %1696 = vmatmul.mubr.bf16.gmra.mrb[0].mxu0 %v548
        %v1697 = vpop.f32.mrb[0].mxu0
        %v1698 = vadd.f32 %v1537, %v1697
        %v1699 = vpop.f32.mrb[0].mxu0
        %v1700 = vadd.f32 %v1539, %v1699
        %v1701 = vpop.f32.mrb[0].mxu0
        %v1702 = vadd.f32 %v1541, %v1701
        %v1703 = vpop.f32.mrb[0].mxu0
        %v1704 = vadd.f32 %v1543, %v1703
        %1705 = vmatprep.mubr.bf16.mxu0 0
        %1706 = vmatmul.mubr.bf16.gmra.mrb[0].mxu0 %v551
        %v1707 = vpop.f32.mrb[0].mxu0
        %v1708 = vadd.f32 %v1547, %v1707
        %v1709 = vpop.f32.mrb[0].mxu0
        %v1710 = vadd.f32 %v1549, %v1709
        %v1711 = vpop.f32.mrb[0].mxu0
        %v1712 = vadd.f32 %v1551, %v1711
        %v1713 = vpop.f32.mrb[0].mxu0
        %v1714 = vadd.f32 %v1553, %v1713
        %1715 = vmatprep.mubr.bf16.mxu0 0
        %1716 = vmatmul.mubr.bf16.gmra.mrb[0].mxu0 %v554
        %v1717 = vpop.f32.mrb[0].mxu0
        %v1718 = vadd.f32 %v1557, %v1717
        %v1719 = vpop.f32.mrb[0].mxu0
        %v1720 = vadd.f32 %v1559, %v1719
        %v1721 = vpop.f32.mrb[0].mxu0
        %v1722 = vadd.f32 %v1561, %v1721
        %v1723 = vpop.f32.mrb[0].mxu0
        %v1724 = vadd.f32 %v1563, %v1723
        %1725 = vmatprep.mubr.bf16.mxu0 0
        %1726 = vmatmul.mubr.bf16.gmra.mrb[0].mxu0 %v557
        %v1727 = vpop.f32.mrb[0].mxu0
        %v1728 = vadd.f32 %v1567, %v1727
        %v1729 = vpop.f32.mrb[0].mxu0
        %v1730 = vadd.f32 %v1569, %v1729
        %v1731 = vpop.f32.mrb[0].mxu0
        %v1732 = vadd.f32 %v1571, %v1731
        %v1733 = vpop.f32.mrb[0].mxu0
        %v1734 = vadd.f32 %v1573, %v1733
        %1735 = vmatprep.mubr.bf16.mxu0 0
        %1736 = vmatmul.mubr.bf16.gmra.mrb[0].mxu0 %v560
        %v1737 = vpop.f32.mrb[0].mxu0
        %v1738 = vadd.f32 %v1577, %v1737
        %v1739 = vpop.f32.mrb[0].mxu0
        %v1740 = vadd.f32 %v1579, %v1739
        %v1741 = vpop.f32.mrb[0].mxu0
        %v1742 = vadd.f32 %v1581, %v1741
        %v1743 = vpop.f32.mrb[0].mxu0
        %v1744 = vadd.f32 %v1583, %v1743
        %1745 = vmatprep.mubr.bf16.mxu0 0
        %1746 = vmatmul.mubr.bf16.gmra.mrb[0].mxu0 %v563
        %v1747 = vpop.f32.mrb[0].mxu0
        %v1748 = vadd.f32 %v1587, %v1747
        %v1749 = vpop.f32.mrb[0].mxu0
        %v1750 = vadd.f32 %v1589, %v1749
        %v1751 = vpop.f32.mrb[0].mxu0
        %v1752 = vadd.f32 %v1591, %v1751
        %v1753 = vpop.f32.mrb[0].mxu0
        %v1754 = vadd.f32 %v1593, %v1753
        %1755 = vmatprep.mubr.bf16.mxu0 0
        %1756 = vmatmul.mubr.bf16.gmra.mrb[0].mxu0 %v566
        %v1757 = vpop.f32.mrb[0].mxu0
        %v1758 = vadd.f32 %v1597, %v1757
        %v1759 = vpop.f32.mrb[0].mxu0
        %v1760 = vadd.f32 %v1599, %v1759
        %v1761 = vpop.f32.mrb[0].mxu0
        %v1762 = vadd.f32 %v1601, %v1761
        %v1763 = vpop.f32.mrb[0].mxu0
        %v1764 = vadd.f32 %v1603, %v1763
        %1765 = vmatprep.mubr.bf16.mxu0 0
        %1766 = vmatmul.mubr.bf16.gmra.mrb[0].mxu0 %v569
        %v1767 = vpop.f32.mrb[0].mxu0
        %v1768 = vadd.f32 %v1607, %v1767
        %v1769 = vpop.f32.mrb[0].mxu0
        %v1770 = vadd.f32 %v1609, %v1769
        %v1771 = vpop.f32.mrb[0].mxu0
        %v1772 = vadd.f32 %v1611, %v1771
        %v1773 = vpop.f32.mrb[0].mxu0
        %v1774 = vadd.f32 %v1613, %v1773
        %1775 = vmatprep.mubr.bf16.mxu0 0
        %1776 = vmatmul.mubr.bf16.gmra.mrb[0].mxu0 %v572
        %v1777 = vpop.f32.mrb[0].mxu0
        %v1778 = vadd.f32 %v1617, %v1777
        %v1779 = vpop.f32.mrb[0].mxu0
        %v1780 = vadd.f32 %v1619, %v1779
        %v1781 = vpop.f32.mrb[0].mxu0
        %v1782 = vadd.f32 %v1621, %v1781
        %v1783 = vpop.f32.mrb[0].mxu0
        %v1784 = vadd.f32 %v1623, %v1783
        %1785 = vmatprep.mubr.bf16.mxu0 0
        %1786 = vmatmul.mubr.bf16.gmra.mrb[0].mxu0 %v575
        %v1787 = vpop.f32.mrb[0].mxu0
        %v1788 = vadd.f32 %v1627, %v1787
        %v1789 = vpop.f32.mrb[0].mxu0
        %v1790 = vadd.f32 %v1629, %v1789
        %v1791 = vpop.f32.mrb[0].mxu0
        %v1792 = vpop.f32.mrb[0].mxu0
        %1793 = vdwg.mxu0
        %1794 = vmatprep.subr.bf16.mxu0 %v1187
        %1795 = vmatpush1.bf16.msra.mxu0 %v1186
        %1796 = vmatprep.subr.bf16.mxu0 %v1193
        %1797 = vmatpush1.bf16.msra.mxu0 %v1192
        %1798 = vmatprep.subr.bf16.mxu0 %v1199
        %1799 = vmatpush1.bf16.msra.mxu0 %v1198
        %1800 = vmatprep.subr.bf16.mxu0 %v1205
        %1801 = vmatpush1.bf16.msra.mxu0 %v1204
        %1802 = vmatprep.subr.bf16.mxu0 %v1211
        %1803 = vmatpush1.bf16.msra.mxu0 %v1210
        %1804 = vmatprep.subr.bf16.mxu0 %v1217
        %1805 = vmatpush1.bf16.msra.mxu0 %v1216
        %1806 = vmatprep.subr.bf16.mxu0 %v1223
        %1807 = vmatpush1.bf16.msra.mxu0 %v1222
        %1808 = vmatprep.subr.bf16.mxu0 %v1229
        %1809 = vmatpush1.bf16.msra.mxu0 %v1228
        %1810 = vmatprep.subr.bf16.mxu0 %v1235
        %1811 = vmatpush1.bf16.msra.mxu0 %v1234
        %1812 = vmatprep.subr.bf16.mxu0 %v1241
        %1813 = vmatpush1.bf16.msra.mxu0 %v1240
        %1814 = vmatprep.subr.bf16.mxu0 %v1247
        %1815 = vmatpush1.bf16.msra.mxu0 %v1246
        %1816 = vmatprep.subr.bf16.mxu0 %v1253
        %1817 = vmatpush1.bf16.msra.mxu0 %v1252
        %1818 = vmatprep.subr.bf16.mxu0 %v1259
        %1819 = vmatpush1.bf16.msra.mxu0 %v1258
        %1820 = vmatprep.subr.bf16.mxu0 %v1265
        %1821 = vmatpush1.bf16.msra.mxu0 %v1264
        %1822 = vmatprep.subr.bf16.mxu0 %v1271
        %1823 = vmatpush1.bf16.msra.mxu0 %v1270
        %1824 = vmatprep.subr.bf16.mxu0 %v1277
        %1825 = vmatpush1.bf16.msra.mxu0 %v1276
        %1826 = vmatprep.mubr.bf16.mxu0 %v538
        %1827 = vmatmul.mubr.bf16.gmra.mrb[0].mxu0 %v537
        %v1828 = vpop.f32.mrb[0].mxu0
        %v1829 = vadd.f32 %v733, %v1828
        %v1830 = vpop.f32.mrb[0].mxu0
        %v1831 = vadd.f32 %v737, %v1830
        %v1832 = vpop.f32.mrb[0].mxu0
        %v1833 = vadd.f32 %v733, %v1832
        %v1834 = vpop.f32.mrb[0].mxu0
        %v1835 = vadd.f32 %v737, %v1834
        %1836 = vmatprep.mubr.bf16.mxu0 %v541
        %1837 = vmatmul.mubr.bf16.gmra.mrb[0].mxu0 %v540
        %v1838 = vpop.f32.mrb[0].mxu0
        %v1839 = vadd.f32 %v733, %v1838
        %v1840 = vpop.f32.mrb[0].mxu0
        %v1841 = vadd.f32 %v737, %v1840
        %v1842 = vpop.f32.mrb[0].mxu0
        %v1843 = vadd.f32 %v733, %v1842
        %v1844 = vpop.f32.mrb[0].mxu0
        %v1845 = vadd.f32 %v737, %v1844
        %1846 = vmatprep.mubr.bf16.mxu0 %v544
        %1847 = vmatmul.mubr.bf16.gmra.mrb[0].mxu0 %v543
        %v1848 = vpop.f32.mrb[0].mxu0
        %v1849 = vadd.f32 %v733, %v1848
        %v1850 = vpop.f32.mrb[0].mxu0
        %v1851 = vadd.f32 %v737, %v1850
        %v1852 = vpop.f32.mrb[0].mxu0
        %v1853 = vadd.f32 %v733, %v1852
        %v1854 = vpop.f32.mrb[0].mxu0
        %v1855 = vadd.f32 %v737, %v1854
        %1856 = vmatprep.mubr.bf16.mxu0 %v547
        %1857 = vmatmul.mubr.bf16.gmra.mrb[0].mxu0 %v546
        %v1858 = vpop.f32.mrb[0].mxu0
        %v1859 = vadd.f32 %v733, %v1858
        %v1860 = vpop.f32.mrb[0].mxu0
        %v1861 = vadd.f32 %v737, %v1860
        %v1862 = vpop.f32.mrb[0].mxu0
        %v1863 = vadd.f32 %v733, %v1862
        %v1864 = vpop.f32.mrb[0].mxu0
        %v1865 = vadd.f32 %v737, %v1864
        %1866 = vmatprep.mubr.bf16.mxu0 %v550
        %1867 = vmatmul.mubr.bf16.gmra.mrb[0].mxu0 %v549
        %v1868 = vpop.f32.mrb[0].mxu0
        %v1869 = vadd.f32 %v733, %v1868
        %v1870 = vpop.f32.mrb[0].mxu0
        %v1871 = vadd.f32 %v737, %v1870
        %v1872 = vpop.f32.mrb[0].mxu0
        %v1873 = vadd.f32 %v733, %v1872
        %v1874 = vpop.f32.mrb[0].mxu0
        %v1875 = vadd.f32 %v737, %v1874
        %1876 = vmatprep.mubr.bf16.mxu0 %v553
        %1877 = vmatmul.mubr.bf16.gmra.mrb[0].mxu0 %v552
        %v1878 = vpop.f32.mrb[0].mxu0
        %v1879 = vadd.f32 %v733, %v1878
        %v1880 = vpop.f32.mrb[0].mxu0
        %v1881 = vadd.f32 %v737, %v1880
        %v1882 = vpop.f32.mrb[0].mxu0
        %v1883 = vadd.f32 %v733, %v1882
        %v1884 = vpop.f32.mrb[0].mxu0
        %v1885 = vadd.f32 %v737, %v1884
        %1886 = vmatprep.mubr.bf16.mxu0 %v556
        %1887 = vmatmul.mubr.bf16.gmra.mrb[0].mxu0 %v555
        %v1888 = vpop.f32.mrb[0].mxu0
        %v1889 = vadd.f32 %v733, %v1888
        %v1890 = vpop.f32.mrb[0].mxu0
        %v1891 = vadd.f32 %v737, %v1890
        %v1892 = vpop.f32.mrb[0].mxu0
        %v1893 = vadd.f32 %v733, %v1892
        %v1894 = vpop.f32.mrb[0].mxu0
        %v1895 = vadd.f32 %v737, %v1894
        %1896 = vmatprep.mubr.bf16.mxu0 %v559
        %1897 = vmatmul.mubr.bf16.gmra.mrb[0].mxu0 %v558
        %v1898 = vpop.f32.mrb[0].mxu0
        %v1899 = vadd.f32 %v733, %v1898
        %v1900 = vpop.f32.mrb[0].mxu0
        %v1901 = vadd.f32 %v737, %v1900
        %v1902 = vpop.f32.mrb[0].mxu0
        %v1903 = vadd.f32 %v733, %v1902
        %v1904 = vpop.f32.mrb[0].mxu0
        %v1905 = vadd.f32 %v737, %v1904
        %1906 = vmatprep.mubr.bf16.mxu0 %v562
        %1907 = vmatmul.mubr.bf16.gmra.mrb[0].mxu0 %v561
        %v1908 = vpop.f32.mrb[0].mxu0
        %v1909 = vadd.f32 %v733, %v1908
        %v1910 = vpop.f32.mrb[0].mxu0
        %v1911 = vadd.f32 %v737, %v1910
        %v1912 = vpop.f32.mrb[0].mxu0
        %v1913 = vadd.f32 %v733, %v1912
        %v1914 = vpop.f32.mrb[0].mxu0
        %v1915 = vadd.f32 %v737, %v1914
        %1916 = vmatprep.mubr.bf16.mxu0 %v565
        %1917 = vmatmul.mubr.bf16.gmra.mrb[0].mxu0 %v564
        %v1918 = vpop.f32.mrb[0].mxu0
        %v1919 = vadd.f32 %v733, %v1918
        %v1920 = vpop.f32.mrb[0].mxu0
        %v1921 = vadd.f32 %v737, %v1920
        %v1922 = vpop.f32.mrb[0].mxu0
        %v1923 = vadd.f32 %v733, %v1922
        %v1924 = vpop.f32.mrb[0].mxu0
        %v1925 = vadd.f32 %v737, %v1924
        %1926 = vmatprep.mubr.bf16.mxu0 %v568
        %1927 = vmatmul.mubr.bf16.gmra.mrb[0].mxu0 %v567
        %v1928 = vpop.f32.mrb[0].mxu0
        %v1929 = vadd.f32 %v733, %v1928
        %v1930 = vpop.f32.mrb[0].mxu0
        %v1931 = vadd.f32 %v737, %v1930
        %v1932 = vpop.f32.mrb[0].mxu0
        %v1933 = vadd.f32 %v733, %v1932
        %v1934 = vpop.f32.mrb[0].mxu0
        %v1935 = vadd.f32 %v737, %v1934
        %1936 = vmatprep.mubr.bf16.mxu0 %v571
        %1937 = vmatmul.mubr.bf16.gmra.mrb[0].mxu0 %v570
        %v1938 = vpop.f32.mrb[0].mxu0
        %v1939 = vadd.f32 %v733, %v1938
        %v1940 = vpop.f32.mrb[0].mxu0
        %v1941 = vadd.f32 %v737, %v1940
        %v1942 = vpop.f32.mrb[0].mxu0
        %v1943 = vadd.f32 %v733, %v1942
        %v1944 = vpop.f32.mrb[0].mxu0
        %v1945 = vadd.f32 %v737, %v1944
        %1946 = vmatprep.mubr.bf16.mxu0 %v574
        %1947 = vmatmul.mubr.bf16.gmra.mrb[0].mxu0 %v573
        %v1948 = vpop.f32.mrb[0].mxu0
        %v1949 = vadd.f32 %v733, %v1948
        %v1950 = vpop.f32.mrb[0].mxu0
        %v1951 = vadd.f32 %v737, %v1950
        %v1952 = vpop.f32.mrb[0].mxu0
        %v1953 = vpop.f32.mrb[0].mxu0
        %1954 = vdwg.mxu0
        %1955 = vmatprep.subr.bf16.mxu0 %v1283
        %1956 = vmatpush1.bf16.msra.mxu0 %v1282
        %1957 = vmatprep.subr.bf16.mxu0 %v1289
        %1958 = vmatpush1.bf16.msra.mxu0 %v1288
        %1959 = vmatprep.subr.bf16.mxu0 %v1295
        %1960 = vmatpush1.bf16.msra.mxu0 %v1294
        %1961 = vmatprep.subr.bf16.mxu0 %v1301
        %1962 = vmatpush1.bf16.msra.mxu0 %v1300
        %1963 = vmatprep.subr.bf16.mxu0 %v1307
        %1964 = vmatpush1.bf16.msra.mxu0 %v1306
        %1965 = vmatprep.subr.bf16.mxu0 %v1313
        %1966 = vmatpush1.bf16.msra.mxu0 %v1312
        %1967 = vmatprep.subr.bf16.mxu0 %v1319
        %1968 = vmatpush1.bf16.msra.mxu0 %v1318
        %1969 = vmatprep.subr.bf16.mxu0 %v1325
        %1970 = vmatpush1.bf16.msra.mxu0 %v1324
        %1971 = vmatprep.subr.bf16.mxu0 0
        %1972 = vmatpush1.bf16.msra.mxu0 0
        %1973 = vmatprep.subr.bf16.mxu0 0
        %1974 = vmatpush1.bf16.msra.mxu0 0
        %1975 = vmatprep.subr.bf16.mxu0 0
        %1976 = vmatpush1.bf16.msra.mxu0 0
        %1977 = vmatprep.subr.bf16.mxu0 0
        %1978 = vmatpush1.bf16.msra.mxu0 0
        %1979 = vmatprep.subr.bf16.mxu0 0
        %1980 = vmatpush1.bf16.msra.mxu0 0
        %1981 = vmatprep.subr.bf16.mxu0 0
        %1982 = vmatpush1.bf16.msra.mxu0 0
        %1983 = vmatprep.subr.bf16.mxu0 0
        %1984 = vmatpush1.bf16.msra.mxu0 0
        %1985 = vmatprep.subr.bf16.mxu0 0
        %1986 = vmatpush1.bf16.msra.mxu0 0
        %1987 = vmatprep.mubr.bf16.mxu0 0
        %1988 = vmatmul.mubr.bf16.gmra.mrb[0].mxu0 %v539
        %v1989 = vpop.f32.mrb[0].mxu0
        %v1990 = vadd.f32 %v1829, %v1989
        %v1991 = vpop.f32.mrb[0].mxu0
        %v1992 = vadd.f32 %v1831, %v1991
        %v1993 = vpop.f32.mrb[0].mxu0
        %v1994 = vadd.f32 %v1833, %v1993
        %v1995 = vpop.f32.mrb[0].mxu0
        %v1996 = vadd.f32 %v1835, %v1995
        %1997 = vmatprep.mubr.bf16.mxu0 0
        %1998 = vmatmul.mubr.bf16.gmra.mrb[0].mxu0 %v542
        %v1999 = vpop.f32.mrb[0].mxu0
        %v2000 = vadd.f32 %v1839, %v1999
        %v2001 = vpop.f32.mrb[0].mxu0
        %v2002 = vadd.f32 %v1841, %v2001
        %v2003 = vpop.f32.mrb[0].mxu0
        %v2004 = vadd.f32 %v1843, %v2003
        %v2005 = vpop.f32.mrb[0].mxu0
        %v2006 = vadd.f32 %v1845, %v2005
        %2007 = vmatprep.mubr.bf16.mxu0 0
        %2008 = vmatmul.mubr.bf16.gmra.mrb[0].mxu0 %v545
        %v2009 = vpop.f32.mrb[0].mxu0
        %v2010 = vadd.f32 %v1849, %v2009
        %v2011 = vpop.f32.mrb[0].mxu0
        %v2012 = vadd.f32 %v1851, %v2011
        %v2013 = vpop.f32.mrb[0].mxu0
        %v2014 = vadd.f32 %v1853, %v2013
        %v2015 = vpop.f32.mrb[0].mxu0
        %v2016 = vadd.f32 %v1855, %v2015
        %2017 = vmatprep.mubr.bf16.mxu0 0
        %2018 = vmatmul.mubr.bf16.gmra.mrb[0].mxu0 %v548
        %v2019 = vpop.f32.mrb[0].mxu0
        %v2020 = vadd.f32 %v1859, %v2019
        %v2021 = vpop.f32.mrb[0].mxu0
        %v2022 = vadd.f32 %v1861, %v2021
        %v2023 = vpop.f32.mrb[0].mxu0
        %v2024 = vadd.f32 %v1863, %v2023
        %v2025 = vpop.f32.mrb[0].mxu0
        %v2026 = vadd.f32 %v1865, %v2025
        %2027 = vmatprep.mubr.bf16.mxu0 0
        %2028 = vmatmul.mubr.bf16.gmra.mrb[0].mxu0 %v551
        %v2029 = vpop.f32.mrb[0].mxu0
        %v2030 = vadd.f32 %v1869, %v2029
        %v2031 = vpop.f32.mrb[0].mxu0
        %v2032 = vadd.f32 %v1871, %v2031
        %v2033 = vpop.f32.mrb[0].mxu0
        %v2034 = vadd.f32 %v1873, %v2033
        %v2035 = vpop.f32.mrb[0].mxu0
        %v2036 = vadd.f32 %v1875, %v2035
        %2037 = vmatprep.mubr.bf16.mxu0 0
        %2038 = vmatmul.mubr.bf16.gmra.mrb[0].mxu0 %v554
        %v2039 = vpop.f32.mrb[0].mxu0
        %v2040 = vadd.f32 %v1879, %v2039
        %v2041 = vpop.f32.mrb[0].mxu0
        %v2042 = vadd.f32 %v1881, %v2041
        %v2043 = vpop.f32.mrb[0].mxu0
        %v2044 = vadd.f32 %v1883, %v2043
        %v2045 = vpop.f32.mrb[0].mxu0
        %v2046 = vadd.f32 %v1885, %v2045
        %2047 = vmatprep.mubr.bf16.mxu0 0
        %2048 = vmatmul.mubr.bf16.gmra.mrb[0].mxu0 %v557
        %v2049 = vpop.f32.mrb[0].mxu0
        %v2050 = vadd.f32 %v1889, %v2049
        %v2051 = vpop.f32.mrb[0].mxu0
        %v2052 = vadd.f32 %v1891, %v2051
        %v2053 = vpop.f32.mrb[0].mxu0
        %v2054 = vadd.f32 %v1893, %v2053
        %v2055 = vpop.f32.mrb[0].mxu0
        %v2056 = vadd.f32 %v1895, %v2055
        %2057 = vmatprep.mubr.bf16.mxu0 0
        %2058 = vmatmul.mubr.bf16.gmra.mrb[0].mxu0 %v560
        %v2059 = vpop.f32.mrb[0].mxu0
        %v2060 = vadd.f32 %v1899, %v2059
        %v2061 = vpop.f32.mrb[0].mxu0
        %v2062 = vadd.f32 %v1901, %v2061
        %v2063 = vpop.f32.mrb[0].mxu0
        %v2064 = vadd.f32 %v1903, %v2063
        %v2065 = vpop.f32.mrb[0].mxu0
        %v2066 = vadd.f32 %v1905, %v2065
        %2067 = vmatprep.mubr.bf16.mxu0 0
        %2068 = vmatmul.mubr.bf16.gmra.mrb[0].mxu0 %v563
        %v2069 = vpop.f32.mrb[0].mxu0
        %v2070 = vadd.f32 %v1909, %v2069
        %v2071 = vpop.f32.mrb[0].mxu0
        %v2072 = vadd.f32 %v1911, %v2071
        %v2073 = vpop.f32.mrb[0].mxu0
        %v2074 = vadd.f32 %v1913, %v2073
        %v2075 = vpop.f32.mrb[0].mxu0
        %v2076 = vadd.f32 %v1915, %v2075
        %2077 = vmatprep.mubr.bf16.mxu0 0
        %2078 = vmatmul.mubr.bf16.gmra.mrb[0].mxu0 %v566
        %v2079 = vpop.f32.mrb[0].mxu0
        %v2080 = vadd.f32 %v1919, %v2079
        %v2081 = vpop.f32.mrb[0].mxu0
        %v2082 = vadd.f32 %v1921, %v2081
        %v2083 = vpop.f32.mrb[0].mxu0
        %v2084 = vadd.f32 %v1923, %v2083
        %v2085 = vpop.f32.mrb[0].mxu0
        %v2086 = vadd.f32 %v1925, %v2085
        %2087 = vmatprep.mubr.bf16.mxu0 0
        %2088 = vmatmul.mubr.bf16.gmra.mrb[0].mxu0 %v569
        %v2089 = vpop.f32.mrb[0].mxu0
        %v2090 = vadd.f32 %v1929, %v2089
        %v2091 = vpop.f32.mrb[0].mxu0
        %v2092 = vadd.f32 %v1931, %v2091
        %v2093 = vpop.f32.mrb[0].mxu0
        %v2094 = vadd.f32 %v1933, %v2093
        %v2095 = vpop.f32.mrb[0].mxu0
        %v2096 = vadd.f32 %v1935, %v2095
        %2097 = vmatprep.mubr.bf16.mxu0 0
        %2098 = vmatmul.mubr.bf16.gmra.mrb[0].mxu0 %v572
        %v2099 = vpop.f32.mrb[0].mxu0
        %v2100 = vadd.f32 %v1939, %v2099
        %v2101 = vpop.f32.mrb[0].mxu0
        %v2102 = vadd.f32 %v1941, %v2101
        %v2103 = vpop.f32.mrb[0].mxu0
        %v2104 = vadd.f32 %v1943, %v2103
        %v2105 = vpop.f32.mrb[0].mxu0
        %v2106 = vadd.f32 %v1945, %v2105
        %2107 = vmatprep.mubr.bf16.mxu0 0
        %2108 = vmatmul.mubr.bf16.gmra.mrb[0].mxu0 %v575
        %v2109 = vpop.f32.mrb[0].mxu0
        %v2110 = vadd.f32 %v1949, %v2109
        %v2111 = vpop.f32.mrb[0].mxu0
        %v2112 = vadd.f32 %v1951, %v2111
        %v2113 = vpop.f32.mrb[0].mxu0
        %v2114 = vpop.f32.mrb[0].mxu0
        %2115 = vdwg.mxu0
        %2116 = vmatprep.subr.bf16.mxu0 %v1189
        %2117 = vmatpush1.bf16.msra.mxu0 %v1188
        %2118 = vmatprep.subr.bf16.mxu0 %v1195
        %2119 = vmatpush1.bf16.msra.mxu0 %v1194
        %2120 = vmatprep.subr.bf16.mxu0 %v1201
        %2121 = vmatpush1.bf16.msra.mxu0 %v1200
        %2122 = vmatprep.subr.bf16.mxu0 %v1207
        %2123 = vmatpush1.bf16.msra.mxu0 %v1206
        %2124 = vmatprep.subr.bf16.mxu0 %v1213
        %2125 = vmatpush1.bf16.msra.mxu0 %v1212
        %2126 = vmatprep.subr.bf16.mxu0 %v1219
        %2127 = vmatpush1.bf16.msra.mxu0 %v1218
        %2128 = vmatprep.subr.bf16.mxu0 %v1225
        %2129 = vmatpush1.bf16.msra.mxu0 %v1224
        %2130 = vmatprep.subr.bf16.mxu0 %v1231
        %2131 = vmatpush1.bf16.msra.mxu0 %v1230
        %2132 = vmatprep.subr.bf16.mxu0 %v1237
        %2133 = vmatpush1.bf16.msra.mxu0 %v1236
        %2134 = vmatprep.subr.bf16.mxu0 %v1243
        %2135 = vmatpush1.bf16.msra.mxu0 %v1242
        %2136 = vmatprep.subr.bf16.mxu0 %v1249
        %2137 = vmatpush1.bf16.msra.mxu0 %v1248
        %2138 = vmatprep.subr.bf16.mxu0 %v1255
        %2139 = vmatpush1.bf16.msra.mxu0 %v1254
        %2140 = vmatprep.subr.bf16.mxu0 %v1261
        %2141 = vmatpush1.bf16.msra.mxu0 %v1260
        %2142 = vmatprep.subr.bf16.mxu0 %v1267
        %2143 = vmatpush1.bf16.msra.mxu0 %v1266
        %2144 = vmatprep.subr.bf16.mxu0 %v1273
        %2145 = vmatpush1.bf16.msra.mxu0 %v1272
        %2146 = vmatprep.subr.bf16.mxu0 %v1279
        %2147 = vmatpush1.bf16.msra.mxu0 %v1278
        %2148 = vmatprep.mubr.bf16.mxu0 %v538
        %2149 = vmatmul.mubr.bf16.gmra.mrb[0].mxu0 %v537
        %v2150 = vpop.f32.mrb[0].mxu0
        %v2151 = vadd.f32 %v741, %v2150
        %v2152 = vpop.f32.mrb[0].mxu0
        %v2153 = vadd.f32 %v745, %v2152
        %v2154 = vpop.f32.mrb[0].mxu0
        %v2155 = vadd.f32 %v741, %v2154
        %v2156 = vpop.f32.mrb[0].mxu0
        %v2157 = vadd.f32 %v745, %v2156
        %2158 = vmatprep.mubr.bf16.mxu0 %v541
        %2159 = vmatmul.mubr.bf16.gmra.mrb[0].mxu0 %v540
        %v2160 = vpop.f32.mrb[0].mxu0
        %v2161 = vadd.f32 %v741, %v2160
        %v2162 = vpop.f32.mrb[0].mxu0
        %v2163 = vadd.f32 %v745, %v2162
        %v2164 = vpop.f32.mrb[0].mxu0
        %v2165 = vadd.f32 %v741, %v2164
        %v2166 = vpop.f32.mrb[0].mxu0
        %v2167 = vadd.f32 %v745, %v2166
        %2168 = vmatprep.mubr.bf16.mxu0 %v544
        %2169 = vmatmul.mubr.bf16.gmra.mrb[0].mxu0 %v543
        %v2170 = vpop.f32.mrb[0].mxu0
        %v2171 = vadd.f32 %v741, %v2170
        %v2172 = vpop.f32.mrb[0].mxu0
        %v2173 = vadd.f32 %v745, %v2172
        %v2174 = vpop.f32.mrb[0].mxu0
        %v2175 = vadd.f32 %v741, %v2174
        %v2176 = vpop.f32.mrb[0].mxu0
        %v2177 = vadd.f32 %v745, %v2176
        %2178 = vmatprep.mubr.bf16.mxu0 %v547
        %2179 = vmatmul.mubr.bf16.gmra.mrb[0].mxu0 %v546
        %v2180 = vpop.f32.mrb[0].mxu0
        %v2181 = vadd.f32 %v741, %v2180
        %v2182 = vpop.f32.mrb[0].mxu0
        %v2183 = vadd.f32 %v745, %v2182
        %v2184 = vpop.f32.mrb[0].mxu0
        %v2185 = vadd.f32 %v741, %v2184
        %v2186 = vpop.f32.mrb[0].mxu0
        %v2187 = vadd.f32 %v745, %v2186
        %2188 = vmatprep.mubr.bf16.mxu0 %v550
        %2189 = vmatmul.mubr.bf16.gmra.mrb[0].mxu0 %v549
        %v2190 = vpop.f32.mrb[0].mxu0
        %v2191 = vadd.f32 %v741, %v2190
        %v2192 = vpop.f32.mrb[0].mxu0
        %v2193 = vadd.f32 %v745, %v2192
        %v2194 = vpop.f32.mrb[0].mxu0
        %v2195 = vadd.f32 %v741, %v2194
        %v2196 = vpop.f32.mrb[0].mxu0
        %v2197 = vadd.f32 %v745, %v2196
        %2198 = vmatprep.mubr.bf16.mxu0 %v553
        %2199 = vmatmul.mubr.bf16.gmra.mrb[0].mxu0 %v552
        %v2200 = vpop.f32.mrb[0].mxu0
        %v2201 = vadd.f32 %v741, %v2200
        %v2202 = vpop.f32.mrb[0].mxu0
        %v2203 = vadd.f32 %v745, %v2202
        %v2204 = vpop.f32.mrb[0].mxu0
        %v2205 = vadd.f32 %v741, %v2204
        %v2206 = vpop.f32.mrb[0].mxu0
        %v2207 = vadd.f32 %v745, %v2206
        %2208 = vmatprep.mubr.bf16.mxu0 %v556
        %2209 = vmatmul.mubr.bf16.gmra.mrb[0].mxu0 %v555
        %v2210 = vpop.f32.mrb[0].mxu0
        %v2211 = vadd.f32 %v741, %v2210
        %v2212 = vpop.f32.mrb[0].mxu0
        %v2213 = vadd.f32 %v745, %v2212
        %v2214 = vpop.f32.mrb[0].mxu0
        %v2215 = vadd.f32 %v741, %v2214
        %v2216 = vpop.f32.mrb[0].mxu0
        %v2217 = vadd.f32 %v745, %v2216
        %2218 = vmatprep.mubr.bf16.mxu0 %v559
        %2219 = vmatmul.mubr.bf16.gmra.mrb[0].mxu0 %v558
        %v2220 = vpop.f32.mrb[0].mxu0
        %v2221 = vadd.f32 %v741, %v2220
        %v2222 = vpop.f32.mrb[0].mxu0
        %v2223 = vadd.f32 %v745, %v2222
        %v2224 = vpop.f32.mrb[0].mxu0
        %v2225 = vadd.f32 %v741, %v2224
        %v2226 = vpop.f32.mrb[0].mxu0
        %v2227 = vadd.f32 %v745, %v2226
        %2228 = vmatprep.mubr.bf16.mxu0 %v562
        %2229 = vmatmul.mubr.bf16.gmra.mrb[0].mxu0 %v561
        %v2230 = vpop.f32.mrb[0].mxu0
        %v2231 = vadd.f32 %v741, %v2230
        %v2232 = vpop.f32.mrb[0].mxu0
        %v2233 = vadd.f32 %v745, %v2232
        %v2234 = vpop.f32.mrb[0].mxu0
        %v2235 = vadd.f32 %v741, %v2234
        %v2236 = vpop.f32.mrb[0].mxu0
        %v2237 = vadd.f32 %v745, %v2236
        %2238 = vmatprep.mubr.bf16.mxu0 %v565
        %2239 = vmatmul.mubr.bf16.gmra.mrb[0].mxu0 %v564
        %v2240 = vpop.f32.mrb[0].mxu0
        %v2241 = vadd.f32 %v741, %v2240
        %v2242 = vpop.f32.mrb[0].mxu0
        %v2243 = vadd.f32 %v745, %v2242
        %v2244 = vpop.f32.mrb[0].mxu0
        %v2245 = vadd.f32 %v741, %v2244
        %v2246 = vpop.f32.mrb[0].mxu0
        %v2247 = vadd.f32 %v745, %v2246
        %2248 = vmatprep.mubr.bf16.mxu0 %v568
        %2249 = vmatmul.mubr.bf16.gmra.mrb[0].mxu0 %v567
        %v2250 = vpop.f32.mrb[0].mxu0
        %v2251 = vadd.f32 %v741, %v2250
        %v2252 = vpop.f32.mrb[0].mxu0
        %v2253 = vadd.f32 %v745, %v2252
        %v2254 = vpop.f32.mrb[0].mxu0
        %v2255 = vadd.f32 %v741, %v2254
        %v2256 = vpop.f32.mrb[0].mxu0
        %v2257 = vadd.f32 %v745, %v2256
        %2258 = vmatprep.mubr.bf16.mxu0 %v571
        %2259 = vmatmul.mubr.bf16.gmra.mrb[0].mxu0 %v570
        %v2260 = vpop.f32.mrb[0].mxu0
        %v2261 = vadd.f32 %v741, %v2260
        %v2262 = vpop.f32.mrb[0].mxu0
        %v2263 = vadd.f32 %v745, %v2262
        %v2264 = vpop.f32.mrb[0].mxu0
        %v2265 = vadd.f32 %v741, %v2264
        %v2266 = vpop.f32.mrb[0].mxu0
        %v2267 = vadd.f32 %v745, %v2266
        %2268 = vmatprep.mubr.bf16.mxu0 %v574
        %2269 = vmatmul.mubr.bf16.gmra.mrb[0].mxu0 %v573
        %v2270 = vpop.f32.mrb[0].mxu0
        %v2271 = vadd.f32 %v741, %v2270
        %v2272 = vpop.f32.mrb[0].mxu0
        %v2273 = vadd.f32 %v745, %v2272
        %v2274 = vpop.f32.mrb[0].mxu0
        %v2275 = vpop.f32.mrb[0].mxu0
        %2276 = vdwg.mxu0
        %2277 = vmatprep.subr.bf16.mxu0 %v1285
        %2278 = vmatpush1.bf16.msra.mxu0 %v1284
        %2279 = vmatprep.subr.bf16.mxu0 %v1291
        %2280 = vmatpush1.bf16.msra.mxu0 %v1290
        %2281 = vmatprep.subr.bf16.mxu0 %v1297
        %2282 = vmatpush1.bf16.msra.mxu0 %v1296
        %2283 = vmatprep.subr.bf16.mxu0 %v1303
        %2284 = vmatpush1.bf16.msra.mxu0 %v1302
        %2285 = vmatprep.subr.bf16.mxu0 %v1309
        %2286 = vmatpush1.bf16.msra.mxu0 %v1308
        %2287 = vmatprep.subr.bf16.mxu0 %v1315
        %2288 = vmatpush1.bf16.msra.mxu0 %v1314
        %2289 = vmatprep.subr.bf16.mxu0 %v1321
        %2290 = vmatpush1.bf16.msra.mxu0 %v1320
        %2291 = vmatprep.subr.bf16.mxu0 %v1327
        %2292 = vmatpush1.bf16.msra.mxu0 %v1326
        %2293 = vmatprep.subr.bf16.mxu0 0
        %2294 = vmatpush1.bf16.msra.mxu0 0
        %2295 = vmatprep.subr.bf16.mxu0 0
        %2296 = vmatpush1.bf16.msra.mxu0 0
        %2297 = vmatprep.subr.bf16.mxu0 0
        %2298 = vmatpush1.bf16.msra.mxu0 0
        %2299 = vmatprep.subr.bf16.mxu0 0
        %2300 = vmatpush1.bf16.msra.mxu0 0
        %2301 = vmatprep.subr.bf16.mxu0 0
        %2302 = vmatpush1.bf16.msra.mxu0 0
        %2303 = vmatprep.subr.bf16.mxu0 0
        %2304 = vmatpush1.bf16.msra.mxu0 0
        %2305 = vmatprep.subr.bf16.mxu0 0
        %2306 = vmatpush1.bf16.msra.mxu0 0
        %2307 = vmatprep.subr.bf16.mxu0 0
        %2308 = vmatpush1.bf16.msra.mxu0 0
        %2309 = vmatprep.mubr.bf16.mxu0 0
        %2310 = vmatmul.mubr.bf16.gmra.mrb[0].mxu0 %v539
        %v2311 = vpop.f32.mrb[0].mxu0
        %v2312 = vadd.f32 %v2151, %v2311
        %v2313 = vpop.f32.mrb[0].mxu0
        %v2314 = vadd.f32 %v2153, %v2313
        %v2315 = vpop.f32.mrb[0].mxu0
        %v2316 = vadd.f32 %v2155, %v2315
        %v2317 = vpop.f32.mrb[0].mxu0
        %v2318 = vadd.f32 %v2157, %v2317
        %2319 = vmatprep.mubr.bf16.mxu0 0
        %2320 = vmatmul.mubr.bf16.gmra.mrb[0].mxu0 %v542
        %v2321 = vpop.f32.mrb[0].mxu0
        %v2322 = vadd.f32 %v2161, %v2321
        %v2323 = vpop.f32.mrb[0].mxu0
        %v2324 = vadd.f32 %v2163, %v2323
        %v2325 = vpop.f32.mrb[0].mxu0
        %v2326 = vadd.f32 %v2165, %v2325
        %v2327 = vpop.f32.mrb[0].mxu0
        %v2328 = vadd.f32 %v2167, %v2327
        %2329 = vmatprep.mubr.bf16.mxu0 0
        %2330 = vmatmul.mubr.bf16.gmra.mrb[0].mxu0 %v545
        %v2331 = vpop.f32.mrb[0].mxu0
        %v2332 = vadd.f32 %v2171, %v2331
        %v2333 = vpop.f32.mrb[0].mxu0
        %v2334 = vadd.f32 %v2173, %v2333
        %v2335 = vpop.f32.mrb[0].mxu0
        %v2336 = vadd.f32 %v2175, %v2335
        %v2337 = vpop.f32.mrb[0].mxu0
        %v2338 = vadd.f32 %v2177, %v2337
        %2339 = vmatprep.mubr.bf16.mxu0 0
        %2340 = vmatmul.mubr.bf16.gmra.mrb[0].mxu0 %v548
        %v2341 = vpop.f32.mrb[0].mxu0
        %v2342 = vadd.f32 %v2181, %v2341
        %v2343 = vpop.f32.mrb[0].mxu0
        %v2344 = vadd.f32 %v2183, %v2343
        %v2345 = vpop.f32.mrb[0].mxu0
        %v2346 = vadd.f32 %v2185, %v2345
        %v2347 = vpop.f32.mrb[0].mxu0
        %v2348 = vadd.f32 %v2187, %v2347
        %2349 = vmatprep.mubr.bf16.mxu0 0
        %2350 = vmatmul.mubr.bf16.gmra.mrb[0].mxu0 %v551
        %v2351 = vpop.f32.mrb[0].mxu0
        %v2352 = vadd.f32 %v2191, %v2351
        %v2353 = vpop.f32.mrb[0].mxu0
        %v2354 = vadd.f32 %v2193, %v2353
        %v2355 = vpop.f32.mrb[0].mxu0
        %v2356 = vadd.f32 %v2195, %v2355
        %v2357 = vpop.f32.mrb[0].mxu0
        %v2358 = vadd.f32 %v2197, %v2357
        %2359 = vmatprep.mubr.bf16.mxu0 0
        %2360 = vmatmul.mubr.bf16.gmra.mrb[0].mxu0 %v554
        %v2361 = vpop.f32.mrb[0].mxu0
        %v2362 = vadd.f32 %v2201, %v2361
        %v2363 = vpop.f32.mrb[0].mxu0
        %v2364 = vadd.f32 %v2203, %v2363
        %v2365 = vpop.f32.mrb[0].mxu0
        %v2366 = vadd.f32 %v2205, %v2365
        %v2367 = vpop.f32.mrb[0].mxu0
        %v2368 = vadd.f32 %v2207, %v2367
        %2369 = vmatprep.mubr.bf16.mxu0 0
        %2370 = vmatmul.mubr.bf16.gmra.mrb[0].mxu0 %v557
        %v2371 = vpop.f32.mrb[0].mxu0
        %v2372 = vadd.f32 %v2211, %v2371
        %v2373 = vpop.f32.mrb[0].mxu0
        %v2374 = vadd.f32 %v2213, %v2373
        %v2375 = vpop.f32.mrb[0].mxu0
        %v2376 = vadd.f32 %v2215, %v2375
        %v2377 = vpop.f32.mrb[0].mxu0
        %v2378 = vadd.f32 %v2217, %v2377
        %2379 = vmatprep.mubr.bf16.mxu0 0
        %2380 = vmatmul.mubr.bf16.gmra.mrb[0].mxu0 %v560
        %v2381 = vpop.f32.mrb[0].mxu0
        %v2382 = vadd.f32 %v2221, %v2381
        %v2383 = vpop.f32.mrb[0].mxu0
        %v2384 = vadd.f32 %v2223, %v2383
        %v2385 = vpop.f32.mrb[0].mxu0
        %v2386 = vadd.f32 %v2225, %v2385
        %v2387 = vpop.f32.mrb[0].mxu0
        %v2388 = vadd.f32 %v2227, %v2387
        %2389 = vmatprep.mubr.bf16.mxu0 0
        %2390 = vmatmul.mubr.bf16.gmra.mrb[0].mxu0 %v563
        %v2391 = vpop.f32.mrb[0].mxu0
        %v2392 = vadd.f32 %v2231, %v2391
        %v2393 = vpop.f32.mrb[0].mxu0
        %v2394 = vadd.f32 %v2233, %v2393
        %v2395 = vpop.f32.mrb[0].mxu0
        %v2396 = vadd.f32 %v2235, %v2395
        %v2397 = vpop.f32.mrb[0].mxu0
        %v2398 = vadd.f32 %v2237, %v2397
        %2399 = vmatprep.mubr.bf16.mxu0 0
        %2400 = vmatmul.mubr.bf16.gmra.mrb[0].mxu0 %v566
        %v2401 = vpop.f32.mrb[0].mxu0
        %v2402 = vadd.f32 %v2241, %v2401
        %v2403 = vpop.f32.mrb[0].mxu0
        %v2404 = vadd.f32 %v2243, %v2403
        %v2405 = vpop.f32.mrb[0].mxu0
        %v2406 = vadd.f32 %v2245, %v2405
        %v2407 = vpop.f32.mrb[0].mxu0
        %v2408 = vadd.f32 %v2247, %v2407
        %2409 = vmatprep.mubr.bf16.mxu0 0
        %2410 = vmatmul.mubr.bf16.gmra.mrb[0].mxu0 %v569
        %v2411 = vpop.f32.mrb[0].mxu0
        %v2412 = vadd.f32 %v2251, %v2411
        %v2413 = vpop.f32.mrb[0].mxu0
        %v2414 = vadd.f32 %v2253, %v2413
        %v2415 = vpop.f32.mrb[0].mxu0
        %v2416 = vadd.f32 %v2255, %v2415
        %v2417 = vpop.f32.mrb[0].mxu0
        %v2418 = vadd.f32 %v2257, %v2417
        %2419 = vmatprep.mubr.bf16.mxu0 0
        %2420 = vmatmul.mubr.bf16.gmra.mrb[0].mxu0 %v572
        %v2421 = vpop.f32.mrb[0].mxu0
        %v2422 = vadd.f32 %v2261, %v2421
        %v2423 = vpop.f32.mrb[0].mxu0
        %v2424 = vadd.f32 %v2263, %v2423
        %v2425 = vpop.f32.mrb[0].mxu0
        %v2426 = vadd.f32 %v2265, %v2425
        %v2427 = vpop.f32.mrb[0].mxu0
        %v2428 = vadd.f32 %v2267, %v2427
        %2429 = vmatprep.mubr.bf16.mxu0 0
        %2430 = vmatmul.mubr.bf16.gmra.mrb[0].mxu0 %v575
        %v2431 = vpop.f32.mrb[0].mxu0
        %v2432 = vadd.f32 %v2271, %v2431
        %v2433 = vpop.f32.mrb[0].mxu0
        %v2434 = vadd.f32 %v2273, %v2433
        %v2435 = vpop.f32.mrb[0].mxu0
        %v2436 = vpop.f32.mrb[0].mxu0
        %2437 = vdwg.mxu0
        %v2438 = vmul.f32 %v1668, 0.5
        %v2439 = vmul.f32 %v1670, 0.5
        %v2440 = vmul.f32 %v1990, 0.5
        %v2441 = vmul.f32 %v1992, 0.5
        %v2442 = vmul.f32 %v2312, 0.5
        %v2443 = vmul.f32 %v2314, 0.5
        %v2444 = vmul.f32 %v1672, 0.5
        %v2445 = vmul.f32 %v1674, 0.5
        %v2446 = vmul.f32 %v1994, 0.5
        %v2447 = vmul.f32 %v1996, 0.5
        %v2448 = vmul.f32 %v2316, 0.5
        %v2449 = vmul.f32 %v2318, 0.5
        %v2450 = vmul.f32 %v1678, 0.5
        %v2451 = vmul.f32 %v1680, 0.5
        %v2452 = vmul.f32 %v2000, 0.5
        %v2453 = vmul.f32 %v2002, 0.5
        %v2454 = vmul.f32 %v2322, 0.5
        %v2455 = vmul.f32 %v2324, 0.5
        %v2456 = vmul.f32 %v1682, 0.5
        %v2457 = vmul.f32 %v1684, 0.5
        %v2458 = vmul.f32 %v2004, 0.5
        %v2459 = vmul.f32 %v2006, 0.5
        %v2460 = vmul.f32 %v2326, 0.5
        %v2461 = vmul.f32 %v2328, 0.5
        %v2462 = vmul.f32 %v1688, 0.5
        %v2463 = vmul.f32 %v1690, 0.5
        %v2464 = vmul.f32 %v2010, 0.5
        %v2465 = vmul.f32 %v2012, 0.5
        %v2466 = vmul.f32 %v2332, 0.5
        %v2467 = vmul.f32 %v2334, 0.5
        %v2468 = vmul.f32 %v1692, 0.5
        %v2469 = vmul.f32 %v1694, 0.5
        %v2470 = vmul.f32 %v2014, 0.5
        %v2471 = vmul.f32 %v2016, 0.5
        %v2472 = vmul.f32 %v2336, 0.5
        %v2473 = vmul.f32 %v2338, 0.5
        %v2474 = vmul.f32 %v1698, 0.5
        %v2475 = vmul.f32 %v1700, 0.5
        %v2476 = vmul.f32 %v2020, 0.5
        %v2477 = vmul.f32 %v2022, 0.5
        %v2478 = vmul.f32 %v2342, 0.5
        %v2479 = vmul.f32 %v2344, 0.5
        %v2480 = vmul.f32 %v1702, 0.5
        %v2481 = vmul.f32 %v1704, 0.5
        %v2482 = vmul.f32 %v2024, 0.5
        %v2483 = vmul.f32 %v2026, 0.5
        %v2484 = vmul.f32 %v2346, 0.5
        %v2485 = vmul.f32 %v2348, 0.5
        %v2486 = vmul.f32 %v1708, 0.5
        %v2487 = vmul.f32 %v1710, 0.5
        %v2488 = vmul.f32 %v2030, 0.5
        %v2489 = vmul.f32 %v2032, 0.5
        %v2490 = vmul.f32 %v2352, 0.5
        %v2491 = vmul.f32 %v2354, 0.5
        %v2492 = vmul.f32 %v1712, 0.5
        %v2493 = vmul.f32 %v1714, 0.5
        %v2494 = vmul.f32 %v2034, 0.5
        %v2495 = vmul.f32 %v2036, 0.5
        %v2496 = vmul.f32 %v2356, 0.5
        %v2497 = vmul.f32 %v2358, 0.5
        %v2498 = vmul.f32 %v1718, 0.5
        %v2499 = vmul.f32 %v1720, 0.5
        %v2500 = vmul.f32 %v2040, 0.5
        %v2501 = vmul.f32 %v2042, 0.5
        %v2502 = vmul.f32 %v2362, 0.5
        %v2503 = vmul.f32 %v2364, 0.5
        %v2504 = vmul.f32 %v1722, 0.5
        %v2505 = vmul.f32 %v1724, 0.5
        %v2506 = vmul.f32 %v2044, 0.5
        %v2507 = vmul.f32 %v2046, 0.5
        %v2508 = vmul.f32 %v2366, 0.5
        %v2509 = vmul.f32 %v2368, 0.5
        %v2510 = vmul.f32 %v1728, 0.5
        %v2511 = vmul.f32 %v1730, 0.5
        %v2512 = vmul.f32 %v2050, 0.5
        %v2513 = vmul.f32 %v2052, 0.5
        %v2514 = vmul.f32 %v2372, 0.5
        %v2515 = vmul.f32 %v2374, 0.5
        %v2516 = vmul.f32 %v1732, 0.5
        %v2517 = vmul.f32 %v1734, 0.5
        %v2518 = vmul.f32 %v2054, 0.5
        %v2519 = vmul.f32 %v2056, 0.5
        %v2520 = vmul.f32 %v2376, 0.5
        %v2521 = vmul.f32 %v2378, 0.5
        %v2522 = vmul.f32 %v1738, 0.5
        %v2523 = vmul.f32 %v1740, 0.5
        %v2524 = vmul.f32 %v2060, 0.5
        %v2525 = vmul.f32 %v2062, 0.5
        %v2526 = vmul.f32 %v2382, 0.5
        %v2527 = vmul.f32 %v2384, 0.5
        %v2528 = vmul.f32 %v1742, 0.5
        %v2529 = vmul.f32 %v1744, 0.5
        %v2530 = vmul.f32 %v2064, 0.5
        %v2531 = vmul.f32 %v2066, 0.5
        %v2532 = vmul.f32 %v2386, 0.5
        %v2533 = vmul.f32 %v2388, 0.5
        %v2534 = vmul.f32 %v1748, 0.5
        %v2535 = vmul.f32 %v1750, 0.5
        %v2536 = vmul.f32 %v2070, 0.5
        %v2537 = vmul.f32 %v2072, 0.5
        %v2538 = vmul.f32 %v2392, 0.5
        %v2539 = vmul.f32 %v2394, 0.5
        %v2540 = vmul.f32 %v1752, 0.5
        %v2541 = vmul.f32 %v1754, 0.5
        %v2542 = vmul.f32 %v2074, 0.5
        %v2543 = vmul.f32 %v2076, 0.5
        %v2544 = vmul.f32 %v2396, 0.5
        %v2545 = vmul.f32 %v2398, 0.5
        %v2546 = vmul.f32 %v1758, 0.5
        %v2547 = vmul.f32 %v1760, 0.5
        %v2548 = vmul.f32 %v2080, 0.5
        %v2549 = vmul.f32 %v2082, 0.5
        %v2550 = vmul.f32 %v2402, 0.5
        %v2551 = vmul.f32 %v2404, 0.5
        %v2552 = vmul.f32 %v1762, 0.5
        %v2553 = vmul.f32 %v1764, 0.5
        %v2554 = vmul.f32 %v2084, 0.5
        %v2555 = vmul.f32 %v2086, 0.5
        %v2556 = vmul.f32 %v2406, 0.5
        %v2557 = vmul.f32 %v2408, 0.5
        %v2558 = vmul.f32 %v1768, 0.5
        %v2559 = vmul.f32 %v1770, 0.5
        %v2560 = vmul.f32 %v2090, 0.5
        %v2561 = vmul.f32 %v2092, 0.5
        %v2562 = vmul.f32 %v2412, 0.5
        %v2563 = vmul.f32 %v2414, 0.5
        %v2564 = vmul.f32 %v1772, 0.5
        %v2565 = vmul.f32 %v1774, 0.5
        %v2566 = vmul.f32 %v2094, 0.5
        %v2567 = vmul.f32 %v2096, 0.5
        %v2568 = vmul.f32 %v2416, 0.5
        %v2569 = vmul.f32 %v2418, 0.5
        %v2570 = vmul.f32 %v1778, 0.5
        %v2571 = vmul.f32 %v1780, 0.5
        %v2572 = vmul.f32 %v2100, 0.5
        %v2573 = vmul.f32 %v2102, 0.5
        %v2574 = vmul.f32 %v2422, 0.5
        %v2575 = vmul.f32 %v2424, 0.5
        %v2576 = vmul.f32 %v1782, 0.5
        %v2577 = vmul.f32 %v1784, 0.5
        %v2578 = vmul.f32 %v2104, 0.5
        %v2579 = vmul.f32 %v2106, 0.5
        %v2580 = vmul.f32 %v2426, 0.5
        %v2581 = vmul.f32 %v2428, 0.5
        %v2582 = vmul.f32 %v1788, 0.5
        %v2583 = vmul.f32 %v1790, 0.5
        %v2584 = vmul.f32 %v2110, 0.5
        %v2585 = vmul.f32 %v2112, 0.5
        %v2586 = vmul.f32 %v2432, 0.5
        %v2587 = vmul.f32 %v2434, 0.5
        %v2588 = vmul.f32 %v1668, 0.044715
        %v2589 = vmul.f32 %v1670, 0.044715
        %v2590 = vmul.f32 %v1990, 0.044715
        %v2591 = vmul.f32 %v1992, 0.044715
        %v2592 = vmul.f32 %v2312, 0.044715
        %v2593 = vmul.f32 %v2314, 0.044715
        %v2594 = vmul.f32 %v1672, 0.044715
        %v2595 = vmul.f32 %v1674, 0.044715
        %v2596 = vmul.f32 %v1994, 0.044715
        %v2597 = vmul.f32 %v1996, 0.044715
        %v2598 = vmul.f32 %v2316, 0.044715
        %v2599 = vmul.f32 %v2318, 0.044715
        %v2600 = vmul.f32 %v1678, 0.044715
        %v2601 = vmul.f32 %v1680, 0.044715
        %v2602 = vmul.f32 %v2000, 0.044715
        %v2603 = vmul.f32 %v2002, 0.044715
        %v2604 = vmul.f32 %v2322, 0.044715
        %v2605 = vmul.f32 %v2324, 0.044715
        %v2606 = vmul.f32 %v1682, 0.044715
        %v2607 = vmul.f32 %v1684, 0.044715
        %v2608 = vmul.f32 %v2004, 0.044715
        %v2609 = vmul.f32 %v2006, 0.044715
        %v2610 = vmul.f32 %v2326, 0.044715
        %v2611 = vmul.f32 %v2328, 0.044715
        %v2612 = vmul.f32 %v1688, 0.044715
        %v2613 = vmul.f32 %v1690, 0.044715
        %v2614 = vmul.f32 %v2010, 0.044715
        %v2615 = vmul.f32 %v2012, 0.044715
        %v2616 = vmul.f32 %v2332, 0.044715
        %v2617 = vmul.f32 %v2334, 0.044715
        %v2618 = vmul.f32 %v1692, 0.044715
        %v2619 = vmul.f32 %v1694, 0.044715
        %v2620 = vmul.f32 %v2014, 0.044715
        %v2621 = vmul.f32 %v2016, 0.044715
        %v2622 = vmul.f32 %v2336, 0.044715
        %v2623 = vmul.f32 %v2338, 0.044715
        %v2624 = vmul.f32 %v1698, 0.044715
        %v2625 = vmul.f32 %v1700, 0.044715
        %v2626 = vmul.f32 %v2020, 0.044715
        %v2627 = vmul.f32 %v2022, 0.044715
        %v2628 = vmul.f32 %v2342, 0.044715
        %v2629 = vmul.f32 %v2344, 0.044715
        %v2630 = vmul.f32 %v1702, 0.044715
        %v2631 = vmul.f32 %v1704, 0.044715
        %v2632 = vmul.f32 %v2024, 0.044715
        %v2633 = vmul.f32 %v2026, 0.044715
        %v2634 = vmul.f32 %v2346, 0.044715
        %v2635 = vmul.f32 %v2348, 0.044715
        %v2636 = vmul.f32 %v1708, 0.044715
        %v2637 = vmul.f32 %v1710, 0.044715
        %v2638 = vmul.f32 %v2030, 0.044715
        %v2639 = vmul.f32 %v2032, 0.044715
        %v2640 = vmul.f32 %v2352, 0.044715
        %v2641 = vmul.f32 %v2354, 0.044715
        %v2642 = vmul.f32 %v1712, 0.044715
        %v2643 = vmul.f32 %v1714, 0.044715
        %v2644 = vmul.f32 %v2034, 0.044715
        %v2645 = vmul.f32 %v2036, 0.044715
        %v2646 = vmul.f32 %v2356, 0.044715
        %v2647 = vmul.f32 %v2358, 0.044715
        %v2648 = vmul.f32 %v1718, 0.044715
        %v2649 = vmul.f32 %v1720, 0.044715
        %v2650 = vmul.f32 %v2040, 0.044715
        %v2651 = vmul.f32 %v2042, 0.044715
        %v2652 = vmul.f32 %v2362, 0.044715
        %v2653 = vmul.f32 %v2364, 0.044715
        %v2654 = vmul.f32 %v1722, 0.044715
        %v2655 = vmul.f32 %v1724, 0.044715
        %v2656 = vmul.f32 %v2044, 0.044715
        %v2657 = vmul.f32 %v2046, 0.044715
        %v2658 = vmul.f32 %v2366, 0.044715
        %v2659 = vmul.f32 %v2368, 0.044715
        %v2660 = vmul.f32 %v1728, 0.044715
        %v2661 = vmul.f32 %v1730, 0.044715
        %v2662 = vmul.f32 %v2050, 0.044715
        %v2663 = vmul.f32 %v2052, 0.044715
        %v2664 = vmul.f32 %v2372, 0.044715
        %v2665 = vmul.f32 %v2374, 0.044715
        %v2666 = vmul.f32 %v1732, 0.044715
        %v2667 = vmul.f32 %v1734, 0.044715
        %v2668 = vmul.f32 %v2054, 0.044715
        %v2669 = vmul.f32 %v2056, 0.044715
        %v2670 = vmul.f32 %v2376, 0.044715
        %v2671 = vmul.f32 %v2378, 0.044715
        %v2672 = vmul.f32 %v1738, 0.044715
        %v2673 = vmul.f32 %v1740, 0.044715
        %v2674 = vmul.f32 %v2060, 0.044715
        %v2675 = vmul.f32 %v2062, 0.044715
        %v2676 = vmul.f32 %v2382, 0.044715
        %v2677 = vmul.f32 %v2384, 0.044715
        %v2678 = vmul.f32 %v1742, 0.044715
        %v2679 = vmul.f32 %v1744, 0.044715
        %v2680 = vmul.f32 %v2064, 0.044715
        %v2681 = vmul.f32 %v2066, 0.044715
        %v2682 = vmul.f32 %v2386, 0.044715
        %v2683 = vmul.f32 %v2388, 0.044715
        %v2684 = vmul.f32 %v1748, 0.044715
        %v2685 = vmul.f32 %v1750, 0.044715
        %v2686 = vmul.f32 %v2070, 0.044715
        %v2687 = vmul.f32 %v2072, 0.044715
        %v2688 = vmul.f32 %v2392, 0.044715
        %v2689 = vmul.f32 %v2394, 0.044715
        %v2690 = vmul.f32 %v1752, 0.044715
        %v2691 = vmul.f32 %v1754, 0.044715
        %v2692 = vmul.f32 %v2074, 0.044715
        %v2693 = vmul.f32 %v2076, 0.044715
        %v2694 = vmul.f32 %v2396, 0.044715
        %v2695 = vmul.f32 %v2398, 0.044715
        %v2696 = vmul.f32 %v1758, 0.044715
        %v2697 = vmul.f32 %v1760, 0.044715
        %v2698 = vmul.f32 %v2080, 0.044715
        %v2699 = vmul.f32 %v2082, 0.044715
        %v2700 = vmul.f32 %v2402, 0.044715
        %v2701 = vmul.f32 %v2404, 0.044715
        %v2702 = vmul.f32 %v1762, 0.044715
        %v2703 = vmul.f32 %v1764, 0.044715
        %v2704 = vmul.f32 %v2084, 0.044715
        %v2705 = vmul.f32 %v2086, 0.044715
        %v2706 = vmul.f32 %v2406, 0.044715
        %v2707 = vmul.f32 %v2408, 0.044715
        %v2708 = vmul.f32 %v1768, 0.044715
        %v2709 = vmul.f32 %v1770, 0.044715
        %v2710 = vmul.f32 %v2090, 0.044715
        %v2711 = vmul.f32 %v2092, 0.044715
        %v2712 = vmul.f32 %v2412, 0.044715
        %v2713 = vmul.f32 %v2414, 0.044715
        %v2714 = vmul.f32 %v1772, 0.044715
        %v2715 = vmul.f32 %v1774, 0.044715
        %v2716 = vmul.f32 %v2094, 0.044715
        %v2717 = vmul.f32 %v2096, 0.044715
        %v2718 = vmul.f32 %v2416, 0.044715
        %v2719 = vmul.f32 %v2418, 0.044715
        %v2720 = vmul.f32 %v1778, 0.044715
        %v2721 = vmul.f32 %v1780, 0.044715
        %v2722 = vmul.f32 %v2100, 0.044715
        %v2723 = vmul.f32 %v2102, 0.044715
        %v2724 = vmul.f32 %v2422, 0.044715
        %v2725 = vmul.f32 %v2424, 0.044715
        %v2726 = vmul.f32 %v1782, 0.044715
        %v2727 = vmul.f32 %v1784, 0.044715
        %v2728 = vmul.f32 %v2104, 0.044715
        %v2729 = vmul.f32 %v2106, 0.044715
        %v2730 = vmul.f32 %v2426, 0.044715
        %v2731 = vmul.f32 %v2428, 0.044715
        %v2732 = vmul.f32 %v1788, 0.044715
        %v2733 = vmul.f32 %v1790, 0.044715
        %v2734 = vmul.f32 %v2110, 0.044715
        %v2735 = vmul.f32 %v2112, 0.044715
        %v2736 = vmul.f32 %v2432, 0.044715
        %v2737 = vmul.f32 %v2434, 0.044715
        %v2738 = vmul.f32 %v2588, %v1668
        %v2739 = vmul.f32 %v2589, %v1670
        %v2740 = vmul.f32 %v2590, %v1990
        %v2741 = vmul.f32 %v2591, %v1992
        %v2742 = vmul.f32 %v2592, %v2312
        %v2743 = vmul.f32 %v2593, %v2314
        %v2744 = vmul.f32 %v2594, %v1672
        %v2745 = vmul.f32 %v2595, %v1674
        %v2746 = vmul.f32 %v2596, %v1994
        %v2747 = vmul.f32 %v2597, %v1996
        %v2748 = vmul.f32 %v2598, %v2316
        %v2749 = vmul.f32 %v2599, %v2318
        %v2750 = vmul.f32 %v2600, %v1678
        %v2751 = vmul.f32 %v2601, %v1680
        %v2752 = vmul.f32 %v2602, %v2000
        %v2753 = vmul.f32 %v2603, %v2002
        %v2754 = vmul.f32 %v2604, %v2322
        %v2755 = vmul.f32 %v2605, %v2324
        %v2756 = vmul.f32 %v2606, %v1682
        %v2757 = vmul.f32 %v2607, %v1684
        %v2758 = vmul.f32 %v2608, %v2004
        %v2759 = vmul.f32 %v2609, %v2006
        %v2760 = vmul.f32 %v2610, %v2326
        %v2761 = vmul.f32 %v2611, %v2328
        %v2762 = vmul.f32 %v2612, %v1688
        %v2763 = vmul.f32 %v2613, %v1690
        %v2764 = vmul.f32 %v2614, %v2010
        %v2765 = vmul.f32 %v2615, %v2012
        %v2766 = vmul.f32 %v2616, %v2332
        %v2767 = vmul.f32 %v2617, %v2334
        %v2768 = vmul.f32 %v2618, %v1692
        %v2769 = vmul.f32 %v2619, %v1694
        %v2770 = vmul.f32 %v2620, %v2014
        %v2771 = vmul.f32 %v2621, %v2016
        %v2772 = vmul.f32 %v2622, %v2336
        %v2773 = vmul.f32 %v2623, %v2338
        %v2774 = vmul.f32 %v2624, %v1698
        %v2775 = vmul.f32 %v2625, %v1700
        %v2776 = vmul.f32 %v2626, %v2020
        %v2777 = vmul.f32 %v2627, %v2022
        %v2778 = vmul.f32 %v2628, %v2342
        %v2779 = vmul.f32 %v2629, %v2344
        %v2780 = vmul.f32 %v2630, %v1702
        %v2781 = vmul.f32 %v2631, %v1704
        %v2782 = vmul.f32 %v2632, %v2024
        %v2783 = vmul.f32 %v2633, %v2026
        %v2784 = vmul.f32 %v2634, %v2346
        %v2785 = vmul.f32 %v2635, %v2348
        %v2786 = vmul.f32 %v2636, %v1708
        %v2787 = vmul.f32 %v2637, %v1710
        %v2788 = vmul.f32 %v2638, %v2030
        %v2789 = vmul.f32 %v2639, %v2032
        %v2790 = vmul.f32 %v2640, %v2352
        %v2791 = vmul.f32 %v2641, %v2354
        %v2792 = vmul.f32 %v2642, %v1712
        %v2793 = vmul.f32 %v2643, %v1714
        %v2794 = vmul.f32 %v2644, %v2034
        %v2795 = vmul.f32 %v2645, %v2036
        %v2796 = vmul.f32 %v2646, %v2356
        %v2797 = vmul.f32 %v2647, %v2358
        %v2798 = vmul.f32 %v2648, %v1718
        %v2799 = vmul.f32 %v2649, %v1720
        %v2800 = vmul.f32 %v2650, %v2040
        %v2801 = vmul.f32 %v2651, %v2042
        %v2802 = vmul.f32 %v2652, %v2362
        %v2803 = vmul.f32 %v2653, %v2364
        %v2804 = vmul.f32 %v2654, %v1722
        %v2805 = vmul.f32 %v2655, %v1724
        %v2806 = vmul.f32 %v2656, %v2044
        %v2807 = vmul.f32 %v2657, %v2046
        %v2808 = vmul.f32 %v2658, %v2366
        %v2809 = vmul.f32 %v2659, %v2368
        %v2810 = vmul.f32 %v2660, %v1728
        %v2811 = vmul.f32 %v2661, %v1730
        %v2812 = vmul.f32 %v2662, %v2050
        %v2813 = vmul.f32 %v2663, %v2052
        %v2814 = vmul.f32 %v2664, %v2372
        %v2815 = vmul.f32 %v2665, %v2374
        %v2816 = vmul.f32 %v2666, %v1732
        %v2817 = vmul.f32 %v2667, %v1734
        %v2818 = vmul.f32 %v2668, %v2054
        %v2819 = vmul.f32 %v2669, %v2056
        %v2820 = vmul.f32 %v2670, %v2376
        %v2821 = vmul.f32 %v2671, %v2378
        %v2822 = vmul.f32 %v2672, %v1738
        %v2823 = vmul.f32 %v2673, %v1740
        %v2824 = vmul.f32 %v2674, %v2060
        %v2825 = vmul.f32 %v2675, %v2062
        %v2826 = vmul.f32 %v2676, %v2382
        %v2827 = vmul.f32 %v2677, %v2384
        %v2828 = vmul.f32 %v2678, %v1742
        %v2829 = vmul.f32 %v2679, %v1744
        %v2830 = vmul.f32 %v2680, %v2064
        %v2831 = vmul.f32 %v2681, %v2066
        %v2832 = vmul.f32 %v2682, %v2386
        %v2833 = vmul.f32 %v2683, %v2388
        %v2834 = vmul.f32 %v2684, %v1748
        %v2835 = vmul.f32 %v2685, %v1750
        %v2836 = vmul.f32 %v2686, %v2070
        %v2837 = vmul.f32 %v2687, %v2072
        %v2838 = vmul.f32 %v2688, %v2392
        %v2839 = vmul.f32 %v2689, %v2394
        %v2840 = vmul.f32 %v2690, %v1752
        %v2841 = vmul.f32 %v2691, %v1754
        %v2842 = vmul.f32 %v2692, %v2074
        %v2843 = vmul.f32 %v2693, %v2076
        %v2844 = vmul.f32 %v2694, %v2396
        %v2845 = vmul.f32 %v2695, %v2398
        %v2846 = vmul.f32 %v2696, %v1758
        %v2847 = vmul.f32 %v2697, %v1760
        %v2848 = vmul.f32 %v2698, %v2080
        %v2849 = vmul.f32 %v2699, %v2082
        %v2850 = vmul.f32 %v2700, %v2402
        %v2851 = vmul.f32 %v2701, %v2404
        %v2852 = vmul.f32 %v2702, %v1762
        %v2853 = vmul.f32 %v2703, %v1764
        %v2854 = vmul.f32 %v2704, %v2084
        %v2855 = vmul.f32 %v2705, %v2086
        %v2856 = vmul.f32 %v2706, %v2406
        %v2857 = vmul.f32 %v2707, %v2408
        %v2858 = vmul.f32 %v2708, %v1768
        %v2859 = vmul.f32 %v2709, %v1770
        %v2860 = vmul.f32 %v2710, %v2090
        %v2861 = vmul.f32 %v2711, %v2092
        %v2862 = vmul.f32 %v2712, %v2412
        %v2863 = vmul.f32 %v2713, %v2414
        %v2864 = vmul.f32 %v2714, %v1772
        %v2865 = vmul.f32 %v2715, %v1774
        %v2866 = vmul.f32 %v2716, %v2094
        %v2867 = vmul.f32 %v2717, %v2096
        %v2868 = vmul.f32 %v2718, %v2416
        %v2869 = vmul.f32 %v2719, %v2418
        %v2870 = vmul.f32 %v2720, %v1778
        %v2871 = vmul.f32 %v2721, %v1780
        %v2872 = vmul.f32 %v2722, %v2100
        %v2873 = vmul.f32 %v2723, %v2102
        %v2874 = vmul.f32 %v2724, %v2422
        %v2875 = vmul.f32 %v2725, %v2424
        %v2876 = vmul.f32 %v2726, %v1782
        %v2877 = vmul.f32 %v2727, %v1784
        %v2878 = vmul.f32 %v2728, %v2104
        %v2879 = vmul.f32 %v2729, %v2106
        %v2880 = vmul.f32 %v2730, %v2426
        %v2881 = vmul.f32 %v2731, %v2428
        %v2882 = vmul.f32 %v2732, %v1788
        %v2883 = vmul.f32 %v2733, %v1790
        %v2884 = vmul.f32 %v2734, %v2110
        %v2885 = vmul.f32 %v2735, %v2112
        %v2886 = vmul.f32 %v2736, %v2432
        %v2887 = vmul.f32 %v2737, %v2434
        %v2888 = vmul.f32 %v2738, %v1668
        %v2889 = vmul.f32 %v2739, %v1670
        %v2890 = vmul.f32 %v2740, %v1990
        %v2891 = vmul.f32 %v2741, %v1992
        %v2892 = vmul.f32 %v2742, %v2312
        %v2893 = vmul.f32 %v2743, %v2314
        %v2894 = vmul.f32 %v2744, %v1672
        %v2895 = vmul.f32 %v2745, %v1674
        %v2896 = vmul.f32 %v2746, %v1994
        %v2897 = vmul.f32 %v2747, %v1996
        %v2898 = vmul.f32 %v2748, %v2316
        %v2899 = vmul.f32 %v2749, %v2318
        %v2900 = vmul.f32 %v2750, %v1678
        %v2901 = vmul.f32 %v2751, %v1680
        %v2902 = vmul.f32 %v2752, %v2000
        %v2903 = vmul.f32 %v2753, %v2002
        %v2904 = vmul.f32 %v2754, %v2322
        %v2905 = vmul.f32 %v2755, %v2324
        %v2906 = vmul.f32 %v2756, %v1682
        %v2907 = vmul.f32 %v2757, %v1684
        %v2908 = vmul.f32 %v2758, %v2004
        %v2909 = vmul.f32 %v2759, %v2006
        %v2910 = vmul.f32 %v2760, %v2326
        %v2911 = vmul.f32 %v2761, %v2328
        %v2912 = vmul.f32 %v2762, %v1688
        %v2913 = vmul.f32 %v2763, %v1690
        %v2914 = vmul.f32 %v2764, %v2010
        %v2915 = vmul.f32 %v2765, %v2012
        %v2916 = vmul.f32 %v2766, %v2332
        %v2917 = vmul.f32 %v2767, %v2334
        %v2918 = vmul.f32 %v2768, %v1692
        %v2919 = vmul.f32 %v2769, %v1694
        %v2920 = vmul.f32 %v2770, %v2014
        %v2921 = vmul.f32 %v2771, %v2016
        %v2922 = vmul.f32 %v2772, %v2336
        %v2923 = vmul.f32 %v2773, %v2338
        %v2924 = vmul.f32 %v2774, %v1698
        %v2925 = vmul.f32 %v2775, %v1700
        %v2926 = vmul.f32 %v2776, %v2020
        %v2927 = vmul.f32 %v2777, %v2022
        %v2928 = vmul.f32 %v2778, %v2342
        %v2929 = vmul.f32 %v2779, %v2344
        %v2930 = vmul.f32 %v2780, %v1702
        %v2931 = vmul.f32 %v2781, %v1704
        %v2932 = vmul.f32 %v2782, %v2024
        %v2933 = vmul.f32 %v2783, %v2026
        %v2934 = vmul.f32 %v2784, %v2346
        %v2935 = vmul.f32 %v2785, %v2348
        %v2936 = vmul.f32 %v2786, %v1708
        %v2937 = vmul.f32 %v2787, %v1710
        %v2938 = vmul.f32 %v2788, %v2030
        %v2939 = vmul.f32 %v2789, %v2032
        %v2940 = vmul.f32 %v2790, %v2352
        %v2941 = vmul.f32 %v2791, %v2354
        %v2942 = vmul.f32 %v2792, %v1712
        %v2943 = vmul.f32 %v2793, %v1714
        %v2944 = vmul.f32 %v2794, %v2034
        %v2945 = vmul.f32 %v2795, %v2036
        %v2946 = vmul.f32 %v2796, %v2356
        %v2947 = vmul.f32 %v2797, %v2358
        %v2948 = vmul.f32 %v2798, %v1718
        %v2949 = vmul.f32 %v2799, %v1720
        %v2950 = vmul.f32 %v2800, %v2040
        %v2951 = vmul.f32 %v2801, %v2042
        %v2952 = vmul.f32 %v2802, %v2362
        %v2953 = vmul.f32 %v2803, %v2364
        %v2954 = vmul.f32 %v2804, %v1722
        %v2955 = vmul.f32 %v2805, %v1724
        %v2956 = vmul.f32 %v2806, %v2044
        %v2957 = vmul.f32 %v2807, %v2046
        %v2958 = vmul.f32 %v2808, %v2366
        %v2959 = vmul.f32 %v2809, %v2368
        %v2960 = vmul.f32 %v2810, %v1728
        %v2961 = vmul.f32 %v2811, %v1730
        %v2962 = vmul.f32 %v2812, %v2050
        %v2963 = vmul.f32 %v2813, %v2052
        %v2964 = vmul.f32 %v2814, %v2372
        %v2965 = vmul.f32 %v2815, %v2374
        %v2966 = vmul.f32 %v2816, %v1732
        %v2967 = vmul.f32 %v2817, %v1734
        %v2968 = vmul.f32 %v2818, %v2054
        %v2969 = vmul.f32 %v2819, %v2056
        %v2970 = vmul.f32 %v2820, %v2376
        %v2971 = vmul.f32 %v2821, %v2378
        %v2972 = vmul.f32 %v2822, %v1738
        %v2973 = vmul.f32 %v2823, %v1740
        %v2974 = vmul.f32 %v2824, %v2060
        %v2975 = vmul.f32 %v2825, %v2062
        %v2976 = vmul.f32 %v2826, %v2382
        %v2977 = vmul.f32 %v2827, %v2384
        %v2978 = vmul.f32 %v2828, %v1742
        %v2979 = vmul.f32 %v2829, %v1744
        %v2980 = vmul.f32 %v2830, %v2064
        %v2981 = vmul.f32 %v2831, %v2066
        %v2982 = vmul.f32 %v2832, %v2386
        %v2983 = vmul.f32 %v2833, %v2388
        %v2984 = vmul.f32 %v2834, %v1748
        %v2985 = vmul.f32 %v2835, %v1750
        %v2986 = vmul.f32 %v2836, %v2070
        %v2987 = vmul.f32 %v2837, %v2072
        %v2988 = vmul.f32 %v2838, %v2392
        %v2989 = vmul.f32 %v2839, %v2394
        %v2990 = vmul.f32 %v2840, %v1752
        %v2991 = vmul.f32 %v2841, %v1754
        %v2992 = vmul.f32 %v2842, %v2074
        %v2993 = vmul.f32 %v2843, %v2076
        %v2994 = vmul.f32 %v2844, %v2396
        %v2995 = vmul.f32 %v2845, %v2398
        %v2996 = vmul.f32 %v2846, %v1758
        %v2997 = vmul.f32 %v2847, %v1760
        %v2998 = vmul.f32 %v2848, %v2080
        %v2999 = vmul.f32 %v2849, %v2082
        %v3000 = vmul.f32 %v2850, %v2402
        %v3001 = vmul.f32 %v2851, %v2404
        %v3002 = vmul.f32 %v2852, %v1762
        %v3003 = vmul.f32 %v2853, %v1764
        %v3004 = vmul.f32 %v2854, %v2084
        %v3005 = vmul.f32 %v2855, %v2086
        %v3006 = vmul.f32 %v2856, %v2406
        %v3007 = vmul.f32 %v2857, %v2408
        %v3008 = vmul.f32 %v2858, %v1768
        %v3009 = vmul.f32 %v2859, %v1770
        %v3010 = vmul.f32 %v2860, %v2090
        %v3011 = vmul.f32 %v2861, %v2092
        %v3012 = vmul.f32 %v2862, %v2412
        %v3013 = vmul.f32 %v2863, %v2414
        %v3014 = vmul.f32 %v2864, %v1772
        %v3015 = vmul.f32 %v2865, %v1774
        %v3016 = vmul.f32 %v2866, %v2094
        %v3017 = vmul.f32 %v2867, %v2096
        %v3018 = vmul.f32 %v2868, %v2416
        %v3019 = vmul.f32 %v2869, %v2418
        %v3020 = vmul.f32 %v2870, %v1778
        %v3021 = vmul.f32 %v2871, %v1780
        %v3022 = vmul.f32 %v2872, %v2100
        %v3023 = vmul.f32 %v2873, %v2102
        %v3024 = vmul.f32 %v2874, %v2422
        %v3025 = vmul.f32 %v2875, %v2424
        %v3026 = vmul.f32 %v2876, %v1782
        %v3027 = vmul.f32 %v2877, %v1784
        %v3028 = vmul.f32 %v2878, %v2104
        %v3029 = vmul.f32 %v2879, %v2106
        %v3030 = vmul.f32 %v2880, %v2426
        %v3031 = vmul.f32 %v2881, %v2428
        %v3032 = vmul.f32 %v2882, %v1788
        %v3033 = vmul.f32 %v2883, %v1790
        %v3034 = vmul.f32 %v2884, %v2110
        %v3035 = vmul.f32 %v2885, %v2112
        %v3036 = vmul.f32 %v2886, %v2432
        %v3037 = vmul.f32 %v2887, %v2434
        %v3038 = vadd.f32 %v1668, %v2888
        %v3039 = vadd.f32 %v1670, %v2889
        %v3040 = vadd.f32 %v1990, %v2890
        %v3041 = vadd.f32 %v1992, %v2891
        %v3042 = vadd.f32 %v2312, %v2892
        %v3043 = vadd.f32 %v2314, %v2893
        %v3044 = vadd.f32 %v1672, %v2894
        %v3045 = vadd.f32 %v1674, %v2895
        %v3046 = vadd.f32 %v1994, %v2896
        %v3047 = vadd.f32 %v1996, %v2897
        %v3048 = vadd.f32 %v2316, %v2898
        %v3049 = vadd.f32 %v2318, %v2899
        %v3050 = vadd.f32 %v1678, %v2900
        %v3051 = vadd.f32 %v1680, %v2901
        %v3052 = vadd.f32 %v2000, %v2902
        %v3053 = vadd.f32 %v2002, %v2903
        %v3054 = vadd.f32 %v2322, %v2904
        %v3055 = vadd.f32 %v2324, %v2905
        %v3056 = vadd.f32 %v1682, %v2906
        %v3057 = vadd.f32 %v1684, %v2907
        %v3058 = vadd.f32 %v2004, %v2908
        %v3059 = vadd.f32 %v2006, %v2909
        %v3060 = vadd.f32 %v2326, %v2910
        %v3061 = vadd.f32 %v2328, %v2911
        %v3062 = vadd.f32 %v1688, %v2912
        %v3063 = vadd.f32 %v1690, %v2913
        %v3064 = vadd.f32 %v2010, %v2914
        %v3065 = vadd.f32 %v2012, %v2915
        %v3066 = vadd.f32 %v2332, %v2916
        %v3067 = vadd.f32 %v2334, %v2917
        %v3068 = vadd.f32 %v1692, %v2918
        %v3069 = vadd.f32 %v1694, %v2919
        %v3070 = vadd.f32 %v2014, %v2920
        %v3071 = vadd.f32 %v2016, %v2921
        %v3072 = vadd.f32 %v2336, %v2922
        %v3073 = vadd.f32 %v2338, %v2923
        %v3074 = vadd.f32 %v1698, %v2924
        %v3075 = vadd.f32 %v1700, %v2925
        %v3076 = vadd.f32 %v2020, %v2926
        %v3077 = vadd.f32 %v2022, %v2927
        %v3078 = vadd.f32 %v2342, %v2928
        %v3079 = vadd.f32 %v2344, %v2929
        %v3080 = vadd.f32 %v1702, %v2930
        %v3081 = vadd.f32 %v1704, %v2931
        %v3082 = vadd.f32 %v2024, %v2932
        %v3083 = vadd.f32 %v2026, %v2933
        %v3084 = vadd.f32 %v2346, %v2934
        %v3085 = vadd.f32 %v2348, %v2935
        %v3086 = vadd.f32 %v1708, %v2936
        %v3087 = vadd.f32 %v1710, %v2937
        %v3088 = vadd.f32 %v2030, %v2938
        %v3089 = vadd.f32 %v2032, %v2939
        %v3090 = vadd.f32 %v2352, %v2940
        %v3091 = vadd.f32 %v2354, %v2941
        %v3092 = vadd.f32 %v1712, %v2942
        %v3093 = vadd.f32 %v1714, %v2943
        %v3094 = vadd.f32 %v2034, %v2944
        %v3095 = vadd.f32 %v2036, %v2945
        %v3096 = vadd.f32 %v2356, %v2946
        %v3097 = vadd.f32 %v2358, %v2947
        %v3098 = vadd.f32 %v1718, %v2948
        %v3099 = vadd.f32 %v1720, %v2949
        %v3100 = vadd.f32 %v2040, %v2950
        %v3101 = vadd.f32 %v2042, %v2951
        %v3102 = vadd.f32 %v2362, %v2952
        %v3103 = vadd.f32 %v2364, %v2953
        %v3104 = vadd.f32 %v1722, %v2954
        %v3105 = vadd.f32 %v1724, %v2955
        %v3106 = vadd.f32 %v2044, %v2956
        %v3107 = vadd.f32 %v2046, %v2957
        %v3108 = vadd.f32 %v2366, %v2958
        %v3109 = vadd.f32 %v2368, %v2959
        %v3110 = vadd.f32 %v1728, %v2960
        %v3111 = vadd.f32 %v1730, %v2961
        %v3112 = vadd.f32 %v2050, %v2962
        %v3113 = vadd.f32 %v2052, %v2963
        %v3114 = vadd.f32 %v2372, %v2964
        %v3115 = vadd.f32 %v2374, %v2965
        %v3116 = vadd.f32 %v1732, %v2966
        %v3117 = vadd.f32 %v1734, %v2967
        %v3118 = vadd.f32 %v2054, %v2968
        %v3119 = vadd.f32 %v2056, %v2969
        %v3120 = vadd.f32 %v2376, %v2970
        %v3121 = vadd.f32 %v2378, %v2971
        %v3122 = vadd.f32 %v1738, %v2972
        %v3123 = vadd.f32 %v1740, %v2973
        %v3124 = vadd.f32 %v2060, %v2974
        %v3125 = vadd.f32 %v2062, %v2975
        %v3126 = vadd.f32 %v2382, %v2976
        %v3127 = vadd.f32 %v2384, %v2977
        %v3128 = vadd.f32 %v1742, %v2978
        %v3129 = vadd.f32 %v1744, %v2979
        %v3130 = vadd.f32 %v2064, %v2980
        %v3131 = vadd.f32 %v2066, %v2981
        %v3132 = vadd.f32 %v2386, %v2982
        %v3133 = vadd.f32 %v2388, %v2983
        %v3134 = vadd.f32 %v1748, %v2984
        %v3135 = vadd.f32 %v1750, %v2985
        %v3136 = vadd.f32 %v2070, %v2986
        %v3137 = vadd.f32 %v2072, %v2987
        %v3138 = vadd.f32 %v2392, %v2988
        %v3139 = vadd.f32 %v2394, %v2989
        %v3140 = vadd.f32 %v1752, %v2990
        %v3141 = vadd.f32 %v1754, %v2991
        %v3142 = vadd.f32 %v2074, %v2992
        %v3143 = vadd.f32 %v2076, %v2993
        %v3144 = vadd.f32 %v2396, %v2994
        %v3145 = vadd.f32 %v2398, %v2995
        %v3146 = vadd.f32 %v1758, %v2996
        %v3147 = vadd.f32 %v1760, %v2997
        %v3148 = vadd.f32 %v2080, %v2998
        %v3149 = vadd.f32 %v2082, %v2999
        %v3150 = vadd.f32 %v2402, %v3000
        %v3151 = vadd.f32 %v2404, %v3001
        %v3152 = vadd.f32 %v1762, %v3002
        %v3153 = vadd.f32 %v1764, %v3003
        %v3154 = vadd.f32 %v2084, %v3004
        %v3155 = vadd.f32 %v2086, %v3005
        %v3156 = vadd.f32 %v2406, %v3006
        %v3157 = vadd.f32 %v2408, %v3007
        %v3158 = vadd.f32 %v1768, %v3008
        %v3159 = vadd.f32 %v1770, %v3009
        %v3160 = vadd.f32 %v2090, %v3010
        %v3161 = vadd.f32 %v2092, %v3011
        %v3162 = vadd.f32 %v2412, %v3012
        %v3163 = vadd.f32 %v2414, %v3013
        %v3164 = vadd.f32 %v1772, %v3014
        %v3165 = vadd.f32 %v1774, %v3015
        %v3166 = vadd.f32 %v2094, %v3016
        %v3167 = vadd.f32 %v2096, %v3017
        %v3168 = vadd.f32 %v2416, %v3018
        %v3169 = vadd.f32 %v2418, %v3019
        %v3170 = vadd.f32 %v1778, %v3020
        %v3171 = vadd.f32 %v1780, %v3021
        %v3172 = vadd.f32 %v2100, %v3022
        %v3173 = vadd.f32 %v2102, %v3023
        %v3174 = vadd.f32 %v2422, %v3024
        %v3175 = vadd.f32 %v2424, %v3025
        %v3176 = vadd.f32 %v1782, %v3026
        %v3177 = vadd.f32 %v1784, %v3027
        %v3178 = vadd.f32 %v2104, %v3028
        %v3179 = vadd.f32 %v2106, %v3029
        %v3180 = vadd.f32 %v2426, %v3030
        %v3181 = vadd.f32 %v2428, %v3031
        %v3182 = vadd.f32 %v1788, %v3032
        %v3183 = vadd.f32 %v1790, %v3033
        %v3184 = vadd.f32 %v2110, %v3034
        %v3185 = vadd.f32 %v2112, %v3035
        %v3186 = vadd.f32 %v2432, %v3036
        %v3187 = vadd.f32 %v2434, %v3037
        %v3188 = vmul.f32 %v3038, 0.7978846
        %v3189 = vmul.f32 %v3039, 0.7978846
        %v3190 = vmul.f32 %v3040, 0.7978846
        %v3191 = vmul.f32 %v3041, 0.7978846
        %v3192 = vmul.f32 %v3042, 0.7978846
        %v3193 = vmul.f32 %v3043, 0.7978846
        %v3194 = vmul.f32 %v3044, 0.7978846
        %v3195 = vmul.f32 %v3045, 0.7978846
        %v3196 = vmul.f32 %v3046, 0.7978846
        %v3197 = vmul.f32 %v3047, 0.7978846
        %v3198 = vmul.f32 %v3048, 0.7978846
        %v3199 = vmul.f32 %v3049, 0.7978846
        %v3200 = vmul.f32 %v3050, 0.7978846
        %v3201 = vmul.f32 %v3051, 0.7978846
        %v3202 = vmul.f32 %v3052, 0.7978846
        %v3203 = vmul.f32 %v3053, 0.7978846
        %v3204 = vmul.f32 %v3054, 0.7978846
        %v3205 = vmul.f32 %v3055, 0.7978846
        %v3206 = vmul.f32 %v3056, 0.7978846
        %v3207 = vmul.f32 %v3057, 0.7978846
        %v3208 = vmul.f32 %v3058, 0.7978846
        %v3209 = vmul.f32 %v3059, 0.7978846
        %v3210 = vmul.f32 %v3060, 0.7978846
        %v3211 = vmul.f32 %v3061, 0.7978846
        %v3212 = vmul.f32 %v3062, 0.7978846
        %v3213 = vmul.f32 %v3063, 0.7978846
        %v3214 = vmul.f32 %v3064, 0.7978846
        %v3215 = vmul.f32 %v3065, 0.7978846
        %v3216 = vmul.f32 %v3066, 0.7978846
        %v3217 = vmul.f32 %v3067, 0.7978846
        %v3218 = vmul.f32 %v3068, 0.7978846
        %v3219 = vmul.f32 %v3069, 0.7978846
        %v3220 = vmul.f32 %v3070, 0.7978846
        %v3221 = vmul.f32 %v3071, 0.7978846
        %v3222 = vmul.f32 %v3072, 0.7978846
        %v3223 = vmul.f32 %v3073, 0.7978846
        %v3224 = vmul.f32 %v3074, 0.7978846
        %v3225 = vmul.f32 %v3075, 0.7978846
        %v3226 = vmul.f32 %v3076, 0.7978846
        %v3227 = vmul.f32 %v3077, 0.7978846
        %v3228 = vmul.f32 %v3078, 0.7978846
        %v3229 = vmul.f32 %v3079, 0.7978846
        %v3230 = vmul.f32 %v3080, 0.7978846
        %v3231 = vmul.f32 %v3081, 0.7978846
        %v3232 = vmul.f32 %v3082, 0.7978846
        %v3233 = vmul.f32 %v3083, 0.7978846
        %v3234 = vmul.f32 %v3084, 0.7978846
        %v3235 = vmul.f32 %v3085, 0.7978846
        %v3236 = vmul.f32 %v3086, 0.7978846
        %v3237 = vmul.f32 %v3087, 0.7978846
        %v3238 = vmul.f32 %v3088, 0.7978846
        %v3239 = vmul.f32 %v3089, 0.7978846
        %v3240 = vmul.f32 %v3090, 0.7978846
        %v3241 = vmul.f32 %v3091, 0.7978846
        %v3242 = vmul.f32 %v3092, 0.7978846
        %v3243 = vmul.f32 %v3093, 0.7978846
        %v3244 = vmul.f32 %v3094, 0.7978846
        %v3245 = vmul.f32 %v3095, 0.7978846
        %v3246 = vmul.f32 %v3096, 0.7978846
        %v3247 = vmul.f32 %v3097, 0.7978846
        %v3248 = vmul.f32 %v3098, 0.7978846
        %v3249 = vmul.f32 %v3099, 0.7978846
        %v3250 = vmul.f32 %v3100, 0.7978846
        %v3251 = vmul.f32 %v3101, 0.7978846
        %v3252 = vmul.f32 %v3102, 0.7978846
        %v3253 = vmul.f32 %v3103, 0.7978846
        %v3254 = vmul.f32 %v3104, 0.7978846
        %v3255 = vmul.f32 %v3105, 0.7978846
        %v3256 = vmul.f32 %v3106, 0.7978846
        %v3257 = vmul.f32 %v3107, 0.7978846
        %v3258 = vmul.f32 %v3108, 0.7978846
        %v3259 = vmul.f32 %v3109, 0.7978846
        %v3260 = vmul.f32 %v3110, 0.7978846
        %v3261 = vmul.f32 %v3111, 0.7978846
        %v3262 = vmul.f32 %v3112, 0.7978846
        %v3263 = vmul.f32 %v3113, 0.7978846
        %v3264 = vmul.f32 %v3114, 0.7978846
        %v3265 = vmul.f32 %v3115, 0.7978846
        %v3266 = vmul.f32 %v3116, 0.7978846
        %v3267 = vmul.f32 %v3117, 0.7978846
        %v3268 = vmul.f32 %v3118, 0.7978846
        %v3269 = vmul.f32 %v3119, 0.7978846
        %v3270 = vmul.f32 %v3120, 0.7978846
        %v3271 = vmul.f32 %v3121, 0.7978846
        %v3272 = vmul.f32 %v3122, 0.7978846
        %v3273 = vmul.f32 %v3123, 0.7978846
        %v3274 = vmul.f32 %v3124, 0.7978846
        %v3275 = vmul.f32 %v3125, 0.7978846
        %v3276 = vmul.f32 %v3126, 0.7978846
        %v3277 = vmul.f32 %v3127, 0.7978846
        %v3278 = vmul.f32 %v3128, 0.7978846
        %v3279 = vmul.f32 %v3129, 0.7978846
        %v3280 = vmul.f32 %v3130, 0.7978846
        %v3281 = vmul.f32 %v3131, 0.7978846
        %v3282 = vmul.f32 %v3132, 0.7978846
        %v3283 = vmul.f32 %v3133, 0.7978846
        %v3284 = vmul.f32 %v3134, 0.7978846
        %v3285 = vmul.f32 %v3135, 0.7978846
        %v3286 = vmul.f32 %v3136, 0.7978846
        %v3287 = vmul.f32 %v3137, 0.7978846
        %v3288 = vmul.f32 %v3138, 0.7978846
        %v3289 = vmul.f32 %v3139, 0.7978846
        %v3290 = vmul.f32 %v3140, 0.7978846
        %v3291 = vmul.f32 %v3141, 0.7978846
        %v3292 = vmul.f32 %v3142, 0.7978846
        %v3293 = vmul.f32 %v3143, 0.7978846
        %v3294 = vmul.f32 %v3144, 0.7978846
        %v3295 = vmul.f32 %v3145, 0.7978846
        %v3296 = vmul.f32 %v3146, 0.7978846
        %v3297 = vmul.f32 %v3147, 0.7978846
        %v3298 = vmul.f32 %v3148, 0.7978846
        %v3299 = vmul.f32 %v3149, 0.7978846
        %v3300 = vmul.f32 %v3150, 0.7978846
        %v3301 = vmul.f32 %v3151, 0.7978846
        %v3302 = vmul.f32 %v3152, 0.7978846
        %v3303 = vmul.f32 %v3153, 0.7978846
        %v3304 = vmul.f32 %v3154, 0.7978846
        %v3305 = vmul.f32 %v3155, 0.7978846
        %v3306 = vmul.f32 %v3156, 0.7978846
        %v3307 = vmul.f32 %v3157, 0.7978846
        %v3308 = vmul.f32 %v3158, 0.7978846
        %v3309 = vmul.f32 %v3159, 0.7978846
        %v3310 = vmul.f32 %v3160, 0.7978846
        %v3311 = vmul.f32 %v3161, 0.7978846
        %v3312 = vmul.f32 %v3162, 0.7978846
        %v3313 = vmul.f32 %v3163, 0.7978846
        %v3314 = vmul.f32 %v3164, 0.7978846
        %v3315 = vmul.f32 %v3165, 0.7978846
        %v3316 = vmul.f32 %v3166, 0.7978846
        %v3317 = vmul.f32 %v3167, 0.7978846
        %v3318 = vmul.f32 %v3168, 0.7978846
        %v3319 = vmul.f32 %v3169, 0.7978846
        %v3320 = vmul.f32 %v3170, 0.7978846
        %v3321 = vmul.f32 %v3171, 0.7978846
        %v3322 = vmul.f32 %v3172, 0.7978846
        %v3323 = vmul.f32 %v3173, 0.7978846
        %v3324 = vmul.f32 %v3174, 0.7978846
        %v3325 = vmul.f32 %v3175, 0.7978846
        %v3326 = vmul.f32 %v3176, 0.7978846
        %v3327 = vmul.f32 %v3177, 0.7978846
        %v3328 = vmul.f32 %v3178, 0.7978846
        %v3329 = vmul.f32 %v3179, 0.7978846
        %v3330 = vmul.f32 %v3180, 0.7978846
        %v3331 = vmul.f32 %v3181, 0.7978846
        %v3332 = vmul.f32 %v3182, 0.7978846
        %v3333 = vmul.f32 %v3183, 0.7978846
        %v3334 = vmul.f32 %v3184, 0.7978846
        %v3335 = vmul.f32 %v3185, 0.7978846
        %v3336 = vmul.f32 %v3186, 0.7978846
        %v3337 = vmul.f32 %v3187, 0.7978846
        %v3338 = vtanh.pop %v3188
        %v3339 = vtanh.pop %v3189
        %v3340 = vtanh.pop %v3190
        %v3341 = vtanh.pop %v3191
        %v3342 = vtanh.pop %v3192
        %v3343 = vtanh.pop %v3193
        %v3344 = vtanh.pop %v3194
        %v3345 = vtanh.pop %v3195
        %v3346 = vtanh.pop %v3196
        %v3347 = vtanh.pop %v3197
        %v3348 = vtanh.pop %v3198
        %v3349 = vtanh.pop %v3199
        %v3350 = vtanh.pop %v3200
        %v3351 = vtanh.pop %v3201
        %v3352 = vtanh.pop %v3202
        %v3353 = vtanh.pop %v3203
        %v3354 = vtanh.pop %v3204
        %v3355 = vtanh.pop %v3205
        %v3356 = vtanh.pop %v3206
        %v3357 = vtanh.pop %v3207
        %v3358 = vtanh.pop %v3208
        %v3359 = vtanh.pop %v3209
        %v3360 = vtanh.pop %v3210
        %v3361 = vtanh.pop %v3211
        %v3362 = vtanh.pop %v3212
        %v3363 = vtanh.pop %v3213
        %v3364 = vtanh.pop %v3214
        %v3365 = vtanh.pop %v3215
        %v3366 = vtanh.pop %v3216
        %v3367 = vtanh.pop %v3217
        %v3368 = vtanh.pop %v3218
        %v3369 = vtanh.pop %v3219
        %v3370 = vtanh.pop %v3220
        %v3371 = vtanh.pop %v3221
        %v3372 = vtanh.pop %v3222
        %v3373 = vtanh.pop %v3223
        %v3374 = vtanh.pop %v3224
        %v3375 = vtanh.pop %v3225
        %v3376 = vtanh.pop %v3226
        %v3377 = vtanh.pop %v3227
        %v3378 = vtanh.pop %v3228
        %v3379 = vtanh.pop %v3229
        %v3380 = vtanh.pop %v3230
        %v3381 = vtanh.pop %v3231
        %v3382 = vtanh.pop %v3232
        %v3383 = vtanh.pop %v3233
        %v3384 = vtanh.pop %v3234
        %v3385 = vtanh.pop %v3235
        %v3386 = vtanh.pop %v3236
        %v3387 = vtanh.pop %v3237
        %v3388 = vtanh.pop %v3238
        %v3389 = vtanh.pop %v3239
        %v3390 = vtanh.pop %v3240
        %v3391 = vtanh.pop %v3241
        %v3392 = vtanh.pop %v3242
        %v3393 = vtanh.pop %v3243
        %v3394 = vtanh.pop %v3244
        %v3395 = vtanh.pop %v3245
        %v3396 = vtanh.pop %v3246
        %v3397 = vtanh.pop %v3247
        %v3398 = vtanh.pop %v3248
        %v3399 = vtanh.pop %v3249
        %v3400 = vtanh.pop %v3250
        %v3401 = vtanh.pop %v3251
        %v3402 = vtanh.pop %v3252
        %v3403 = vtanh.pop %v3253
        %v3404 = vtanh.pop %v3254
        %v3405 = vtanh.pop %v3255
        %v3406 = vtanh.pop %v3256
        %v3407 = vtanh.pop %v3257
        %v3408 = vtanh.pop %v3258
        %v3409 = vtanh.pop %v3259
        %v3410 = vtanh.pop %v3260
        %v3411 = vtanh.pop %v3261
        %v3412 = vtanh.pop %v3262
        %v3413 = vtanh.pop %v3263
        %v3414 = vtanh.pop %v3264
        %v3415 = vtanh.pop %v3265
        %v3416 = vtanh.pop %v3266
        %v3417 = vtanh.pop %v3267
        %v3418 = vtanh.pop %v3268
        %v3419 = vtanh.pop %v3269
        %v3420 = vtanh.pop %v3270
        %v3421 = vtanh.pop %v3271
        %v3422 = vtanh.pop %v3272
        %v3423 = vtanh.pop %v3273
        %v3424 = vtanh.pop %v3274
        %v3425 = vtanh.pop %v3275
        %v3426 = vtanh.pop %v3276
        %v3427 = vtanh.pop %v3277
        %v3428 = vtanh.pop %v3278
        %v3429 = vtanh.pop %v3279
        %v3430 = vtanh.pop %v3280
        %v3431 = vtanh.pop %v3281
        %v3432 = vtanh.pop %v3282
        %v3433 = vtanh.pop %v3283
        %v3434 = vtanh.pop %v3284
        %v3435 = vtanh.pop %v3285
        %v3436 = vtanh.pop %v3286
        %v3437 = vtanh.pop %v3287
        %v3438 = vtanh.pop %v3288
        %v3439 = vtanh.pop %v3289
        %v3440 = vtanh.pop %v3290
        %v3441 = vtanh.pop %v3291
        %v3442 = vtanh.pop %v3292
        %v3443 = vtanh.pop %v3293
        %v3444 = vtanh.pop %v3294
        %v3445 = vtanh.pop %v3295
        %v3446 = vtanh.pop %v3296
        %v3447 = vtanh.pop %v3297
        %v3448 = vtanh.pop %v3298
        %v3449 = vtanh.pop %v3299
        %v3450 = vtanh.pop %v3300
        %v3451 = vtanh.pop %v3301
        %v3452 = vtanh.pop %v3302
        %v3453 = vtanh.pop %v3303
        %v3454 = vtanh.pop %v3304
        %v3455 = vtanh.pop %v3305
        %v3456 = vtanh.pop %v3306
        %v3457 = vtanh.pop %v3307
        %v3458 = vtanh.pop %v3308
        %v3459 = vtanh.pop %v3309
        %v3460 = vtanh.pop %v3310
        %v3461 = vtanh.pop %v3311
        %v3462 = vtanh.pop %v3312
        %v3463 = vtanh.pop %v3313
        %v3464 = vtanh.pop %v3314
        %v3465 = vtanh.pop %v3315
        %v3466 = vtanh.pop %v3316
        %v3467 = vtanh.pop %v3317
        %v3468 = vtanh.pop %v3318
        %v3469 = vtanh.pop %v3319
        %v3470 = vtanh.pop %v3320
        %v3471 = vtanh.pop %v3321
        %v3472 = vtanh.pop %v3322
        %v3473 = vtanh.pop %v3323
        %v3474 = vtanh.pop %v3324
        %v3475 = vtanh.pop %v3325
        %v3476 = vtanh.pop %v3326
        %v3477 = vtanh.pop %v3327
        %v3478 = vtanh.pop %v3328
        %v3479 = vtanh.pop %v3329
        %v3480 = vtanh.pop %v3330
        %v3481 = vtanh.pop %v3331
        %v3482 = vtanh.pop %v3332
        %v3483 = vtanh.pop %v3333
        %v3484 = vtanh.pop %v3334
        %v3485 = vtanh.pop %v3335
        %v3486 = vtanh.pop %v3336
        %v3487 = vtanh.pop %v3337
        %v3488 = vadd.f32 %v3338, 1.0
        %v3489 = vadd.f32 %v3339, 1.0
        %v3490 = vadd.f32 %v3340, 1.0
        %v3491 = vadd.f32 %v3341, 1.0
        %v3492 = vadd.f32 %v3342, 1.0
        %v3493 = vadd.f32 %v3343, 1.0
        %v3494 = vadd.f32 %v3344, 1.0
        %v3495 = vadd.f32 %v3345, 1.0
        %v3496 = vadd.f32 %v3346, 1.0
        %v3497 = vadd.f32 %v3347, 1.0
        %v3498 = vadd.f32 %v3348, 1.0
        %v3499 = vadd.f32 %v3349, 1.0
        %v3500 = vadd.f32 %v3350, 1.0
        %v3501 = vadd.f32 %v3351, 1.0
        %v3502 = vadd.f32 %v3352, 1.0
        %v3503 = vadd.f32 %v3353, 1.0
        %v3504 = vadd.f32 %v3354, 1.0
        %v3505 = vadd.f32 %v3355, 1.0
        %v3506 = vadd.f32 %v3356, 1.0
        %v3507 = vadd.f32 %v3357, 1.0
        %v3508 = vadd.f32 %v3358, 1.0
        %v3509 = vadd.f32 %v3359, 1.0
        %v3510 = vadd.f32 %v3360, 1.0
        %v3511 = vadd.f32 %v3361, 1.0
        %v3512 = vadd.f32 %v3362, 1.0
        %v3513 = vadd.f32 %v3363, 1.0
        %v3514 = vadd.f32 %v3364, 1.0
        %v3515 = vadd.f32 %v3365, 1.0
        %v3516 = vadd.f32 %v3366, 1.0
        %v3517 = vadd.f32 %v3367, 1.0
        %v3518 = vadd.f32 %v3368, 1.0
        %v3519 = vadd.f32 %v3369, 1.0
        %v3520 = vadd.f32 %v3370, 1.0
        %v3521 = vadd.f32 %v3371, 1.0
        %v3522 = vadd.f32 %v3372, 1.0
        %v3523 = vadd.f32 %v3373, 1.0
        %v3524 = vadd.f32 %v3374, 1.0
        %v3525 = vadd.f32 %v3375, 1.0
        %v3526 = vadd.f32 %v3376, 1.0
        %v3527 = vadd.f32 %v3377, 1.0
        %v3528 = vadd.f32 %v3378, 1.0
        %v3529 = vadd.f32 %v3379, 1.0
        %v3530 = vadd.f32 %v3380, 1.0
        %v3531 = vadd.f32 %v3381, 1.0
        %v3532 = vadd.f32 %v3382, 1.0
        %v3533 = vadd.f32 %v3383, 1.0
        %v3534 = vadd.f32 %v3384, 1.0
        %v3535 = vadd.f32 %v3385, 1.0
        %v3536 = vadd.f32 %v3386, 1.0
        %v3537 = vadd.f32 %v3387, 1.0
        %v3538 = vadd.f32 %v3388, 1.0
        %v3539 = vadd.f32 %v3389, 1.0
        %v3540 = vadd.f32 %v3390, 1.0
        %v3541 = vadd.f32 %v3391, 1.0
        %v3542 = vadd.f32 %v3392, 1.0
        %v3543 = vadd.f32 %v3393, 1.0
        %v3544 = vadd.f32 %v3394, 1.0
        %v3545 = vadd.f32 %v3395, 1.0
        %v3546 = vadd.f32 %v3396, 1.0
        %v3547 = vadd.f32 %v3397, 1.0
        %v3548 = vadd.f32 %v3398, 1.0
        %v3549 = vadd.f32 %v3399, 1.0
        %v3550 = vadd.f32 %v3400, 1.0
        %v3551 = vadd.f32 %v3401, 1.0
        %v3552 = vadd.f32 %v3402, 1.0
        %v3553 = vadd.f32 %v3403, 1.0
        %v3554 = vadd.f32 %v3404, 1.0
        %v3555 = vadd.f32 %v3405, 1.0
        %v3556 = vadd.f32 %v3406, 1.0
        %v3557 = vadd.f32 %v3407, 1.0
        %v3558 = vadd.f32 %v3408, 1.0
        %v3559 = vadd.f32 %v3409, 1.0
        %v3560 = vadd.f32 %v3410, 1.0
        %v3561 = vadd.f32 %v3411, 1.0
        %v3562 = vadd.f32 %v3412, 1.0
        %v3563 = vadd.f32 %v3413, 1.0
        %v3564 = vadd.f32 %v3414, 1.0
        %v3565 = vadd.f32 %v3415, 1.0
        %v3566 = vadd.f32 %v3416, 1.0
        %v3567 = vadd.f32 %v3417, 1.0
        %v3568 = vadd.f32 %v3418, 1.0
        %v3569 = vadd.f32 %v3419, 1.0
        %v3570 = vadd.f32 %v3420, 1.0
        %v3571 = vadd.f32 %v3421, 1.0
        %v3572 = vadd.f32 %v3422, 1.0
        %v3573 = vadd.f32 %v3423, 1.0
        %v3574 = vadd.f32 %v3424, 1.0
        %v3575 = vadd.f32 %v3425, 1.0
        %v3576 = vadd.f32 %v3426, 1.0
        %v3577 = vadd.f32 %v3427, 1.0
        %v3578 = vadd.f32 %v3428, 1.0
        %v3579 = vadd.f32 %v3429, 1.0
        %v3580 = vadd.f32 %v3430, 1.0
        %v3581 = vadd.f32 %v3431, 1.0
        %v3582 = vadd.f32 %v3432, 1.0
        %v3583 = vadd.f32 %v3433, 1.0
        %v3584 = vadd.f32 %v3434, 1.0
        %v3585 = vadd.f32 %v3435, 1.0
        %v3586 = vadd.f32 %v3436, 1.0
        %v3587 = vadd.f32 %v3437, 1.0
        %v3588 = vadd.f32 %v3438, 1.0
        %v3589 = vadd.f32 %v3439, 1.0
        %v3590 = vadd.f32 %v3440, 1.0
        %v3591 = vadd.f32 %v3441, 1.0
        %v3592 = vadd.f32 %v3442, 1.0
        %v3593 = vadd.f32 %v3443, 1.0
        %v3594 = vadd.f32 %v3444, 1.0
        %v3595 = vadd.f32 %v3445, 1.0
        %v3596 = vadd.f32 %v3446, 1.0
        %v3597 = vadd.f32 %v3447, 1.0
        %v3598 = vadd.f32 %v3448, 1.0
        %v3599 = vadd.f32 %v3449, 1.0
        %v3600 = vadd.f32 %v3450, 1.0
        %v3601 = vadd.f32 %v3451, 1.0
        %v3602 = vadd.f32 %v3452, 1.0
        %v3603 = vadd.f32 %v3453, 1.0
        %v3604 = vadd.f32 %v3454, 1.0
        %v3605 = vadd.f32 %v3455, 1.0
        %v3606 = vadd.f32 %v3456, 1.0
        %v3607 = vadd.f32 %v3457, 1.0
        %v3608 = vadd.f32 %v3458, 1.0
        %v3609 = vadd.f32 %v3459, 1.0
        %v3610 = vadd.f32 %v3460, 1.0
        %v3611 = vadd.f32 %v3461, 1.0
        %v3612 = vadd.f32 %v3462, 1.0
        %v3613 = vadd.f32 %v3463, 1.0
        %v3614 = vadd.f32 %v3464, 1.0
        %v3615 = vadd.f32 %v3465, 1.0
        %v3616 = vadd.f32 %v3466, 1.0
        %v3617 = vadd.f32 %v3467, 1.0
        %v3618 = vadd.f32 %v3468, 1.0
        %v3619 = vadd.f32 %v3469, 1.0
        %v3620 = vadd.f32 %v3470, 1.0
        %v3621 = vadd.f32 %v3471, 1.0
        %v3622 = vadd.f32 %v3472, 1.0
        %v3623 = vadd.f32 %v3473, 1.0
        %v3624 = vadd.f32 %v3474, 1.0
        %v3625 = vadd.f32 %v3475, 1.0
        %v3626 = vadd.f32 %v3476, 1.0
        %v3627 = vadd.f32 %v3477, 1.0
        %v3628 = vadd.f32 %v3478, 1.0
        %v3629 = vadd.f32 %v3479, 1.0
        %v3630 = vadd.f32 %v3480, 1.0
        %v3631 = vadd.f32 %v3481, 1.0
        %v3632 = vadd.f32 %v3482, 1.0
        %v3633 = vadd.f32 %v3483, 1.0
        %v3634 = vadd.f32 %v3484, 1.0
        %v3635 = vadd.f32 %v3485, 1.0
        %v3636 = vadd.f32 %v3486, 1.0
        %v3637 = vadd.f32 %v3487, 1.0
        %v3638 = vmul.f32 %v2438, %v3488
        %v3639 = vmul.f32 %v2439, %v3489
        %v3640 = vmul.f32 %v2440, %v3490
        %v3641 = vmul.f32 %v2441, %v3491
        %v3642 = vmul.f32 %v2442, %v3492
        %v3643 = vmul.f32 %v2443, %v3493
        %v3644 = vmul.f32 %v2444, %v3494
        %v3645 = vmul.f32 %v2445, %v3495
        %v3646 = vmul.f32 %v2446, %v3496
        %v3647 = vmul.f32 %v2447, %v3497
        %v3648 = vmul.f32 %v2448, %v3498
        %v3649 = vmul.f32 %v2449, %v3499
        %v3650 = vmul.f32 %v2450, %v3500
        %v3651 = vmul.f32 %v2451, %v3501
        %v3652 = vmul.f32 %v2452, %v3502
        %v3653 = vmul.f32 %v2453, %v3503
        %v3654 = vmul.f32 %v2454, %v3504
        %v3655 = vmul.f32 %v2455, %v3505
        %v3656 = vmul.f32 %v2456, %v3506
        %v3657 = vmul.f32 %v2457, %v3507
        %v3658 = vmul.f32 %v2458, %v3508
        %v3659 = vmul.f32 %v2459, %v3509
        %v3660 = vmul.f32 %v2460, %v3510
        %v3661 = vmul.f32 %v2461, %v3511
        %v3662 = vmul.f32 %v2462, %v3512
        %v3663 = vmul.f32 %v2463, %v3513
        %v3664 = vmul.f32 %v2464, %v3514
        %v3665 = vmul.f32 %v2465, %v3515
        %v3666 = vmul.f32 %v2466, %v3516
        %v3667 = vmul.f32 %v2467, %v3517
        %v3668 = vmul.f32 %v2468, %v3518
        %v3669 = vmul.f32 %v2469, %v3519
        %v3670 = vmul.f32 %v2470, %v3520
        %v3671 = vmul.f32 %v2471, %v3521
        %v3672 = vmul.f32 %v2472, %v3522
        %v3673 = vmul.f32 %v2473, %v3523
        %v3674 = vmul.f32 %v2474, %v3524
        %v3675 = vmul.f32 %v2475, %v3525
        %v3676 = vmul.f32 %v2476, %v3526
        %v3677 = vmul.f32 %v2477, %v3527
        %v3678 = vmul.f32 %v2478, %v3528
        %v3679 = vmul.f32 %v2479, %v3529
        %v3680 = vmul.f32 %v2480, %v3530
        %v3681 = vmul.f32 %v2481, %v3531
        %v3682 = vmul.f32 %v2482, %v3532
        %v3683 = vmul.f32 %v2483, %v3533
        %v3684 = vmul.f32 %v2484, %v3534
        %v3685 = vmul.f32 %v2485, %v3535
        %v3686 = vmul.f32 %v2486, %v3536
        %v3687 = vmul.f32 %v2487, %v3537
        %v3688 = vmul.f32 %v2488, %v3538
        %v3689 = vmul.f32 %v2489, %v3539
        %v3690 = vmul.f32 %v2490, %v3540
        %v3691 = vmul.f32 %v2491, %v3541
        %v3692 = vmul.f32 %v2492, %v3542
        %v3693 = vmul.f32 %v2493, %v3543
        %v3694 = vmul.f32 %v2494, %v3544
        %v3695 = vmul.f32 %v2495, %v3545
        %v3696 = vmul.f32 %v2496, %v3546
        %v3697 = vmul.f32 %v2497, %v3547
        %v3698 = vmul.f32 %v2498, %v3548
        %v3699 = vmul.f32 %v2499, %v3549
        %v3700 = vmul.f32 %v2500, %v3550
        %v3701 = vmul.f32 %v2501, %v3551
        %v3702 = vmul.f32 %v2502, %v3552
        %v3703 = vmul.f32 %v2503, %v3553
        %v3704 = vmul.f32 %v2504, %v3554
        %v3705 = vmul.f32 %v2505, %v3555
        %v3706 = vmul.f32 %v2506, %v3556
        %v3707 = vmul.f32 %v2507, %v3557
        %v3708 = vmul.f32 %v2508, %v3558
        %v3709 = vmul.f32 %v2509, %v3559
        %v3710 = vmul.f32 %v2510, %v3560
        %v3711 = vmul.f32 %v2511, %v3561
        %v3712 = vmul.f32 %v2512, %v3562
        %v3713 = vmul.f32 %v2513, %v3563
        %v3714 = vmul.f32 %v2514, %v3564
        %v3715 = vmul.f32 %v2515, %v3565
        %v3716 = vmul.f32 %v2516, %v3566
        %v3717 = vmul.f32 %v2517, %v3567
        %v3718 = vmul.f32 %v2518, %v3568
        %v3719 = vmul.f32 %v2519, %v3569
        %v3720 = vmul.f32 %v2520, %v3570
        %v3721 = vmul.f32 %v2521, %v3571
        %v3722 = vmul.f32 %v2522, %v3572
        %v3723 = vmul.f32 %v2523, %v3573
        %v3724 = vmul.f32 %v2524, %v3574
        %v3725 = vmul.f32 %v2525, %v3575
        %v3726 = vmul.f32 %v2526, %v3576
        %v3727 = vmul.f32 %v2527, %v3577
        %v3728 = vmul.f32 %v2528, %v3578
        %v3729 = vmul.f32 %v2529, %v3579
        %v3730 = vmul.f32 %v2530, %v3580
        %v3731 = vmul.f32 %v2531, %v3581
        %v3732 = vmul.f32 %v2532, %v3582
        %v3733 = vmul.f32 %v2533, %v3583
        %v3734 = vmul.f32 %v2534, %v3584
        %v3735 = vmul.f32 %v2535, %v3585
        %v3736 = vmul.f32 %v2536, %v3586
        %v3737 = vmul.f32 %v2537, %v3587
        %v3738 = vmul.f32 %v2538, %v3588
        %v3739 = vmul.f32 %v2539, %v3589
        %v3740 = vmul.f32 %v2540, %v3590
        %v3741 = vmul.f32 %v2541, %v3591
        %v3742 = vmul.f32 %v2542, %v3592
        %v3743 = vmul.f32 %v2543, %v3593
        %v3744 = vmul.f32 %v2544, %v3594
        %v3745 = vmul.f32 %v2545, %v3595
        %v3746 = vmul.f32 %v2546, %v3596
        %v3747 = vmul.f32 %v2547, %v3597
        %v3748 = vmul.f32 %v2548, %v3598
        %v3749 = vmul.f32 %v2549, %v3599
        %v3750 = vmul.f32 %v2550, %v3600
        %v3751 = vmul.f32 %v2551, %v3601
        %v3752 = vmul.f32 %v2552, %v3602
        %v3753 = vmul.f32 %v2553, %v3603
        %v3754 = vmul.f32 %v2554, %v3604
        %v3755 = vmul.f32 %v2555, %v3605
        %v3756 = vmul.f32 %v2556, %v3606
        %v3757 = vmul.f32 %v2557, %v3607
        %v3758 = vmul.f32 %v2558, %v3608
        %v3759 = vmul.f32 %v2559, %v3609
        %v3760 = vmul.f32 %v2560, %v3610
        %v3761 = vmul.f32 %v2561, %v3611
        %v3762 = vmul.f32 %v2562, %v3612
        %v3763 = vmul.f32 %v2563, %v3613
        %v3764 = vmul.f32 %v2564, %v3614
        %v3765 = vmul.f32 %v2565, %v3615
        %v3766 = vmul.f32 %v2566, %v3616
        %v3767 = vmul.f32 %v2567, %v3617
        %v3768 = vmul.f32 %v2568, %v3618
        %v3769 = vmul.f32 %v2569, %v3619
        %v3770 = vmul.f32 %v2570, %v3620
        %v3771 = vmul.f32 %v2571, %v3621
        %v3772 = vmul.f32 %v2572, %v3622
        %v3773 = vmul.f32 %v2573, %v3623
        %v3774 = vmul.f32 %v2574, %v3624
        %v3775 = vmul.f32 %v2575, %v3625
        %v3776 = vmul.f32 %v2576, %v3626
        %v3777 = vmul.f32 %v2577, %v3627
        %v3778 = vmul.f32 %v2578, %v3628
        %v3779 = vmul.f32 %v2579, %v3629
        %v3780 = vmul.f32 %v2580, %v3630
        %v3781 = vmul.f32 %v2581, %v3631
        %v3782 = vmul.f32 %v2582, %v3632
        %v3783 = vmul.f32 %v2583, %v3633
        %v3784 = vmul.f32 %v2584, %v3634
        %v3785 = vmul.f32 %v2585, %v3635
        %v3786 = vmul.f32 %v2586, %v3636
        %v3787 = vmul.f32 %v2587, %v3637
        %v3788 = vld [vmem:[#allocation11] sm:$0xff]
        %v3789 = vld [vmem:[#allocation11 + $0x8] sm:$0xff]
        %v3790 = vld [vmem:[#allocation11 + $0x10] sm:$0xff]
        %v3791 = vld [vmem:[#allocation11 + $0x18] sm:$0xff]
        %v3792 = vld [vmem:[#allocation11 + $0x20] sm:$0xff]
        %v3793 = vld [vmem:[#allocation11 + $0x28] sm:$0xff]
        %v3794 = vld [vmem:[#allocation11 + $0x30] sm:$0xff]
        %v3795 = vld [vmem:[#allocation11 + $0x38] sm:$0xff]
        %v3796 = vld [vmem:[#allocation11 + $0x40] sm:$0xff]
        %v3797 = vld [vmem:[#allocation11 + $0x48] sm:$0xff]
        %v3798 = vld [vmem:[#allocation11 + $0x50] sm:$0xff]
        %v3799 = vld [vmem:[#allocation11 + $0x58] sm:$0xff]
        %v3800 = vld [vmem:[#allocation11 + $0x60] sm:$0xff]
        %v3801 = vld [vmem:[#allocation11 + $0x68] sm:$0xff]
        %v3802 = vld [vmem:[#allocation11 + $0x70] sm:$0xff]
        %v3803 = vld [vmem:[#allocation11 + $0x78] sm:$0xff]
        %v3804 = vld [vmem:[#allocation11 + $0x80] sm:$0xff]
        %v3805 = vld [vmem:[#allocation11 + $0x88] sm:$0xff]
        %v3806 = vld [vmem:[#allocation11 + $0x90] sm:$0xff]
        %v3807 = vld [vmem:[#allocation11 + $0x98] sm:$0xff]
        %v3808 = vld [vmem:[#allocation11 + $0xa0] sm:$0xff]
        %v3809 = vld [vmem:[#allocation11 + $0xa8] sm:$0xff]
        %v3810 = vld [vmem:[#allocation11 + $0xb0] sm:$0xff]
        %v3811 = vld [vmem:[#allocation11 + $0xb8] sm:$0xff]
        %v3812 = vld [vmem:[#allocation11 + $0xc0] sm:$0xff]
        %v3813 = vld [vmem:[#allocation11 + $0xc8] sm:$0xff]
        %v3814 = vld [vmem:[#allocation11 + $0xd0] sm:$0xff]
        %v3815 = vld [vmem:[#allocation11 + $0xd8] sm:$0xff]
        %v3816 = vld [vmem:[#allocation11 + $0xe0] sm:$0xff]
        %v3817 = vld [vmem:[#allocation11 + $0xe8] sm:$0xff]
        %v3818 = vld [vmem:[#allocation11 + $0xf0] sm:$0xff]
        %v3819 = vld [vmem:[#allocation11 + $0xf8] sm:$0xff]
        %v3820 = vld [vmem:[#allocation11 + $0x100] sm:$0xff]
        %v3821 = vld [vmem:[#allocation11 + $0x108] sm:$0xff]
        %v3822 = vld [vmem:[#allocation11 + $0x110] sm:$0xff]
        %v3823 = vld [vmem:[#allocation11 + $0x118] sm:$0xff]
        %v3824 = vld [vmem:[#allocation11 + $0x120] sm:$0xff]
        %v3825 = vld [vmem:[#allocation11 + $0x128] sm:$0xff]
        %v3826 = vld [vmem:[#allocation11 + $0x130] sm:$0xff]
        %v3827 = vld [vmem:[#allocation11 + $0x138] sm:$0xff]
        %v3828 = vld [vmem:[#allocation11 + $0x140] sm:$0xff]
        %v3829 = vld [vmem:[#allocation11 + $0x148] sm:$0xff]
        %v3830 = vld [vmem:[#allocation11 + $0x150] sm:$0xff]
        %v3831 = vld [vmem:[#allocation11 + $0x158] sm:$0xff]
        %v3832 = vld [vmem:[#allocation11 + $0x160] sm:$0xff]
        %v3833 = vld [vmem:[#allocation11 + $0x168] sm:$0xff]
        %v3834 = vld [vmem:[#allocation11 + $0x170] sm:$0xff]
        %v3835 = vld [vmem:[#allocation11 + $0x178] sm:$0xff]
        %v3836 = vld [vmem:[#allocation11 + $0x180] sm:$0xff]
        %v3837 = vld [vmem:[#allocation11 + $0x188] sm:$0xff]
        %v3838 = vld [vmem:[#allocation11 + $0x190] sm:$0xff]
        %v3839 = vld [vmem:[#allocation11 + $0x198] sm:$0xff]
        %v3840 = vld [vmem:[#allocation11 + $0x1a0] sm:$0xff]
        %v3841 = vld [vmem:[#allocation11 + $0x1a8] sm:$0xff]
        %v3842 = vld [vmem:[#allocation11 + $0x1b0] sm:$0xff]
        %v3843 = vld [vmem:[#allocation11 + $0x1b8] sm:$0xff]
        %v3844 = vld [vmem:[#allocation11 + $0x1c0] sm:$0xff]
        %v3845 = vld [vmem:[#allocation11 + $0x1c8] sm:$0xff]
        %v3846 = vld [vmem:[#allocation11 + $0x1d0] sm:$0xff]
        %v3847 = vld [vmem:[#allocation11 + $0x1d8] sm:$0xff]
        %v3848 = vld [vmem:[#allocation11 + $0x1e0] sm:$0xff]
        %v3849 = vld [vmem:[#allocation11 + $0x1e8] sm:$0xff]
        %v3850 = vld [vmem:[#allocation11 + $0x1f0] sm:$0xff]
        %v3851 = vld [vmem:[#allocation11 + $0x1f8] sm:$0xff]
        %v3852 = vld [vmem:[#allocation11 + $0x200] sm:$0xff]
        %v3853 = vld [vmem:[#allocation11 + $0x208] sm:$0xff]
        %v3854 = vld [vmem:[#allocation11 + $0x210] sm:$0xff]
        %v3855 = vld [vmem:[#allocation11 + $0x218] sm:$0xff]
        %v3856 = vld [vmem:[#allocation11 + $0x220] sm:$0xff]
        %v3857 = vld [vmem:[#allocation11 + $0x228] sm:$0xff]
        %v3858 = vld [vmem:[#allocation11 + $0x230] sm:$0xff]
        %v3859 = vld [vmem:[#allocation11 + $0x238] sm:$0xff]
        %v3860 = vld [vmem:[#allocation11 + $0x240] sm:$0xf]
        %v3861 = vld [vmem:[#allocation11 + $0x248] sm:$0xf]
        %v3862 = vld [vmem:[#allocation11 + $0x250] sm:$0xf]
        %v3863 = vpack.c.bf16 %v3644, %v3638
        %v3864 = vpack.c.bf16 %v3645, %v3639
        %v3865 = vpack.c.bf16 %v3646, %v3640
        %v3866 = vpack.c.bf16 %v3647, %v3641
        %v3867 = vpack.c.bf16 %v3648, %v3642
        %v3868 = vpack.c.bf16 %v3649, %v3643
        %v3869 = vpack.c.bf16 %v3656, %v3650
        %v3870 = vpack.c.bf16 %v3657, %v3651
        %v3871 = vpack.c.bf16 %v3658, %v3652
        %v3872 = vpack.c.bf16 %v3659, %v3653
        %v3873 = vpack.c.bf16 %v3660, %v3654
        %v3874 = vpack.c.bf16 %v3661, %v3655
        %v3875 = vpack.c.bf16 %v3668, %v3662
        %v3876 = vpack.c.bf16 %v3669, %v3663
        %v3877 = vpack.c.bf16 %v3670, %v3664
        %v3878 = vpack.c.bf16 %v3671, %v3665
        %v3879 = vpack.c.bf16 %v3672, %v3666
        %v3880 = vpack.c.bf16 %v3673, %v3667
        %v3881 = vpack.c.bf16 %v3680, %v3674
        %v3882 = vpack.c.bf16 %v3681, %v3675
        %v3883 = vpack.c.bf16 %v3682, %v3676
        %v3884 = vpack.c.bf16 %v3683, %v3677
        %v3885 = vpack.c.bf16 %v3684, %v3678
        %v3886 = vpack.c.bf16 %v3685, %v3679
        %v3887 = vpack.c.bf16 %v3692, %v3686
        %v3888 = vpack.c.bf16 %v3693, %v3687
        %v3889 = vpack.c.bf16 %v3694, %v3688
        %v3890 = vpack.c.bf16 %v3695, %v3689
        %v3891 = vpack.c.bf16 %v3696, %v3690
        %v3892 = vpack.c.bf16 %v3697, %v3691
        %v3893 = vpack.c.bf16 %v3704, %v3698
        %v3894 = vpack.c.bf16 %v3705, %v3699
        %v3895 = vpack.c.bf16 %v3706, %v3700
        %v3896 = vpack.c.bf16 %v3707, %v3701
        %v3897 = vpack.c.bf16 %v3708, %v3702
        %v3898 = vpack.c.bf16 %v3709, %v3703
        %v3899 = vpack.c.bf16 %v3716, %v3710
        %v3900 = vpack.c.bf16 %v3717, %v3711
        %v3901 = vpack.c.bf16 %v3718, %v3712
        %v3902 = vpack.c.bf16 %v3719, %v3713
        %v3903 = vpack.c.bf16 %v3720, %v3714
        %v3904 = vpack.c.bf16 %v3721, %v3715
        %v3905 = vpack.c.bf16 %v3728, %v3722
        %v3906 = vpack.c.bf16 %v3729, %v3723
        %v3907 = vpack.c.bf16 %v3730, %v3724
        %v3908 = vpack.c.bf16 %v3731, %v3725
        %v3909 = vpack.c.bf16 %v3732, %v3726
        %v3910 = vpack.c.bf16 %v3733, %v3727
        %v3911 = vpack.c.bf16 %v3740, %v3734
        %v3912 = vpack.c.bf16 %v3741, %v3735
        %v3913 = vpack.c.bf16 %v3742, %v3736
        %v3914 = vpack.c.bf16 %v3743, %v3737
        %v3915 = vpack.c.bf16 %v3744, %v3738
        %v3916 = vpack.c.bf16 %v3745, %v3739
        %v3917 = vpack.c.bf16 %v3752, %v3746
        %v3918 = vpack.c.bf16 %v3753, %v3747
        %v3919 = vpack.c.bf16 %v3754, %v3748
        %v3920 = vpack.c.bf16 %v3755, %v3749
        %v3921 = vpack.c.bf16 %v3756, %v3750
        %v3922 = vpack.c.bf16 %v3757, %v3751
        %v3923 = vpack.c.bf16 %v3764, %v3758
        %v3924 = vpack.c.bf16 %v3765, %v3759
        %v3925 = vpack.c.bf16 %v3766, %v3760
        %v3926 = vpack.c.bf16 %v3767, %v3761
        %v3927 = vpack.c.bf16 %v3768, %v3762
        %v3928 = vpack.c.bf16 %v3769, %v3763
        %v3929 = vpack.c.bf16 %v3776, %v3770
        %v3930 = vpack.c.bf16 %v3777, %v3771
        %v3931 = vpack.c.bf16 %v3778, %v3772
        %v3932 = vpack.c.bf16 %v3779, %v3773
        %v3933 = vpack.c.bf16 %v3780, %v3774
        %v3934 = vpack.c.bf16 %v3781, %v3775
        %v3935 = vpack.c.bf16 %v3782, %v3782
        %v3936 = vpack.c.bf16 %v3783, %v3783
        %v3937 = vpack.c.bf16 %v3784, %v3784
        %v3938 = vpack.c.bf16 %v3785, %v3785
        %v3939 = vpack.c.bf16 %v3786, %v3786
        %v3940 = vpack.c.bf16 %v3787, %v3787
        %v3941 = vld [vmem:[%s324] sm:$0xff]
        %v3942 = vld [vmem:[%s324 + $0x8] sm:$0xf]
        %v3943 = vld [vmem:[%s324 + $0xc] sm:$0xff]
        %v3944 = vld [vmem:[%s324 + $0x14] sm:$0xf]
        %v3945 = vld [vmem:[%s324 + $0x18] sm:$0xff]
        %v3946 = vld [vmem:[%s324 + $0x20] sm:$0xf]
        %v3947 = vld [vmem:[%s324 + $0x24] sm:$0xff]
        %v3948 = vld [vmem:[%s324 + $0x2c] sm:$0xf]
        %v3949 = vld [vmem:[%s324 + $0x30] sm:$0xff]
        %v3950 = vld [vmem:[%s324 + $0x38] sm:$0xf]
        %v3951 = vld [vmem:[%s324 + $0x3c] sm:$0xff]
        %v3952 = vld [vmem:[%s324 + $0x44] sm:$0xf]
        %v3953 = vld [vmem:[%s324 + $0x48] sm:$0xff]
        %v3954 = vld [vmem:[%s324 + $0x50] sm:$0xf]
        %v3955 = vld [vmem:[%s324 + $0x54] sm:$0xff]
        %v3956 = vld [vmem:[%s324 + $0x5c] sm:$0xf]
        %v3957 = vld [vmem:[%s324 + $0x60] sm:$0xff]
        %v3958 = vld [vmem:[%s324 + $0x68] sm:$0xf]
        %v3959 = vld [vmem:[%s324 + $0x6c] sm:$0xff]
        %v3960 = vld [vmem:[%s324 + $0x74] sm:$0xf]
        %v3961 = vld [vmem:[%s324 + $0x78] sm:$0xff]
        %v3962 = vld [vmem:[%s324 + $0x80] sm:$0xf]
        %v3963 = vld [vmem:[%s324 + $0x84] sm:$0xff]
        %v3964 = vld [vmem:[%s324 + $0x8c] sm:$0xf]
        %v3965 = vld [vmem:[%s324 + $0x90] sm:$0xff]
        %v3966 = vld [vmem:[%s324 + $0x98] sm:$0xf]
        %v3967 = vld [vmem:[%s324 + $0x9c] sm:$0xff]
        %v3968 = vld [vmem:[%s324 + $0xa4] sm:$0xf]
        %v3969 = vld [vmem:[%s324 + $0xa8] sm:$0xff]
        %v3970 = vld [vmem:[%s324 + $0xb0] sm:$0xf]
        %v3971 = vld [vmem:[%s324 + $0xb4] sm:$0xff]
        %v3972 = vld [vmem:[%s324 + $0xbc] sm:$0xf]
        %v3973 = vld [vmem:[%s324 + $0xc0] sm:$0xff]
        %v3974 = vld [vmem:[%s324 + $0xc8] sm:$0xf]
        %v3975 = vld [vmem:[%s324 + $0xcc] sm:$0xff]
        %v3976 = vld [vmem:[%s324 + $0xd4] sm:$0xf]
        %v3977 = vld [vmem:[%s324 + $0xd8] sm:$0xff]
        %v3978 = vld [vmem:[%s324 + $0xe0] sm:$0xf]
        %v3979 = vld [vmem:[%s324 + $0xe4] sm:$0xff]
        %v3980 = vld [vmem:[%s324 + $0xec] sm:$0xf]
        %v3981 = vld [vmem:[%s324 + $0xf0] sm:$0xff]
        %v3982 = vld [vmem:[%s324 + $0xf8] sm:$0xf]
        %v3983 = vld [vmem:[%s324 + $0xfc] sm:$0xff]
        %v3984 = vld [vmem:[%s324 + $0x104] sm:$0xf]
        %v3985 = vld [vmem:[%s324 + $0x108] sm:$0xff]
        %v3986 = vld [vmem:[%s324 + $0x110] sm:$0xf]
        %v3987 = vld [vmem:[%s324 + $0x114] sm:$0xff]
        %v3988 = vld [vmem:[%s324 + $0x11c] sm:$0xf]
        %v3989 = vld [vmem:[%s324 + $0x120] sm:$0xff]
        %v3990 = vld [vmem:[%s324 + $0x128] sm:$0xf]
        %v3991 = vld [vmem:[%s324 + $0x12c] sm:$0xff]
        %v3992 = vld [vmem:[%s324 + $0x134] sm:$0xf]
        %v3993 = vld [vmem:[%s324 + $0x138] sm:$0xff]
        %v3994 = vld [vmem:[%s324 + $0x140] sm:$0xf]
        %v3995 = vld [vmem:[%s324 + $0x144] sm:$0xff]
        %v3996 = vld [vmem:[%s324 + $0x14c] sm:$0xf]
        %v3997 = vld [vmem:[%s324 + $0x150] sm:$0xff]
        %v3998 = vld [vmem:[%s324 + $0x158] sm:$0xf]
        %v3999 = vld [vmem:[%s324 + $0x15c] sm:$0xff]
        %v4000 = vld [vmem:[%s324 + $0x164] sm:$0xf]
        %v4001 = vld [vmem:[%s324 + $0x168] sm:$0xff]
        %v4002 = vld [vmem:[%s324 + $0x170] sm:$0xf]
        %v4003 = vld [vmem:[%s324 + $0x174] sm:$0xff]
        %v4004 = vld [vmem:[%s324 + $0x17c] sm:$0xf]
        %v4005 = vld [vmem:[%s324 + $0x180] sm:$0xff]
        %v4006 = vld [vmem:[%s324 + $0x188] sm:$0xf]
        %v4007 = vld [vmem:[%s324 + $0x18c] sm:$0xff]
        %v4008 = vld [vmem:[%s324 + $0x194] sm:$0xf]
        %v4009 = vld [vmem:[%s324 + $0x198] sm:$0xff]
        %v4010 = vld [vmem:[%s324 + $0x1a0] sm:$0xf]
        %v4011 = vld [vmem:[%s324 + $0x1a4] sm:$0xff]
        %v4012 = vld [vmem:[%s324 + $0x1ac] sm:$0xf]
        %v4013 = vld [vmem:[%s324 + $0x1b0] sm:$0xff]
        %v4014 = vld [vmem:[%s324 + $0x1b8] sm:$0xf]
        %v4015 = vld [vmem:[%s324 + $0x1bc] sm:$0xff]
        %v4016 = vld [vmem:[%s324 + $0x1c4] sm:$0xf]
        %v4017 = vld [vmem:[%s324 + $0x1c8] sm:$0xff]
        %v4018 = vld [vmem:[%s324 + $0x1d0] sm:$0xf]
        %v4019 = vld [vmem:[%s324 + $0x1d4] sm:$0xff]
        %v4020 = vld [vmem:[%s324 + $0x1dc] sm:$0xf]
        %v4021 = vld [vmem:[%s324 + $0x1e0] sm:$0xff]
        %v4022 = vld [vmem:[%s324 + $0x1e8] sm:$0xf]
        %v4023 = vld [vmem:[%s324 + $0x1ec] sm:$0xff]
        %v4024 = vld [vmem:[%s324 + $0x1f4] sm:$0xf]
        %v4025 = vld [vmem:[%s324 + $0x1f8] sm:$0xff]
        %v4026 = vld [vmem:[%s324 + $0x200] sm:$0xf]
        %v4027 = vld [vmem:[%s324 + $0x204] sm:$0xff]
        %v4028 = vld [vmem:[%s324 + $0x20c] sm:$0xf]
        %v4029 = vld [vmem:[%s324 + $0x210] sm:$0xff]
        %v4030 = vld [vmem:[%s324 + $0x218] sm:$0xf]
        %v4031 = vld [vmem:[%s324 + $0x21c] sm:$0xff]
        %v4032 = vld [vmem:[%s324 + $0x224] sm:$0xf]
        %v4033 = vld [vmem:[%s324 + $0x228] sm:$0xff]
        %v4034 = vld [vmem:[%s324 + $0x230] sm:$0xf]
        %v4035 = vld [vmem:[%s324 + $0x234] sm:$0xff]
        %v4036 = vld [vmem:[%s324 + $0x23c] sm:$0xf]
        %v4037 = vld [vmem:[%s324 + $0x240] sm:$0xff]
        %v4038 = vld [vmem:[%s324 + $0x248] sm:$0xf]
        %v4039 = vld [vmem:[%s324 + $0x24c] sm:$0xff]
        %v4040 = vld [vmem:[%s324 + $0x254] sm:$0xf]
        %v4041 = vld [vmem:[%s324 + $0x258] sm:$0xff]
        %v4042 = vld [vmem:[%s324 + $0x260] sm:$0xf]
        %v4043 = vld [vmem:[%s324 + $0x264] sm:$0xff]
        %v4044 = vld [vmem:[%s324 + $0x26c] sm:$0xf]
        %v4045 = vld [vmem:[%s324 + $0x270] sm:$0xff]
        %v4046 = vld [vmem:[%s324 + $0x278] sm:$0xf]
        %v4047 = vld [vmem:[%s324 + $0x27c] sm:$0xff]
        %v4048 = vld [vmem:[%s324 + $0x284] sm:$0xf]
        %v4049 = vld [vmem:[%s324 + $0x288] sm:$0xff]
        %v4050 = vld [vmem:[%s324 + $0x290] sm:$0xf]
        %v4051 = vld [vmem:[%s324 + $0x294] sm:$0xff]
        %v4052 = vld [vmem:[%s324 + $0x29c] sm:$0xf]
        %v4053 = vld [vmem:[%s324 + $0x2a0] sm:$0xff]
        %v4054 = vld [vmem:[%s324 + $0x2a8] sm:$0xf]
        %v4055 = vld [vmem:[%s324 + $0x2ac] sm:$0xff]
        %v4056 = vld [vmem:[%s324 + $0x2b4] sm:$0xf]
        %v4057 = vld [vmem:[%s324 + $0x2b8] sm:$0xff]
        %v4058 = vld [vmem:[%s324 + $0x2c0] sm:$0xf]
        %v4059 = vld [vmem:[%s324 + $0x2c4] sm:$0xff]
        %v4060 = vld [vmem:[%s324 + $0x2cc] sm:$0xf]
        %v4061 = vld [vmem:[%s324 + $0x2d0] sm:$0xff]
        %v4062 = vld [vmem:[%s324 + $0x2d8] sm:$0xf]
        %v4063 = vld [vmem:[%s324 + $0x2dc] sm:$0xff]
        %v4064 = vld [vmem:[%s324 + $0x2e4] sm:$0xf]
        %v4065 = vld [vmem:[%s324 + $0x2e8] sm:$0xff]
        %v4066 = vld [vmem:[%s324 + $0x2f0] sm:$0xf]
        %v4067 = vld [vmem:[%s324 + $0x2f4] sm:$0xff]
        %v4068 = vld [vmem:[%s324 + $0x2fc] sm:$0xf]
        %v4069 = vld [vmem:[%s324 + $0x300] sm:$0xff]
        %v4070 = vld [vmem:[%s324 + $0x308] sm:$0xf]
        %v4071 = vld [vmem:[%s324 + $0x30c] sm:$0xff]
        %v4072 = vld [vmem:[%s324 + $0x314] sm:$0xf]
        %v4073 = vld [vmem:[%s324 + $0x318] sm:$0xff]
        %v4074 = vld [vmem:[%s324 + $0x320] sm:$0xf]
        %v4075 = vld [vmem:[%s324 + $0x324] sm:$0xff]
        %v4076 = vld [vmem:[%s324 + $0x32c] sm:$0xf]
        %v4077 = vld [vmem:[%s324 + $0x330] sm:$0xff]
        %v4078 = vld [vmem:[%s324 + $0x338] sm:$0xf]
        %v4079 = vld [vmem:[%s324 + $0x33c] sm:$0xff]
        %v4080 = vld [vmem:[%s324 + $0x344] sm:$0xf]
        %v4081 = vld [vmem:[%s324 + $0x348] sm:$0xff]
        %v4082 = vld [vmem:[%s324 + $0x350] sm:$0xf]
        %v4083 = vld [vmem:[%s324 + $0x354] sm:$0xff]
        %v4084 = vld [vmem:[%s324 + $0x35c] sm:$0xf]
        %v4085 = vld [vmem:[%s324 + $0x360] sm:$0xff]
        %v4086 = vld [vmem:[%s324 + $0x368] sm:$0xf]
        %v4087 = vld [vmem:[%s324 + $0x36c] sm:$0xff]
        %v4088 = vld [vmem:[%s324 + $0x374] sm:$0xf]
        %v4089 = vld [vmem:[%s324 + $0x378] sm:$0xff]
        %v4090 = vld [vmem:[%s324 + $0x380] sm:$0xf]
        %v4091 = vld [vmem:[%s324 + $0x384] sm:$0xff]
        %v4092 = vld [vmem:[%s324 + $0x38c] sm:$0xf]
        %v4093 = vld [vmem:[%s324 + $0x390] sm:$0xff]
        %v4094 = vld [vmem:[%s324 + $0x398] sm:$0xf]
        %v4095 = vld [vmem:[%s324 + $0x39c] sm:$0xff]
        %v4096 = vld [vmem:[%s324 + $0x3a4] sm:$0xf]
        %v4097 = vld [vmem:[%s324 + $0x3a8] sm:$0xff]
        %v4098 = vld [vmem:[%s324 + $0x3b0] sm:$0xf]
        %v4099 = vld [vmem:[%s324 + $0x3b4] sm:$0xff]
        %v4100 = vld [vmem:[%s324 + $0x3bc] sm:$0xf]
        %v4101 = vld [vmem:[%s324 + $0x3c0] sm:$0xff]
        %v4102 = vld [vmem:[%s324 + $0x3c8] sm:$0xf]
        %v4103 = vld [vmem:[%s324 + $0x3cc] sm:$0xff]
        %v4104 = vld [vmem:[%s324 + $0x3d4] sm:$0xf]
        %v4105 = vld [vmem:[%s324 + $0x3d8] sm:$0xff]
        %v4106 = vld [vmem:[%s324 + $0x3e0] sm:$0xf]
        %v4107 = vld [vmem:[%s324 + $0x3e4] sm:$0xff]
        %v4108 = vld [vmem:[%s324 + $0x3ec] sm:$0xf]
        %v4109 = vld [vmem:[%s324 + $0x3f0] sm:$0xff]
        %v4110 = vld [vmem:[%s324 + $0x3f8] sm:$0xf]
        %v4111 = vld [vmem:[%s324 + $0x3fc] sm:$0xff]
        %v4112 = vld [vmem:[%s324 + $0x404] sm:$0xf]
        %v4113 = vld [vmem:[%s324 + $0x408] sm:$0xff]
        %v4114 = vld [vmem:[%s324 + $0x410] sm:$0xf]
        %v4115 = vld [vmem:[%s324 + $0x414] sm:$0xff]
        %v4116 = vld [vmem:[%s324 + $0x41c] sm:$0xf]
        %v4117 = vld [vmem:[%s324 + $0x420] sm:$0xff]
        %v4118 = vld [vmem:[%s324 + $0x428] sm:$0xf]
        %v4119 = vld [vmem:[%s324 + $0x42c] sm:$0xff]
        %v4120 = vld [vmem:[%s324 + $0x434] sm:$0xf]
        %v4121 = vld [vmem:[%s324 + $0x438] sm:$0xff]
        %v4122 = vld [vmem:[%s324 + $0x440] sm:$0xf]
        %v4123 = vld [vmem:[%s324 + $0x444] sm:$0xff]
        %v4124 = vld [vmem:[%s324 + $0x44c] sm:$0xf]
        %v4125 = vld [vmem:[%s324 + $0x450] sm:$0xff]
        %v4126 = vld [vmem:[%s324 + $0x458] sm:$0xf]
        %v4127 = vld [vmem:[%s324 + $0x45c] sm:$0xff]
        %v4128 = vld [vmem:[%s324 + $0x464] sm:$0xf]
        %v4129 = vld [vmem:[%s324 + $0x468] sm:$0xff]
        %v4130 = vld [vmem:[%s324 + $0x470] sm:$0xf]
        %v4131 = vld [vmem:[%s324 + $0x474] sm:$0xff]
        %v4132 = vld [vmem:[%s324 + $0x47c] sm:$0xf]
        %v4325 = vunpack.c.l.b16 %v3941
        %v4326 = vunpack.c.h.b16 %v3941
        %v4327 = vunpack.c.l.b16 %v3942
        %v4328 = vunpack.c.l.b16 %v3943
        %v4329 = vunpack.c.h.b16 %v3943
        %v4330 = vunpack.c.l.b16 %v3944
        %v4331 = vunpack.c.l.b16 %v3945
        %v4332 = vunpack.c.h.b16 %v3945
        %v4333 = vunpack.c.l.b16 %v3946
        %v4334 = vunpack.c.l.b16 %v3947
        %v4335 = vunpack.c.h.b16 %v3947
        %v4336 = vunpack.c.l.b16 %v3948
        %v4337 = vunpack.c.l.b16 %v3949
        %v4338 = vunpack.c.h.b16 %v3949
        %v4339 = vunpack.c.l.b16 %v3950
        %v4340 = vunpack.c.l.b16 %v3951
        %v4341 = vunpack.c.h.b16 %v3951
        %v4342 = vunpack.c.l.b16 %v3952
        %v4343 = vunpack.c.l.b16 %v3953
        %v4344 = vunpack.c.h.b16 %v3953
        %v4345 = vunpack.c.l.b16 %v3954
        %v4346 = vunpack.c.l.b16 %v3955
        %v4347 = vunpack.c.h.b16 %v3955
        %v4348 = vunpack.c.l.b16 %v3956
        %v4349 = vunpack.c.l.b16 %v3957
        %v4350 = vunpack.c.h.b16 %v3957
        %v4351 = vunpack.c.l.b16 %v3958
        %v4352 = vunpack.c.l.b16 %v3959
        %v4353 = vunpack.c.h.b16 %v3959
        %v4354 = vunpack.c.l.b16 %v3960
        %v4355 = vunpack.c.l.b16 %v3961
        %v4356 = vunpack.c.h.b16 %v3961
        %v4357 = vunpack.c.l.b16 %v3962
        %v4358 = vunpack.c.l.b16 %v3963
        %v4359 = vunpack.c.h.b16 %v3963
        %v4360 = vunpack.c.l.b16 %v3964
        %v4361 = vunpack.c.l.b16 %v3965
        %v4362 = vunpack.c.h.b16 %v3965
        %v4363 = vunpack.c.l.b16 %v3966
        %v4364 = vunpack.c.l.b16 %v3967
        %v4365 = vunpack.c.h.b16 %v3967
        %v4366 = vunpack.c.l.b16 %v3968
        %v4367 = vunpack.c.l.b16 %v3969
        %v4368 = vunpack.c.h.b16 %v3969
        %v4369 = vunpack.c.l.b16 %v3970
        %v4370 = vunpack.c.l.b16 %v3971
        %v4371 = vunpack.c.h.b16 %v3971
        %v4372 = vunpack.c.l.b16 %v3972
        %v4373 = vunpack.c.l.b16 %v3973
        %v4374 = vunpack.c.h.b16 %v3973
        %v4375 = vunpack.c.l.b16 %v3974
        %v4376 = vunpack.c.l.b16 %v3975
        %v4377 = vunpack.c.h.b16 %v3975
        %v4378 = vunpack.c.l.b16 %v3976
        %v4379 = vunpack.c.l.b16 %v3977
        %v4380 = vunpack.c.h.b16 %v3977
        %v4381 = vunpack.c.l.b16 %v3978
        %v4382 = vunpack.c.l.b16 %v3979
        %v4383 = vunpack.c.h.b16 %v3979
        %v4384 = vunpack.c.l.b16 %v3980
        %v4385 = vunpack.c.l.b16 %v3981
        %v4386 = vunpack.c.h.b16 %v3981
        %v4387 = vunpack.c.l.b16 %v3982
        %v4388 = vunpack.c.l.b16 %v3983
        %v4389 = vunpack.c.h.b16 %v3983
        %v4390 = vunpack.c.l.b16 %v3984
        %v4391 = vunpack.c.l.b16 %v3985
        %v4392 = vunpack.c.h.b16 %v3985
        %v4393 = vunpack.c.l.b16 %v3986
        %v4394 = vunpack.c.l.b16 %v3987
        %v4395 = vunpack.c.h.b16 %v3987
        %v4396 = vunpack.c.l.b16 %v3988
        %v4397 = vunpack.c.l.b16 %v3989
        %v4398 = vunpack.c.h.b16 %v3989
        %v4399 = vunpack.c.l.b16 %v3990
        %v4400 = vunpack.c.l.b16 %v3991
        %v4401 = vunpack.c.h.b16 %v3991
        %v4402 = vunpack.c.l.b16 %v3992
        %v4403 = vunpack.c.l.b16 %v3993
        %v4404 = vunpack.c.h.b16 %v3993
        %v4405 = vunpack.c.l.b16 %v3994
        %v4406 = vunpack.c.l.b16 %v3995
        %v4407 = vunpack.c.h.b16 %v3995
        %v4408 = vunpack.c.l.b16 %v3996
        %v4409 = vunpack.c.l.b16 %v3997
        %v4410 = vunpack.c.h.b16 %v3997
        %v4411 = vunpack.c.l.b16 %v3998
        %v4412 = vunpack.c.l.b16 %v3999
        %v4413 = vunpack.c.h.b16 %v3999
        %v4414 = vunpack.c.l.b16 %v4000
        %v4415 = vunpack.c.l.b16 %v4001
        %v4416 = vunpack.c.h.b16 %v4001
        %v4417 = vunpack.c.l.b16 %v4002
        %v4418 = vunpack.c.l.b16 %v4003
        %v4419 = vunpack.c.h.b16 %v4003
        %v4420 = vunpack.c.l.b16 %v4004
        %v4421 = vunpack.c.l.b16 %v4005
        %v4422 = vunpack.c.h.b16 %v4005
        %v4423 = vunpack.c.l.b16 %v4006
        %v4424 = vunpack.c.l.b16 %v4007
        %v4425 = vunpack.c.h.b16 %v4007
        %v4426 = vunpack.c.l.b16 %v4008
        %v4427 = vunpack.c.l.b16 %v4009
        %v4428 = vunpack.c.h.b16 %v4009
        %v4429 = vunpack.c.l.b16 %v4010
        %v4430 = vunpack.c.l.b16 %v4011
        %v4431 = vunpack.c.h.b16 %v4011
        %v4432 = vunpack.c.l.b16 %v4012
        %v4433 = vunpack.c.l.b16 %v4013
        %v4434 = vunpack.c.h.b16 %v4013
        %v4435 = vunpack.c.l.b16 %v4014
        %v4436 = vunpack.c.l.b16 %v4015
        %v4437 = vunpack.c.h.b16 %v4015
        %v4438 = vunpack.c.l.b16 %v4016
        %v4439 = vunpack.c.l.b16 %v4017
        %v4440 = vunpack.c.h.b16 %v4017
        %v4441 = vunpack.c.l.b16 %v4018
        %v4442 = vunpack.c.l.b16 %v4019
        %v4443 = vunpack.c.h.b16 %v4019
        %v4444 = vunpack.c.l.b16 %v4020
        %v4445 = vunpack.c.l.b16 %v4021
        %v4446 = vunpack.c.h.b16 %v4021
        %v4447 = vunpack.c.l.b16 %v4022
        %v4448 = vunpack.c.l.b16 %v4023
        %v4449 = vunpack.c.h.b16 %v4023
        %v4450 = vunpack.c.l.b16 %v4024
        %v4451 = vunpack.c.l.b16 %v4025
        %v4452 = vunpack.c.h.b16 %v4025
        %v4453 = vunpack.c.l.b16 %v4026
        %v4454 = vunpack.c.l.b16 %v4027
        %v4455 = vunpack.c.h.b16 %v4027
        %v4456 = vunpack.c.l.b16 %v4028
        %v4457 = vunpack.c.l.b16 %v4029
        %v4458 = vunpack.c.h.b16 %v4029
        %v4459 = vunpack.c.l.b16 %v4030
        %v4460 = vunpack.c.l.b16 %v4031
        %v4461 = vunpack.c.h.b16 %v4031
        %v4462 = vunpack.c.l.b16 %v4032
        %v4463 = vunpack.c.l.b16 %v4033
        %v4464 = vunpack.c.h.b16 %v4033
        %v4465 = vunpack.c.l.b16 %v4034
        %v4466 = vunpack.c.l.b16 %v4035
        %v4467 = vunpack.c.h.b16 %v4035
        %v4468 = vunpack.c.l.b16 %v4036
        %v4469 = vunpack.c.l.b16 %v4037
        %v4470 = vunpack.c.h.b16 %v4037
        %v4471 = vunpack.c.l.b16 %v4038
        %v4472 = vunpack.c.l.b16 %v4039
        %v4473 = vunpack.c.h.b16 %v4039
        %v4474 = vunpack.c.l.b16 %v4040
        %v4475 = vunpack.c.l.b16 %v4041
        %v4476 = vunpack.c.h.b16 %v4041
        %v4477 = vunpack.c.l.b16 %v4042
        %v4478 = vunpack.c.l.b16 %v4043
        %v4479 = vunpack.c.h.b16 %v4043
        %v4480 = vunpack.c.l.b16 %v4044
        %v4481 = vunpack.c.l.b16 %v4045
        %v4482 = vunpack.c.h.b16 %v4045
        %v4483 = vunpack.c.l.b16 %v4046
        %v4484 = vunpack.c.l.b16 %v4047
        %v4485 = vunpack.c.h.b16 %v4047
        %v4486 = vunpack.c.l.b16 %v4048
        %v4487 = vunpack.c.l.b16 %v4049
        %v4488 = vunpack.c.h.b16 %v4049
        %v4489 = vunpack.c.l.b16 %v4050
        %v4490 = vunpack.c.l.b16 %v4051
        %v4491 = vunpack.c.h.b16 %v4051
        %v4492 = vunpack.c.l.b16 %v4052
        %v4493 = vunpack.c.l.b16 %v4053
        %v4494 = vunpack.c.h.b16 %v4053
        %v4495 = vunpack.c.l.b16 %v4054
        %v4496 = vunpack.c.l.b16 %v4055
        %v4497 = vunpack.c.h.b16 %v4055
        %v4498 = vunpack.c.l.b16 %v4056
        %v4499 = vunpack.c.l.b16 %v4057
        %v4500 = vunpack.c.h.b16 %v4057
        %v4501 = vunpack.c.l.b16 %v4058
        %v4502 = vunpack.c.l.b16 %v4059
        %v4503 = vunpack.c.h.b16 %v4059
        %v4504 = vunpack.c.l.b16 %v4060
        %v4505 = vunpack.c.l.b16 %v4061
        %v4506 = vunpack.c.h.b16 %v4061
        %v4507 = vunpack.c.l.b16 %v4062
        %v4508 = vunpack.c.l.b16 %v4063
        %v4509 = vunpack.c.h.b16 %v4063
        %v4510 = vunpack.c.l.b16 %v4064
        %v4511 = vunpack.c.l.b16 %v4065
        %v4512 = vunpack.c.h.b16 %v4065
        %v4513 = vunpack.c.l.b16 %v4066
        %v4514 = vunpack.c.l.b16 %v4067
        %v4515 = vunpack.c.h.b16 %v4067
        %v4516 = vunpack.c.l.b16 %v4068
        %v4517 = vunpack.c.l.b16 %v4069
        %v4518 = vunpack.c.h.b16 %v4069
        %v4519 = vunpack.c.l.b16 %v4070
        %v4520 = vunpack.c.l.b16 %v4071
        %v4521 = vunpack.c.h.b16 %v4071
        %v4522 = vunpack.c.l.b16 %v4072
        %v4523 = vunpack.c.l.b16 %v4073
        %v4524 = vunpack.c.h.b16 %v4073
        %v4525 = vunpack.c.l.b16 %v4074
        %v4526 = vunpack.c.l.b16 %v4075
        %v4527 = vunpack.c.h.b16 %v4075
        %v4528 = vunpack.c.l.b16 %v4076
        %v4529 = vunpack.c.l.b16 %v4077
        %v4530 = vunpack.c.h.b16 %v4077
        %v4531 = vunpack.c.l.b16 %v4078
        %v4532 = vunpack.c.l.b16 %v4079
        %v4533 = vunpack.c.h.b16 %v4079
        %v4534 = vunpack.c.l.b16 %v4080
        %v4535 = vunpack.c.l.b16 %v4081
        %v4536 = vunpack.c.h.b16 %v4081
        %v4537 = vunpack.c.l.b16 %v4082
        %v4538 = vunpack.c.l.b16 %v4083
        %v4539 = vunpack.c.h.b16 %v4083
        %v4540 = vunpack.c.l.b16 %v4084
        %v4541 = vunpack.c.l.b16 %v4085
        %v4542 = vunpack.c.h.b16 %v4085
        %v4543 = vunpack.c.l.b16 %v4086
        %v4544 = vunpack.c.l.b16 %v4087
        %v4545 = vunpack.c.h.b16 %v4087
        %v4546 = vunpack.c.l.b16 %v4088
        %v4547 = vunpack.c.l.b16 %v4089
        %v4548 = vunpack.c.h.b16 %v4089
        %v4549 = vunpack.c.l.b16 %v4090
        %v4550 = vunpack.c.l.b16 %v4091
        %v4551 = vunpack.c.h.b16 %v4091
        %v4552 = vunpack.c.l.b16 %v4092
        %v4553 = vunpack.c.l.b16 %v4093
        %v4554 = vunpack.c.h.b16 %v4093
        %v4555 = vunpack.c.l.b16 %v4094
        %v4556 = vunpack.c.l.b16 %v4095
        %v4557 = vunpack.c.h.b16 %v4095
        %v4558 = vunpack.c.l.b16 %v4096
        %v4559 = vunpack.c.l.b16 %v4097
        %v4560 = vunpack.c.h.b16 %v4097
        %v4561 = vunpack.c.l.b16 %v4098
        %v4562 = vunpack.c.l.b16 %v4099
        %v4563 = vunpack.c.h.b16 %v4099
        %v4564 = vunpack.c.l.b16 %v4100
        %v4565 = vunpack.c.l.b16 %v4101
        %v4566 = vunpack.c.h.b16 %v4101
        %v4567 = vunpack.c.l.b16 %v4102
        %v4568 = vunpack.c.l.b16 %v4103
        %v4569 = vunpack.c.h.b16 %v4103
        %v4570 = vunpack.c.l.b16 %v4104
        %v4571 = vunpack.c.l.b16 %v4105
        %v4572 = vunpack.c.h.b16 %v4105
        %v4573 = vunpack.c.l.b16 %v4106
        %v4574 = vunpack.c.l.b16 %v4107
        %v4575 = vunpack.c.h.b16 %v4107
        %v4576 = vunpack.c.l.b16 %v4108
        %v4577 = vunpack.c.l.b16 %v4109
        %v4578 = vunpack.c.h.b16 %v4109
        %v4579 = vunpack.c.l.b16 %v4110
        %v4580 = vunpack.c.l.b16 %v4111
        %v4581 = vunpack.c.h.b16 %v4111
        %v4582 = vunpack.c.l.b16 %v4112
        %v4583 = vunpack.c.l.b16 %v4113
        %v4584 = vunpack.c.h.b16 %v4113
        %v4585 = vunpack.c.l.b16 %v4114
        %v4586 = vunpack.c.l.b16 %v4115
        %v4587 = vunpack.c.h.b16 %v4115
        %v4588 = vunpack.c.l.b16 %v4116
        %v4589 = vunpack.c.l.b16 %v4117
        %v4590 = vunpack.c.h.b16 %v4117
        %v4591 = vunpack.c.l.b16 %v4118
        %v4592 = vunpack.c.l.b16 %v4119
        %v4593 = vunpack.c.h.b16 %v4119
        %v4594 = vunpack.c.l.b16 %v4120
        %v4595 = vunpack.c.l.b16 %v4121
        %v4596 = vunpack.c.h.b16 %v4121
        %v4597 = vunpack.c.l.b16 %v4122
        %v4598 = vunpack.c.l.b16 %v4123
        %v4599 = vunpack.c.h.b16 %v4123
        %v4600 = vunpack.c.l.b16 %v4124
        %v4601 = vunpack.c.l.b16 %v4125
        %v4602 = vunpack.c.h.b16 %v4125
        %v4603 = vunpack.c.l.b16 %v4126
        %v4604 = vunpack.c.l.b16 %v4127
        %v4605 = vunpack.c.h.b16 %v4127
        %v4606 = vunpack.c.l.b16 %v4128
        %v4607 = vunpack.c.l.b16 %v4129
        %v4608 = vunpack.c.h.b16 %v4129
        %v4609 = vunpack.c.l.b16 %v4130
        %v4610 = vunpack.c.l.b16 %v4131
        %v4611 = vunpack.c.h.b16 %v4131
        %v4612 = vunpack.c.l.b16 %v4132
        %v4613 = vpack.c.b16 %v4328, %v4325
        %v4614 = vpack.c.b16 %v4329, %v4326
        %v4615 = vpack.c.b16 %v4330, %v4327
        %v4616 = vpack.c.b16 %v4334, %v4331
        %v4617 = vpack.c.b16 %v4335, %v4332
        %v4618 = vpack.c.b16 %v4336, %v4333
        %v4619 = vpack.c.b16 %v4340, %v4337
        %v4620 = vpack.c.b16 %v4341, %v4338
        %v4621 = vpack.c.b16 %v4342, %v4339
        %v4622 = vpack.c.b16 %v4346, %v4343
        %v4623 = vpack.c.b16 %v4347, %v4344
        %v4624 = vpack.c.b16 %v4348, %v4345
        %v4625 = vpack.c.b16 %v4352, %v4349
        %v4626 = vpack.c.b16 %v4353, %v4350
        %v4627 = vpack.c.b16 %v4354, %v4351
        %v4628 = vpack.c.b16 %v4358, %v4355
        %v4629 = vpack.c.b16 %v4359, %v4356
        %v4630 = vpack.c.b16 %v4360, %v4357
        %v4631 = vpack.c.b16 %v4364, %v4361
        %v4632 = vpack.c.b16 %v4365, %v4362
        %v4633 = vpack.c.b16 %v4366, %v4363
        %v4634 = vpack.c.b16 %v4370, %v4367
        %v4635 = vpack.c.b16 %v4371, %v4368
        %v4636 = vpack.c.b16 %v4372, %v4369
        %v4637 = vpack.c.b16 %v4376, %v4373
        %v4638 = vpack.c.b16 %v4377, %v4374
        %v4639 = vpack.c.b16 %v4378, %v4375
        %v4640 = vpack.c.b16 %v4382, %v4379
        %v4641 = vpack.c.b16 %v4383, %v4380
        %v4642 = vpack.c.b16 %v4384, %v4381
        %v4643 = vpack.c.b16 %v4388, %v4385
        %v4644 = vpack.c.b16 %v4389, %v4386
        %v4645 = vpack.c.b16 %v4390, %v4387
        %v4646 = vpack.c.b16 %v4394, %v4391
        %v4647 = vpack.c.b16 %v4395, %v4392
        %v4648 = vpack.c.b16 %v4396, %v4393
        %v4649 = vpack.c.b16 %v4400, %v4397
        %v4650 = vpack.c.b16 %v4401, %v4398
        %v4651 = vpack.c.b16 %v4402, %v4399
        %v4652 = vpack.c.b16 %v4406, %v4403
        %v4653 = vpack.c.b16 %v4407, %v4404
        %v4654 = vpack.c.b16 %v4408, %v4405
        %v4655 = vpack.c.b16 %v4412, %v4409
        %v4656 = vpack.c.b16 %v4413, %v4410
        %v4657 = vpack.c.b16 %v4414, %v4411
        %v4658 = vpack.c.b16 %v4418, %v4415
        %v4659 = vpack.c.b16 %v4419, %v4416
        %v4660 = vpack.c.b16 %v4420, %v4417
        %v4661 = vpack.c.b16 %v4424, %v4421
        %v4662 = vpack.c.b16 %v4425, %v4422
        %v4663 = vpack.c.b16 %v4426, %v4423
        %v4664 = vpack.c.b16 %v4430, %v4427
        %v4665 = vpack.c.b16 %v4431, %v4428
        %v4666 = vpack.c.b16 %v4432, %v4429
        %v4667 = vpack.c.b16 %v4436, %v4433
        %v4668 = vpack.c.b16 %v4437, %v4434
        %v4669 = vpack.c.b16 %v4438, %v4435
        %v4670 = vpack.c.b16 %v4442, %v4439
        %v4671 = vpack.c.b16 %v4443, %v4440
        %v4672 = vpack.c.b16 %v4444, %v4441
        %v4673 = vpack.c.b16 %v4448, %v4445
        %v4674 = vpack.c.b16 %v4449, %v4446
        %v4675 = vpack.c.b16 %v4450, %v4447
        %v4676 = vpack.c.b16 %v4454, %v4451
        %v4677 = vpack.c.b16 %v4455, %v4452
        %v4678 = vpack.c.b16 %v4456, %v4453
        %v4679 = vpack.c.b16 %v4460, %v4457
        %v4680 = vpack.c.b16 %v4461, %v4458
        %v4681 = vpack.c.b16 %v4462, %v4459
        %v4682 = vpack.c.b16 %v4466, %v4463
        %v4683 = vpack.c.b16 %v4467, %v4464
        %v4684 = vpack.c.b16 %v4468, %v4465
        %v4685 = vpack.c.b16 %v4472, %v4469
        %v4686 = vpack.c.b16 %v4473, %v4470
        %v4687 = vpack.c.b16 %v4474, %v4471
        %v4688 = vpack.c.b16 %v4478, %v4475
        %v4689 = vpack.c.b16 %v4479, %v4476
        %v4690 = vpack.c.b16 %v4480, %v4477
        %v4691 = vpack.c.b16 %v4484, %v4481
        %v4692 = vpack.c.b16 %v4485, %v4482
        %v4693 = vpack.c.b16 %v4486, %v4483
        %v4694 = vpack.c.b16 %v4490, %v4487
        %v4695 = vpack.c.b16 %v4491, %v4488
        %v4696 = vpack.c.b16 %v4492, %v4489
        %v4697 = vpack.c.b16 %v4496, %v4493
        %v4698 = vpack.c.b16 %v4497, %v4494
        %v4699 = vpack.c.b16 %v4498, %v4495
        %v4700 = vpack.c.b16 %v4502, %v4499
        %v4701 = vpack.c.b16 %v4503, %v4500
        %v4702 = vpack.c.b16 %v4504, %v4501
        %v4703 = vpack.c.b16 %v4508, %v4505
        %v4704 = vpack.c.b16 %v4509, %v4506
        %v4705 = vpack.c.b16 %v4510, %v4507
        %v4706 = vpack.c.b16 %v4514, %v4511
        %v4707 = vpack.c.b16 %v4515, %v4512
        %v4708 = vpack.c.b16 %v4516, %v4513
        %v4709 = vpack.c.b16 %v4520, %v4517
        %v4710 = vpack.c.b16 %v4521, %v4518
        %v4711 = vpack.c.b16 %v4522, %v4519
        %v4712 = vpack.c.b16 %v4526, %v4523
        %v4713 = vpack.c.b16 %v4527, %v4524
        %v4714 = vpack.c.b16 %v4528, %v4525
        %v4715 = vpack.c.b16 %v4532, %v4529
        %v4716 = vpack.c.b16 %v4533, %v4530
        %v4717 = vpack.c.b16 %v4534, %v4531
        %v4718 = vpack.c.b16 %v4538, %v4535
        %v4719 = vpack.c.b16 %v4539, %v4536
        %v4720 = vpack.c.b16 %v4540, %v4537
        %v4721 = vpack.c.b16 %v4544, %v4541
        %v4722 = vpack.c.b16 %v4545, %v4542
        %v4723 = vpack.c.b16 %v4546, %v4543
        %v4724 = vpack.c.b16 %v4550, %v4547
        %v4725 = vpack.c.b16 %v4551, %v4548
        %v4726 = vpack.c.b16 %v4552, %v4549
        %v4727 = vpack.c.b16 %v4556, %v4553
        %v4728 = vpack.c.b16 %v4557, %v4554
        %v4729 = vpack.c.b16 %v4558, %v4555
        %v4730 = vpack.c.b16 %v4562, %v4559
        %v4731 = vpack.c.b16 %v4563, %v4560
        %v4732 = vpack.c.b16 %v4564, %v4561
        %v4733 = vpack.c.b16 %v4568, %v4565
        %v4734 = vpack.c.b16 %v4569, %v4566
        %v4735 = vpack.c.b16 %v4570, %v4567
        %v4736 = vpack.c.b16 %v4574, %v4571
        %v4737 = vpack.c.b16 %v4575, %v4572
        %v4738 = vpack.c.b16 %v4576, %v4573
        %v4739 = vpack.c.b16 %v4580, %v4577
        %v4740 = vpack.c.b16 %v4581, %v4578
        %v4741 = vpack.c.b16 %v4582, %v4579
        %v4742 = vpack.c.b16 %v4586, %v4583
        %v4743 = vpack.c.b16 %v4587, %v4584
        %v4744 = vpack.c.b16 %v4588, %v4585
        %v4745 = vpack.c.b16 %v4592, %v4589
        %v4746 = vpack.c.b16 %v4593, %v4590
        %v4747 = vpack.c.b16 %v4594, %v4591
        %v4748 = vpack.c.b16 %v4598, %v4595
        %v4749 = vpack.c.b16 %v4599, %v4596
        %v4750 = vpack.c.b16 %v4600, %v4597
        %v4751 = vpack.c.b16 %v4604, %v4601
        %v4752 = vpack.c.b16 %v4605, %v4602
        %v4753 = vpack.c.b16 %v4606, %v4603
        %v4754 = vpack.c.b16 %v4610, %v4607
        %v4755 = vpack.c.b16 %v4611, %v4608
        %v4756 = vpack.c.b16 %v4612, %v4609
        %4901 = vmatprep.subr.bf16.mxu0 %v4614
        %4902 = vmatpush1.bf16.msra.mxu0 %v4613
        %4903 = vmatprep.subr.bf16.mxu0 %v4617
        %4904 = vmatpush1.bf16.msra.mxu0 %v4616
        %4905 = vmatprep.subr.bf16.mxu0 %v4620
        %4906 = vmatpush1.bf16.msra.mxu0 %v4619
        %4907 = vmatprep.subr.bf16.mxu0 %v4623
        %4908 = vmatpush1.bf16.msra.mxu0 %v4622
        %4909 = vmatprep.subr.bf16.mxu0 %v4626
        %4910 = vmatpush1.bf16.msra.mxu0 %v4625
        %4911 = vmatprep.subr.bf16.mxu0 %v4629
        %4912 = vmatpush1.bf16.msra.mxu0 %v4628
        %4913 = vmatprep.subr.bf16.mxu0 %v4632
        %4914 = vmatpush1.bf16.msra.mxu0 %v4631
        %4915 = vmatprep.subr.bf16.mxu0 %v4635
        %4916 = vmatpush1.bf16.msra.mxu0 %v4634
        %4917 = vmatprep.subr.bf16.mxu0 %v4638
        %4918 = vmatpush1.bf16.msra.mxu0 %v4637
        %4919 = vmatprep.subr.bf16.mxu0 %v4641
        %4920 = vmatpush1.bf16.msra.mxu0 %v4640
        %4921 = vmatprep.subr.bf16.mxu0 %v4644
        %4922 = vmatpush1.bf16.msra.mxu0 %v4643
        %4923 = vmatprep.subr.bf16.mxu0 %v4647
        %4924 = vmatpush1.bf16.msra.mxu0 %v4646
        %4925 = vmatprep.subr.bf16.mxu0 %v4650
        %4926 = vmatpush1.bf16.msra.mxu0 %v4649
        %4927 = vmatprep.subr.bf16.mxu0 %v4653
        %4928 = vmatpush1.bf16.msra.mxu0 %v4652
        %4929 = vmatprep.subr.bf16.mxu0 %v4656
        %4930 = vmatpush1.bf16.msra.mxu0 %v4655
        %4931 = vmatprep.subr.bf16.mxu0 %v4659
        %4932 = vmatpush1.bf16.msra.mxu0 %v4658
        %4933 = vmatprep.mubr.bf16.mxu0 %v3864
        %4934 = vmatmul.mubr.bf16.gmra.mrb[0].mxu0 %v3863
        %v4935 = vpop.f32.mrb[0].mxu0
        %v4936 = vadd.f32 0.0, %v4935
        %v4937 = vpop.f32.mrb[0].mxu0
        %v4938 = vadd.f32 0.0, %v4937
        %v4939 = vpop.f32.mrb[0].mxu0
        %v4940 = vadd.f32 0.0, %v4939
        %v4941 = vpop.f32.mrb[0].mxu0
        %v4942 = vadd.f32 0.0, %v4941
        %4943 = vmatprep.mubr.bf16.mxu0 %v3870
        %4944 = vmatmul.mubr.bf16.gmra.mrb[0].mxu0 %v3869
        %v4945 = vpop.f32.mrb[0].mxu0
        %v4946 = vadd.f32 0.0, %v4945
        %v4947 = vpop.f32.mrb[0].mxu0
        %v4948 = vadd.f32 0.0, %v4947
        %v4949 = vpop.f32.mrb[0].mxu0
        %v4950 = vadd.f32 0.0, %v4949
        %v4951 = vpop.f32.mrb[0].mxu0
        %v4952 = vadd.f32 0.0, %v4951
        %4953 = vmatprep.mubr.bf16.mxu0 %v3876
        %4954 = vmatmul.mubr.bf16.gmra.mrb[0].mxu0 %v3875
        %v4955 = vpop.f32.mrb[0].mxu0
        %v4956 = vadd.f32 0.0, %v4955
        %v4957 = vpop.f32.mrb[0].mxu0
        %v4958 = vadd.f32 0.0, %v4957
        %v4959 = vpop.f32.mrb[0].mxu0
        %v4960 = vadd.f32 0.0, %v4959
        %v4961 = vpop.f32.mrb[0].mxu0
        %v4962 = vadd.f32 0.0, %v4961
        %4963 = vmatprep.mubr.bf16.mxu0 %v3882
        %4964 = vmatmul.mubr.bf16.gmra.mrb[0].mxu0 %v3881
        %v4965 = vpop.f32.mrb[0].mxu0
        %v4966 = vadd.f32 0.0, %v4965
        %v4967 = vpop.f32.mrb[0].mxu0
        %v4968 = vadd.f32 0.0, %v4967
        %v4969 = vpop.f32.mrb[0].mxu0
        %v4970 = vadd.f32 0.0, %v4969
        %v4971 = vpop.f32.mrb[0].mxu0
        %v4972 = vadd.f32 0.0, %v4971
        %4973 = vmatprep.mubr.bf16.mxu0 %v3888
        %4974 = vmatmul.mubr.bf16.gmra.mrb[0].mxu0 %v3887
        %v4975 = vpop.f32.mrb[0].mxu0
        %v4976 = vadd.f32 0.0, %v4975
        %v4977 = vpop.f32.mrb[0].mxu0
        %v4978 = vadd.f32 0.0, %v4977
        %v4979 = vpop.f32.mrb[0].mxu0
        %v4980 = vadd.f32 0.0, %v4979
        %v4981 = vpop.f32.mrb[0].mxu0
        %v4982 = vadd.f32 0.0, %v4981
        %4983 = vmatprep.mubr.bf16.mxu0 %v3894
        %4984 = vmatmul.mubr.bf16.gmra.mrb[0].mxu0 %v3893
        %v4985 = vpop.f32.mrb[0].mxu0
        %v4986 = vadd.f32 0.0, %v4985
        %v4987 = vpop.f32.mrb[0].mxu0
        %v4988 = vadd.f32 0.0, %v4987
        %v4989 = vpop.f32.mrb[0].mxu0
        %v4990 = vadd.f32 0.0, %v4989
        %v4991 = vpop.f32.mrb[0].mxu0
        %v4992 = vadd.f32 0.0, %v4991
        %4993 = vmatprep.mubr.bf16.mxu0 %v3900
        %4994 = vmatmul.mubr.bf16.gmra.mrb[0].mxu0 %v3899
        %v4995 = vpop.f32.mrb[0].mxu0
        %v4996 = vadd.f32 0.0, %v4995
        %v4997 = vpop.f32.mrb[0].mxu0
        %v4998 = vadd.f32 0.0, %v4997
        %v4999 = vpop.f32.mrb[0].mxu0
        %v5000 = vadd.f32 0.0, %v4999
        %v5001 = vpop.f32.mrb[0].mxu0
        %v5002 = vadd.f32 0.0, %v5001
        %5003 = vmatprep.mubr.bf16.mxu0 %v3906
        %5004 = vmatmul.mubr.bf16.gmra.mrb[0].mxu0 %v3905
        %v5005 = vpop.f32.mrb[0].mxu0
        %v5006 = vadd.f32 0.0, %v5005
        %v5007 = vpop.f32.mrb[0].mxu0
        %v5008 = vadd.f32 0.0, %v5007
        %v5009 = vpop.f32.mrb[0].mxu0
        %v5010 = vadd.f32 0.0, %v5009
        %v5011 = vpop.f32.mrb[0].mxu0
        %v5012 = vadd.f32 0.0, %v5011
        %5013 = vmatprep.mubr.bf16.mxu0 %v3912
        %5014 = vmatmul.mubr.bf16.gmra.mrb[0].mxu0 %v3911
        %v5015 = vpop.f32.mrb[0].mxu0
        %v5016 = vadd.f32 0.0, %v5015
        %v5017 = vpop.f32.mrb[0].mxu0
        %v5018 = vadd.f32 0.0, %v5017
        %v5019 = vpop.f32.mrb[0].mxu0
        %v5020 = vadd.f32 0.0, %v5019
        %v5021 = vpop.f32.mrb[0].mxu0
        %v5022 = vadd.f32 0.0, %v5021
        %5023 = vmatprep.mubr.bf16.mxu0 %v3918
        %5024 = vmatmul.mubr.bf16.gmra.mrb[0].mxu0 %v3917
        %v5025 = vpop.f32.mrb[0].mxu0
        %v5026 = vadd.f32 0.0, %v5025
        %v5027 = vpop.f32.mrb[0].mxu0
        %v5028 = vadd.f32 0.0, %v5027
        %v5029 = vpop.f32.mrb[0].mxu0
        %v5030 = vadd.f32 0.0, %v5029
        %v5031 = vpop.f32.mrb[0].mxu0
        %v5032 = vadd.f32 0.0, %v5031
        %5033 = vmatprep.mubr.bf16.mxu0 %v3924
        %5034 = vmatmul.mubr.bf16.gmra.mrb[0].mxu0 %v3923
        %v5035 = vpop.f32.mrb[0].mxu0
        %v5036 = vadd.f32 0.0, %v5035
        %v5037 = vpop.f32.mrb[0].mxu0
        %v5038 = vadd.f32 0.0, %v5037
        %v5039 = vpop.f32.mrb[0].mxu0
        %v5040 = vadd.f32 0.0, %v5039
        %v5041 = vpop.f32.mrb[0].mxu0
        %v5042 = vadd.f32 0.0, %v5041
        %5043 = vmatprep.mubr.bf16.mxu0 %v3930
        %5044 = vmatmul.mubr.bf16.gmra.mrb[0].mxu0 %v3929
        %v5045 = vpop.f32.mrb[0].mxu0
        %v5046 = vadd.f32 0.0, %v5045
        %v5047 = vpop.f32.mrb[0].mxu0
        %v5048 = vadd.f32 0.0, %v5047
        %v5049 = vpop.f32.mrb[0].mxu0
        %v5050 = vadd.f32 0.0, %v5049
        %v5051 = vpop.f32.mrb[0].mxu0
        %v5052 = vadd.f32 0.0, %v5051
        %5053 = vmatprep.mubr.bf16.mxu0 %v3936
        %5054 = vmatmul.mubr.bf16.gmra.mrb[0].mxu0 %v3935
        %v5055 = vpop.f32.mrb[0].mxu0
        %v5056 = vadd.f32 0.0, %v5055
        %v5057 = vpop.f32.mrb[0].mxu0
        %v5058 = vadd.f32 0.0, %v5057
        %v5059 = vpop.f32.mrb[0].mxu0
        %v5060 = vpop.f32.mrb[0].mxu0
        %5061 = vdwg.mxu0
        %5062 = vmatprep.subr.bf16.mxu0 %v4662
        %5063 = vmatpush1.bf16.msra.mxu0 %v4661
        %5064 = vmatprep.subr.bf16.mxu0 %v4665
        %5065 = vmatpush1.bf16.msra.mxu0 %v4664
        %5066 = vmatprep.subr.bf16.mxu0 %v4668
        %5067 = vmatpush1.bf16.msra.mxu0 %v4667
        %5068 = vmatprep.subr.bf16.mxu0 %v4671
        %5069 = vmatpush1.bf16.msra.mxu0 %v4670
        %5070 = vmatprep.subr.bf16.mxu0 %v4674
        %5071 = vmatpush1.bf16.msra.mxu0 %v4673
        %5072 = vmatprep.subr.bf16.mxu0 %v4677
        %5073 = vmatpush1.bf16.msra.mxu0 %v4676
        %5074 = vmatprep.subr.bf16.mxu0 %v4680
        %5075 = vmatpush1.bf16.msra.mxu0 %v4679
        %5076 = vmatprep.subr.bf16.mxu0 %v4683
        %5077 = vmatpush1.bf16.msra.mxu0 %v4682
        %5078 = vmatprep.subr.bf16.mxu0 %v4686
        %5079 = vmatpush1.bf16.msra.mxu0 %v4685
        %5080 = vmatprep.subr.bf16.mxu0 %v4689
        %5081 = vmatpush1.bf16.msra.mxu0 %v4688
        %5082 = vmatprep.subr.bf16.mxu0 %v4692
        %5083 = vmatpush1.bf16.msra.mxu0 %v4691
        %5084 = vmatprep.subr.bf16.mxu0 %v4695
        %5085 = vmatpush1.bf16.msra.mxu0 %v4694
        %5086 = vmatprep.subr.bf16.mxu0 %v4698
        %5087 = vmatpush1.bf16.msra.mxu0 %v4697
        %5088 = vmatprep.subr.bf16.mxu0 %v4701
        %5089 = vmatpush1.bf16.msra.mxu0 %v4700
        %5090 = vmatprep.subr.bf16.mxu0 %v4704
        %5091 = vmatpush1.bf16.msra.mxu0 %v4703
        %5092 = vmatprep.subr.bf16.mxu0 %v4707
        %5093 = vmatpush1.bf16.msra.mxu0 %v4706
        %5094 = vmatprep.mubr.bf16.mxu0 %v3866
        %5095 = vmatmul.mubr.bf16.gmra.mrb[0].mxu0 %v3865
        %v5096 = vpop.f32.mrb[0].mxu0
        %v5097 = vadd.f32 %v4936, %v5096
        %v5098 = vpop.f32.mrb[0].mxu0
        %v5099 = vadd.f32 %v4938, %v5098
        %v5100 = vpop.f32.mrb[0].mxu0
        %v5101 = vadd.f32 %v4940, %v5100
        %v5102 = vpop.f32.mrb[0].mxu0
        %v5103 = vadd.f32 %v4942, %v5102
        %5104 = vmatprep.mubr.bf16.mxu0 %v3872
        %5105 = vmatmul.mubr.bf16.gmra.mrb[0].mxu0 %v3871
        %v5106 = vpop.f32.mrb[0].mxu0
        %v5107 = vadd.f32 %v4946, %v5106
        %v5108 = vpop.f32.mrb[0].mxu0
        %v5109 = vadd.f32 %v4948, %v5108
        %v5110 = vpop.f32.mrb[0].mxu0
        %v5111 = vadd.f32 %v4950, %v5110
        %v5112 = vpop.f32.mrb[0].mxu0
        %v5113 = vadd.f32 %v4952, %v5112
        %5114 = vmatprep.mubr.bf16.mxu0 %v3878
        %5115 = vmatmul.mubr.bf16.gmra.mrb[0].mxu0 %v3877
        %v5116 = vpop.f32.mrb[0].mxu0
        %v5117 = vadd.f32 %v4956, %v5116
        %v5118 = vpop.f32.mrb[0].mxu0
        %v5119 = vadd.f32 %v4958, %v5118
        %v5120 = vpop.f32.mrb[0].mxu0
        %v5121 = vadd.f32 %v4960, %v5120
        %v5122 = vpop.f32.mrb[0].mxu0
        %v5123 = vadd.f32 %v4962, %v5122
        %5124 = vmatprep.mubr.bf16.mxu0 %v3884
        %5125 = vmatmul.mubr.bf16.gmra.mrb[0].mxu0 %v3883
        %v5126 = vpop.f32.mrb[0].mxu0
        %v5127 = vadd.f32 %v4966, %v5126
        %v5128 = vpop.f32.mrb[0].mxu0
        %v5129 = vadd.f32 %v4968, %v5128
        %v5130 = vpop.f32.mrb[0].mxu0
        %v5131 = vadd.f32 %v4970, %v5130
        %v5132 = vpop.f32.mrb[0].mxu0
        %v5133 = vadd.f32 %v4972, %v5132
        %5134 = vmatprep.mubr.bf16.mxu0 %v3890
        %5135 = vmatmul.mubr.bf16.gmra.mrb[0].mxu0 %v3889
        %v5136 = vpop.f32.mrb[0].mxu0
        %v5137 = vadd.f32 %v4976, %v5136
        %v5138 = vpop.f32.mrb[0].mxu0
        %v5139 = vadd.f32 %v4978, %v5138
        %v5140 = vpop.f32.mrb[0].mxu0
        %v5141 = vadd.f32 %v4980, %v5140
        %v5142 = vpop.f32.mrb[0].mxu0
        %v5143 = vadd.f32 %v4982, %v5142
        %5144 = vmatprep.mubr.bf16.mxu0 %v3896
        %5145 = vmatmul.mubr.bf16.gmra.mrb[0].mxu0 %v3895
        %v5146 = vpop.f32.mrb[0].mxu0
        %v5147 = vadd.f32 %v4986, %v5146
        %v5148 = vpop.f32.mrb[0].mxu0
        %v5149 = vadd.f32 %v4988, %v5148
        %v5150 = vpop.f32.mrb[0].mxu0
        %v5151 = vadd.f32 %v4990, %v5150
        %v5152 = vpop.f32.mrb[0].mxu0
        %v5153 = vadd.f32 %v4992, %v5152
        %5154 = vmatprep.mubr.bf16.mxu0 %v3902
        %5155 = vmatmul.mubr.bf16.gmra.mrb[0].mxu0 %v3901
        %v5156 = vpop.f32.mrb[0].mxu0
        %v5157 = vadd.f32 %v4996, %v5156
        %v5158 = vpop.f32.mrb[0].mxu0
        %v5159 = vadd.f32 %v4998, %v5158
        %v5160 = vpop.f32.mrb[0].mxu0
        %v5161 = vadd.f32 %v5000, %v5160
        %v5162 = vpop.f32.mrb[0].mxu0
        %v5163 = vadd.f32 %v5002, %v5162
        %5164 = vmatprep.mubr.bf16.mxu0 %v3908
        %5165 = vmatmul.mubr.bf16.gmra.mrb[0].mxu0 %v3907
        %v5166 = vpop.f32.mrb[0].mxu0
        %v5167 = vadd.f32 %v5006, %v5166
        %v5168 = vpop.f32.mrb[0].mxu0
        %v5169 = vadd.f32 %v5008, %v5168
        %v5170 = vpop.f32.mrb[0].mxu0
        %v5171 = vadd.f32 %v5010, %v5170
        %v5172 = vpop.f32.mrb[0].mxu0
        %v5173 = vadd.f32 %v5012, %v5172
        %5174 = vmatprep.mubr.bf16.mxu0 %v3914
        %5175 = vmatmul.mubr.bf16.gmra.mrb[0].mxu0 %v3913
        %v5176 = vpop.f32.mrb[0].mxu0
        %v5177 = vadd.f32 %v5016, %v5176
        %v5178 = vpop.f32.mrb[0].mxu0
        %v5179 = vadd.f32 %v5018, %v5178
        %v5180 = vpop.f32.mrb[0].mxu0
        %v5181 = vadd.f32 %v5020, %v5180
        %v5182 = vpop.f32.mrb[0].mxu0
        %v5183 = vadd.f32 %v5022, %v5182
        %5184 = vmatprep.mubr.bf16.mxu0 %v3920
        %5185 = vmatmul.mubr.bf16.gmra.mrb[0].mxu0 %v3919
        %v5186 = vpop.f32.mrb[0].mxu0
        %v5187 = vadd.f32 %v5026, %v5186
        %v5188 = vpop.f32.mrb[0].mxu0
        %v5189 = vadd.f32 %v5028, %v5188
        %v5190 = vpop.f32.mrb[0].mxu0
        %v5191 = vadd.f32 %v5030, %v5190
        %v5192 = vpop.f32.mrb[0].mxu0
        %v5193 = vadd.f32 %v5032, %v5192
        %5194 = vmatprep.mubr.bf16.mxu0 %v3926
        %5195 = vmatmul.mubr.bf16.gmra.mrb[0].mxu0 %v3925
        %v5196 = vpop.f32.mrb[0].mxu0
        %v5197 = vadd.f32 %v5036, %v5196
        %v5198 = vpop.f32.mrb[0].mxu0
        %v5199 = vadd.f32 %v5038, %v5198
        %v5200 = vpop.f32.mrb[0].mxu0
        %v5201 = vadd.f32 %v5040, %v5200
        %v5202 = vpop.f32.mrb[0].mxu0
        %v5203 = vadd.f32 %v5042, %v5202
        %5204 = vmatprep.mubr.bf16.mxu0 %v3932
        %5205 = vmatmul.mubr.bf16.gmra.mrb[0].mxu0 %v3931
        %v5206 = vpop.f32.mrb[0].mxu0
        %v5207 = vadd.f32 %v5046, %v5206
        %v5208 = vpop.f32.mrb[0].mxu0
        %v5209 = vadd.f32 %v5048, %v5208
        %v5210 = vpop.f32.mrb[0].mxu0
        %v5211 = vadd.f32 %v5050, %v5210
        %v5212 = vpop.f32.mrb[0].mxu0
        %v5213 = vadd.f32 %v5052, %v5212
        %5214 = vmatprep.mubr.bf16.mxu0 %v3938
        %5215 = vmatmul.mubr.bf16.gmra.mrb[0].mxu0 %v3937
        %v5216 = vpop.f32.mrb[0].mxu0
        %v5217 = vadd.f32 %v5056, %v5216
        %v5218 = vpop.f32.mrb[0].mxu0
        %v5219 = vadd.f32 %v5058, %v5218
        %v5220 = vpop.f32.mrb[0].mxu0
        %v5221 = vpop.f32.mrb[0].mxu0
        %5222 = vdwg.mxu0
        %5223 = vmatprep.subr.bf16.mxu0 %v4710
        %5224 = vmatpush1.bf16.msra.mxu0 %v4709
        %5225 = vmatprep.subr.bf16.mxu0 %v4713
        %5226 = vmatpush1.bf16.msra.mxu0 %v4712
        %5227 = vmatprep.subr.bf16.mxu0 %v4716
        %5228 = vmatpush1.bf16.msra.mxu0 %v4715
        %5229 = vmatprep.subr.bf16.mxu0 %v4719
        %5230 = vmatpush1.bf16.msra.mxu0 %v4718
        %5231 = vmatprep.subr.bf16.mxu0 %v4722
        %5232 = vmatpush1.bf16.msra.mxu0 %v4721
        %5233 = vmatprep.subr.bf16.mxu0 %v4725
        %5234 = vmatpush1.bf16.msra.mxu0 %v4724
        %5235 = vmatprep.subr.bf16.mxu0 %v4728
        %5236 = vmatpush1.bf16.msra.mxu0 %v4727
        %5237 = vmatprep.subr.bf16.mxu0 %v4731
        %5238 = vmatpush1.bf16.msra.mxu0 %v4730
        %5239 = vmatprep.subr.bf16.mxu0 %v4734
        %5240 = vmatpush1.bf16.msra.mxu0 %v4733
        %5241 = vmatprep.subr.bf16.mxu0 %v4737
        %5242 = vmatpush1.bf16.msra.mxu0 %v4736
        %5243 = vmatprep.subr.bf16.mxu0 %v4740
        %5244 = vmatpush1.bf16.msra.mxu0 %v4739
        %5245 = vmatprep.subr.bf16.mxu0 %v4743
        %5246 = vmatpush1.bf16.msra.mxu0 %v4742
        %5247 = vmatprep.subr.bf16.mxu0 %v4746
        %5248 = vmatpush1.bf16.msra.mxu0 %v4745
        %5249 = vmatprep.subr.bf16.mxu0 %v4749
        %5250 = vmatpush1.bf16.msra.mxu0 %v4748
        %5251 = vmatprep.subr.bf16.mxu0 %v4752
        %5252 = vmatpush1.bf16.msra.mxu0 %v4751
        %5253 = vmatprep.subr.bf16.mxu0 %v4755
        %5254 = vmatpush1.bf16.msra.mxu0 %v4754
        %5255 = vmatprep.mubr.bf16.mxu0 %v3868
        %5256 = vmatmul.mubr.bf16.gmra.mrb[0].mxu0 %v3867
        %v5257 = vpop.f32.mrb[0].mxu0
        %v5258 = vadd.f32 %v5097, %v5257
        %v5259 = vpop.f32.mrb[0].mxu0
        %v5260 = vadd.f32 %v5099, %v5259
        %v5261 = vpop.f32.mrb[0].mxu0
        %v5262 = vadd.f32 %v5101, %v5261
        %v5263 = vpop.f32.mrb[0].mxu0
        %v5264 = vadd.f32 %v5103, %v5263
        %5265 = vmatprep.mubr.bf16.mxu0 %v3874
        %5266 = vmatmul.mubr.bf16.gmra.mrb[0].mxu0 %v3873
        %v5267 = vpop.f32.mrb[0].mxu0
        %v5268 = vadd.f32 %v5107, %v5267
        %v5269 = vpop.f32.mrb[0].mxu0
        %v5270 = vadd.f32 %v5109, %v5269
        %v5271 = vpop.f32.mrb[0].mxu0
        %v5272 = vadd.f32 %v5111, %v5271
        %v5273 = vpop.f32.mrb[0].mxu0
        %v5274 = vadd.f32 %v5113, %v5273
        %5275 = vmatprep.mubr.bf16.mxu0 %v3880
        %5276 = vmatmul.mubr.bf16.gmra.mrb[0].mxu0 %v3879
        %v5277 = vpop.f32.mrb[0].mxu0
        %v5278 = vadd.f32 %v5117, %v5277
        %v5279 = vpop.f32.mrb[0].mxu0
        %v5280 = vadd.f32 %v5119, %v5279
        %v5281 = vpop.f32.mrb[0].mxu0
        %v5282 = vadd.f32 %v5121, %v5281
        %v5283 = vpop.f32.mrb[0].mxu0
        %v5284 = vadd.f32 %v5123, %v5283
        %5285 = vmatprep.mubr.bf16.mxu0 %v3886
        %5286 = vmatmul.mubr.bf16.gmra.mrb[0].mxu0 %v3885
        %v5287 = vpop.f32.mrb[0].mxu0
        %v5288 = vadd.f32 %v5127, %v5287
        %v5289 = vpop.f32.mrb[0].mxu0
        %v5290 = vadd.f32 %v5129, %v5289
        %v5291 = vpop.f32.mrb[0].mxu0
        %v5292 = vadd.f32 %v5131, %v5291
        %v5293 = vpop.f32.mrb[0].mxu0
        %v5294 = vadd.f32 %v5133, %v5293
        %5295 = vmatprep.mubr.bf16.mxu0 %v3892
        %5296 = vmatmul.mubr.bf16.gmra.mrb[0].mxu0 %v3891
        %v5297 = vpop.f32.mrb[0].mxu0
        %v5298 = vadd.f32 %v5137, %v5297
        %v5299 = vpop.f32.mrb[0].mxu0
        %v5300 = vadd.f32 %v5139, %v5299
        %v5301 = vpop.f32.mrb[0].mxu0
        %v5302 = vadd.f32 %v5141, %v5301
        %v5303 = vpop.f32.mrb[0].mxu0
        %v5304 = vadd.f32 %v5143, %v5303
        %5305 = vmatprep.mubr.bf16.mxu0 %v3898
        %5306 = vmatmul.mubr.bf16.gmra.mrb[0].mxu0 %v3897
        %v5307 = vpop.f32.mrb[0].mxu0
        %v5308 = vadd.f32 %v5147, %v5307
        %v5309 = vpop.f32.mrb[0].mxu0
        %v5310 = vadd.f32 %v5149, %v5309
        %v5311 = vpop.f32.mrb[0].mxu0
        %v5312 = vadd.f32 %v5151, %v5311
        %v5313 = vpop.f32.mrb[0].mxu0
        %v5314 = vadd.f32 %v5153, %v5313
        %5315 = vmatprep.mubr.bf16.mxu0 %v3904
        %5316 = vmatmul.mubr.bf16.gmra.mrb[0].mxu0 %v3903
        %v5317 = vpop.f32.mrb[0].mxu0
        %v5318 = vadd.f32 %v5157, %v5317
        %v5319 = vpop.f32.mrb[0].mxu0
        %v5320 = vadd.f32 %v5159, %v5319
        %v5321 = vpop.f32.mrb[0].mxu0
        %v5322 = vadd.f32 %v5161, %v5321
        %v5323 = vpop.f32.mrb[0].mxu0
        %v5324 = vadd.f32 %v5163, %v5323
        %5325 = vmatprep.mubr.bf16.mxu0 %v3910
        %5326 = vmatmul.mubr.bf16.gmra.mrb[0].mxu0 %v3909
        %v5327 = vpop.f32.mrb[0].mxu0
        %v5328 = vadd.f32 %v5167, %v5327
        %v5329 = vpop.f32.mrb[0].mxu0
        %v5330 = vadd.f32 %v5169, %v5329
        %v5331 = vpop.f32.mrb[0].mxu0
        %v5332 = vadd.f32 %v5171, %v5331
        %v5333 = vpop.f32.mrb[0].mxu0
        %v5334 = vadd.f32 %v5173, %v5333
        %5335 = vmatprep.mubr.bf16.mxu0 %v3916
        %5336 = vmatmul.mubr.bf16.gmra.mrb[0].mxu0 %v3915
        %v5337 = vpop.f32.mrb[0].mxu0
        %v5338 = vadd.f32 %v5177, %v5337
        %v5339 = vpop.f32.mrb[0].mxu0
        %v5340 = vadd.f32 %v5179, %v5339
        %v5341 = vpop.f32.mrb[0].mxu0
        %v5342 = vadd.f32 %v5181, %v5341
        %v5343 = vpop.f32.mrb[0].mxu0
        %v5344 = vadd.f32 %v5183, %v5343
        %5345 = vmatprep.mubr.bf16.mxu0 %v3922
        %5346 = vmatmul.mubr.bf16.gmra.mrb[0].mxu0 %v3921
        %v5347 = vpop.f32.mrb[0].mxu0
        %v5348 = vadd.f32 %v5187, %v5347
        %v5349 = vpop.f32.mrb[0].mxu0
        %v5350 = vadd.f32 %v5189, %v5349
        %v5351 = vpop.f32.mrb[0].mxu0
        %v5352 = vadd.f32 %v5191, %v5351
        %v5353 = vpop.f32.mrb[0].mxu0
        %v5354 = vadd.f32 %v5193, %v5353
        %5355 = vmatprep.mubr.bf16.mxu0 %v3928
        %5356 = vmatmul.mubr.bf16.gmra.mrb[0].mxu0 %v3927
        %v5357 = vpop.f32.mrb[0].mxu0
        %v5358 = vadd.f32 %v5197, %v5357
        %v5359 = vpop.f32.mrb[0].mxu0
        %v5360 = vadd.f32 %v5199, %v5359
        %v5361 = vpop.f32.mrb[0].mxu0
        %v5362 = vadd.f32 %v5201, %v5361
        %v5363 = vpop.f32.mrb[0].mxu0
        %v5364 = vadd.f32 %v5203, %v5363
        %5365 = vmatprep.mubr.bf16.mxu0 %v3934
        %5366 = vmatmul.mubr.bf16.gmra.mrb[0].mxu0 %v3933
        %v5367 = vpop.f32.mrb[0].mxu0
        %v5368 = vadd.f32 %v5207, %v5367
        %v5369 = vpop.f32.mrb[0].mxu0
        %v5370 = vadd.f32 %v5209, %v5369
        %v5371 = vpop.f32.mrb[0].mxu0
        %v5372 = vadd.f32 %v5211, %v5371
        %v5373 = vpop.f32.mrb[0].mxu0
        %v5374 = vadd.f32 %v5213, %v5373
        %5375 = vmatprep.mubr.bf16.mxu0 %v3940
        %5376 = vmatmul.mubr.bf16.gmra.mrb[0].mxu0 %v3939
        %v5377 = vpop.f32.mrb[0].mxu0
        %v5378 = vadd.f32 %v5217, %v5377
        %v5379 = vpop.f32.mrb[0].mxu0
        %v5380 = vadd.f32 %v5219, %v5379
        %v5381 = vpop.f32.mrb[0].mxu0
        %v5382 = vpop.f32.mrb[0].mxu0
        %5383 = vdwg.mxu0
        %5384 = vmatprep.subr.bf16.mxu0 0
        %5385 = vmatpush1.bf16.msra.mxu0 %v4615
        %5386 = vmatprep.subr.bf16.mxu0 0
        %5387 = vmatpush1.bf16.msra.mxu0 %v4618
        %5388 = vmatprep.subr.bf16.mxu0 0
        %5389 = vmatpush1.bf16.msra.mxu0 %v4621
        %5390 = vmatprep.subr.bf16.mxu0 0
        %5391 = vmatpush1.bf16.msra.mxu0 %v4624
        %5392 = vmatprep.subr.bf16.mxu0 0
        %5393 = vmatpush1.bf16.msra.mxu0 %v4627
        %5394 = vmatprep.subr.bf16.mxu0 0
        %5395 = vmatpush1.bf16.msra.mxu0 %v4630
        %5396 = vmatprep.subr.bf16.mxu0 0
        %5397 = vmatpush1.bf16.msra.mxu0 %v4633
        %5398 = vmatprep.subr.bf16.mxu0 0
        %5399 = vmatpush1.bf16.msra.mxu0 %v4636
        %5400 = vmatprep.subr.bf16.mxu0 0
        %5401 = vmatpush1.bf16.msra.mxu0 %v4639
        %5402 = vmatprep.subr.bf16.mxu0 0
        %5403 = vmatpush1.bf16.msra.mxu0 %v4642
        %5404 = vmatprep.subr.bf16.mxu0 0
        %5405 = vmatpush1.bf16.msra.mxu0 %v4645
        %5406 = vmatprep.subr.bf16.mxu0 0
        %5407 = vmatpush1.bf16.msra.mxu0 %v4648
        %5408 = vmatprep.subr.bf16.mxu0 0
        %5409 = vmatpush1.bf16.msra.mxu0 %v4651
        %5410 = vmatprep.subr.bf16.mxu0 0
        %5411 = vmatpush1.bf16.msra.mxu0 %v4654
        %5412 = vmatprep.subr.bf16.mxu0 0
        %5413 = vmatpush1.bf16.msra.mxu0 %v4657
        %5414 = vmatprep.subr.bf16.mxu0 0
        %5415 = vmatpush1.bf16.msra.mxu0 %v4660
        %5416 = vmatprep.mubr.bf16.mxu0 %v3864
        %5417 = vmatmul.mubr.bf16.gmra.mrb[0].mxu0 %v3863
        %v5418 = vpop.f32.mrb[0].mxu0
        %v5419 = vadd.f32 0.0, %v5418
        %v5420 = vpop.f32.mrb[0].mxu0
        %v5421 = vpop.f32.mrb[0].mxu0
        %v5422 = vadd.f32 0.0, %v5421
        %v5423 = vpop.f32.mrb[0].mxu0
        %5424 = vmatprep.mubr.bf16.mxu0 %v3870
        %5425 = vmatmul.mubr.bf16.gmra.mrb[0].mxu0 %v3869
        %v5426 = vpop.f32.mrb[0].mxu0
        %v5427 = vadd.f32 0.0, %v5426
        %v5428 = vpop.f32.mrb[0].mxu0
        %v5429 = vpop.f32.mrb[0].mxu0
        %v5430 = vadd.f32 0.0, %v5429
        %v5431 = vpop.f32.mrb[0].mxu0
        %5432 = vmatprep.mubr.bf16.mxu0 %v3876
        %5433 = vmatmul.mubr.bf16.gmra.mrb[0].mxu0 %v3875
        %v5434 = vpop.f32.mrb[0].mxu0
        %v5435 = vadd.f32 0.0, %v5434
        %v5436 = vpop.f32.mrb[0].mxu0
        %v5437 = vpop.f32.mrb[0].mxu0
        %v5438 = vadd.f32 0.0, %v5437
        %v5439 = vpop.f32.mrb[0].mxu0
        %5440 = vmatprep.mubr.bf16.mxu0 %v3882
        %5441 = vmatmul.mubr.bf16.gmra.mrb[0].mxu0 %v3881
        %v5442 = vpop.f32.mrb[0].mxu0
        %v5443 = vadd.f32 0.0, %v5442
        %v5444 = vpop.f32.mrb[0].mxu0
        %v5445 = vpop.f32.mrb[0].mxu0
        %v5446 = vadd.f32 0.0, %v5445
        %v5447 = vpop.f32.mrb[0].mxu0
        %5448 = vmatprep.mubr.bf16.mxu0 %v3888
        %5449 = vmatmul.mubr.bf16.gmra.mrb[0].mxu0 %v3887
        %v5450 = vpop.f32.mrb[0].mxu0
        %v5451 = vadd.f32 0.0, %v5450
        %v5452 = vpop.f32.mrb[0].mxu0
        %v5453 = vpop.f32.mrb[0].mxu0
        %v5454 = vadd.f32 0.0, %v5453
        %v5455 = vpop.f32.mrb[0].mxu0
        %5456 = vmatprep.mubr.bf16.mxu0 %v3894
        %5457 = vmatmul.mubr.bf16.gmra.mrb[0].mxu0 %v3893
        %v5458 = vpop.f32.mrb[0].mxu0
        %v5459 = vadd.f32 0.0, %v5458
        %v5460 = vpop.f32.mrb[0].mxu0
        %v5461 = vpop.f32.mrb[0].mxu0
        %v5462 = vadd.f32 0.0, %v5461
        %v5463 = vpop.f32.mrb[0].mxu0
        %5464 = vmatprep.mubr.bf16.mxu0 %v3900
        %5465 = vmatmul.mubr.bf16.gmra.mrb[0].mxu0 %v3899
        %v5466 = vpop.f32.mrb[0].mxu0
        %v5467 = vadd.f32 0.0, %v5466
        %v5468 = vpop.f32.mrb[0].mxu0
        %v5469 = vpop.f32.mrb[0].mxu0
        %v5470 = vadd.f32 0.0, %v5469
        %v5471 = vpop.f32.mrb[0].mxu0
        %5472 = vmatprep.mubr.bf16.mxu0 %v3906
        %5473 = vmatmul.mubr.bf16.gmra.mrb[0].mxu0 %v3905
        %v5474 = vpop.f32.mrb[0].mxu0
        %v5475 = vadd.f32 0.0, %v5474
        %v5476 = vpop.f32.mrb[0].mxu0
        %v5477 = vpop.f32.mrb[0].mxu0
        %v5478 = vadd.f32 0.0, %v5477
        %v5479 = vpop.f32.mrb[0].mxu0
        %5480 = vmatprep.mubr.bf16.mxu0 %v3912
        %5481 = vmatmul.mubr.bf16.gmra.mrb[0].mxu0 %v3911
        %v5482 = vpop.f32.mrb[0].mxu0
        %v5483 = vadd.f32 0.0, %v5482
        %v5484 = vpop.f32.mrb[0].mxu0
        %v5485 = vpop.f32.mrb[0].mxu0
        %v5486 = vadd.f32 0.0, %v5485
        %v5487 = vpop.f32.mrb[0].mxu0
        %5488 = vmatprep.mubr.bf16.mxu0 %v3918
        %5489 = vmatmul.mubr.bf16.gmra.mrb[0].mxu0 %v3917
        %v5490 = vpop.f32.mrb[0].mxu0
        %v5491 = vadd.f32 0.0, %v5490
        %v5492 = vpop.f32.mrb[0].mxu0
        %v5493 = vpop.f32.mrb[0].mxu0
        %v5494 = vadd.f32 0.0, %v5493
        %v5495 = vpop.f32.mrb[0].mxu0
        %5496 = vmatprep.mubr.bf16.mxu0 %v3924
        %5497 = vmatmul.mubr.bf16.gmra.mrb[0].mxu0 %v3923
        %v5498 = vpop.f32.mrb[0].mxu0
        %v5499 = vadd.f32 0.0, %v5498
        %v5500 = vpop.f32.mrb[0].mxu0
        %v5501 = vpop.f32.mrb[0].mxu0
        %v5502 = vadd.f32 0.0, %v5501
        %v5503 = vpop.f32.mrb[0].mxu0
        %5504 = vmatprep.mubr.bf16.mxu0 %v3930
        %5505 = vmatmul.mubr.bf16.gmra.mrb[0].mxu0 %v3929
        %v5506 = vpop.f32.mrb[0].mxu0
        %v5507 = vadd.f32 0.0, %v5506
        %v5508 = vpop.f32.mrb[0].mxu0
        %v5509 = vpop.f32.mrb[0].mxu0
        %v5510 = vadd.f32 0.0, %v5509
        %v5511 = vpop.f32.mrb[0].mxu0
        %5512 = vmatprep.mubr.bf16.mxu0 %v3936
        %5513 = vmatmul.mubr.bf16.gmra.mrb[0].mxu0 %v3935
        %v5514 = vpop.f32.mrb[0].mxu0
        %v5515 = vadd.f32 0.0, %v5514
        %v5516 = vpop.f32.mrb[0].mxu0
        %v5517 = vpop.f32.mrb[0].mxu0
        %v5518 = vpop.f32.mrb[0].mxu0
        %5519 = vdwg.mxu0
        %5520 = vmatprep.subr.bf16.mxu0 0
        %5521 = vmatpush1.bf16.msra.mxu0 %v4663
        %5522 = vmatprep.subr.bf16.mxu0 0
        %5523 = vmatpush1.bf16.msra.mxu0 %v4666
        %5524 = vmatprep.subr.bf16.mxu0 0
        %5525 = vmatpush1.bf16.msra.mxu0 %v4669
        %5526 = vmatprep.subr.bf16.mxu0 0
        %5527 = vmatpush1.bf16.msra.mxu0 %v4672
        %5528 = vmatprep.subr.bf16.mxu0 0
        %5529 = vmatpush1.bf16.msra.mxu0 %v4675
        %5530 = vmatprep.subr.bf16.mxu0 0
        %5531 = vmatpush1.bf16.msra.mxu0 %v4678
        %5532 = vmatprep.subr.bf16.mxu0 0
        %5533 = vmatpush1.bf16.msra.mxu0 %v4681
        %5534 = vmatprep.subr.bf16.mxu0 0
        %5535 = vmatpush1.bf16.msra.mxu0 %v4684
        %5536 = vmatprep.subr.bf16.mxu0 0
        %5537 = vmatpush1.bf16.msra.mxu0 %v4687
        %5538 = vmatprep.subr.bf16.mxu0 0
        %5539 = vmatpush1.bf16.msra.mxu0 %v4690
        %5540 = vmatprep.subr.bf16.mxu0 0
        %5541 = vmatpush1.bf16.msra.mxu0 %v4693
        %5542 = vmatprep.subr.bf16.mxu0 0
        %5543 = vmatpush1.bf16.msra.mxu0 %v4696
        %5544 = vmatprep.subr.bf16.mxu0 0
        %5545 = vmatpush1.bf16.msra.mxu0 %v4699
        %5546 = vmatprep.subr.bf16.mxu0 0
        %5547 = vmatpush1.bf16.msra.mxu0 %v4702
        %5548 = vmatprep.subr.bf16.mxu0 0
        %5549 = vmatpush1.bf16.msra.mxu0 %v4705
        %5550 = vmatprep.subr.bf16.mxu0 0
        %5551 = vmatpush1.bf16.msra.mxu0 %v4708
        %5552 = vmatprep.mubr.bf16.mxu0 %v3866
        %5553 = vmatmul.mubr.bf16.gmra.mrb[0].mxu0 %v3865
        %v5554 = vpop.f32.mrb[0].mxu0
        %v5555 = vadd.f32 %v5419, %v5554
        %v5556 = vpop.f32.mrb[0].mxu0
        %v5557 = vpop.f32.mrb[0].mxu0
        %v5558 = vadd.f32 %v5422, %v5557
        %v5559 = vpop.f32.mrb[0].mxu0
        %5560 = vmatprep.mubr.bf16.mxu0 %v3872
        %5561 = vmatmul.mubr.bf16.gmra.mrb[0].mxu0 %v3871
        %v5562 = vpop.f32.mrb[0].mxu0
        %v5563 = vadd.f32 %v5427, %v5562
        %v5564 = vpop.f32.mrb[0].mxu0
        %v5565 = vpop.f32.mrb[0].mxu0
        %v5566 = vadd.f32 %v5430, %v5565
        %v5567 = vpop.f32.mrb[0].mxu0
        %5568 = vmatprep.mubr.bf16.mxu0 %v3878
        %5569 = vmatmul.mubr.bf16.gmra.mrb[0].mxu0 %v3877
        %v5570 = vpop.f32.mrb[0].mxu0
        %v5571 = vadd.f32 %v5435, %v5570
        %v5572 = vpop.f32.mrb[0].mxu0
        %v5573 = vpop.f32.mrb[0].mxu0
        %v5574 = vadd.f32 %v5438, %v5573
        %v5575 = vpop.f32.mrb[0].mxu0
        %5576 = vmatprep.mubr.bf16.mxu0 %v3884
        %5577 = vmatmul.mubr.bf16.gmra.mrb[0].mxu0 %v3883
        %v5578 = vpop.f32.mrb[0].mxu0
        %v5579 = vadd.f32 %v5443, %v5578
        %v5580 = vpop.f32.mrb[0].mxu0
        %v5581 = vpop.f32.mrb[0].mxu0
        %v5582 = vadd.f32 %v5446, %v5581
        %v5583 = vpop.f32.mrb[0].mxu0
        %5584 = vmatprep.mubr.bf16.mxu0 %v3890
        %5585 = vmatmul.mubr.bf16.gmra.mrb[0].mxu0 %v3889
        %v5586 = vpop.f32.mrb[0].mxu0
        %v5587 = vadd.f32 %v5451, %v5586
        %v5588 = vpop.f32.mrb[0].mxu0
        %v5589 = vpop.f32.mrb[0].mxu0
        %v5590 = vadd.f32 %v5454, %v5589
        %v5591 = vpop.f32.mrb[0].mxu0
        %5592 = vmatprep.mubr.bf16.mxu0 %v3896
        %5593 = vmatmul.mubr.bf16.gmra.mrb[0].mxu0 %v3895
        %v5594 = vpop.f32.mrb[0].mxu0
        %v5595 = vadd.f32 %v5459, %v5594
        %v5596 = vpop.f32.mrb[0].mxu0
        %v5597 = vpop.f32.mrb[0].mxu0
        %v5598 = vadd.f32 %v5462, %v5597
        %v5599 = vpop.f32.mrb[0].mxu0
        %5600 = vmatprep.mubr.bf16.mxu0 %v3902
        %5601 = vmatmul.mubr.bf16.gmra.mrb[0].mxu0 %v3901
        %v5602 = vpop.f32.mrb[0].mxu0
        %v5603 = vadd.f32 %v5467, %v5602
        %v5604 = vpop.f32.mrb[0].mxu0
        %v5605 = vpop.f32.mrb[0].mxu0
        %v5606 = vadd.f32 %v5470, %v5605
        %v5607 = vpop.f32.mrb[0].mxu0
        %5608 = vmatprep.mubr.bf16.mxu0 %v3908
        %5609 = vmatmul.mubr.bf16.gmra.mrb[0].mxu0 %v3907
        %v5610 = vpop.f32.mrb[0].mxu0
        %v5611 = vadd.f32 %v5475, %v5610
        %v5612 = vpop.f32.mrb[0].mxu0
        %v5613 = vpop.f32.mrb[0].mxu0
        %v5614 = vadd.f32 %v5478, %v5613
        %v5615 = vpop.f32.mrb[0].mxu0
        %5616 = vmatprep.mubr.bf16.mxu0 %v3914
        %5617 = vmatmul.mubr.bf16.gmra.mrb[0].mxu0 %v3913
        %v5618 = vpop.f32.mrb[0].mxu0
        %v5619 = vadd.f32 %v5483, %v5618
        %v5620 = vpop.f32.mrb[0].mxu0
        %v5621 = vpop.f32.mrb[0].mxu0
        %v5622 = vadd.f32 %v5486, %v5621
        %v5623 = vpop.f32.mrb[0].mxu0
        %5624 = vmatprep.mubr.bf16.mxu0 %v3920
        %5625 = vmatmul.mubr.bf16.gmra.mrb[0].mxu0 %v3919
        %v5626 = vpop.f32.mrb[0].mxu0
        %v5627 = vadd.f32 %v5491, %v5626
        %v5628 = vpop.f32.mrb[0].mxu0
        %v5629 = vpop.f32.mrb[0].mxu0
        %v5630 = vadd.f32 %v5494, %v5629
        %v5631 = vpop.f32.mrb[0].mxu0
        %5632 = vmatprep.mubr.bf16.mxu0 %v3926
        %5633 = vmatmul.mubr.bf16.gmra.mrb[0].mxu0 %v3925
        %v5634 = vpop.f32.mrb[0].mxu0
        %v5635 = vadd.f32 %v5499, %v5634
        %v5636 = vpop.f32.mrb[0].mxu0
        %v5637 = vpop.f32.mrb[0].mxu0
        %v5638 = vadd.f32 %v5502, %v5637
        %v5639 = vpop.f32.mrb[0].mxu0
        %5640 = vmatprep.mubr.bf16.mxu0 %v3932
        %5641 = vmatmul.mubr.bf16.gmra.mrb[0].mxu0 %v3931
        %v5642 = vpop.f32.mrb[0].mxu0
        %v5643 = vadd.f32 %v5507, %v5642
        %v5644 = vpop.f32.mrb[0].mxu0
        %v5645 = vpop.f32.mrb[0].mxu0
        %v5646 = vadd.f32 %v5510, %v5645
        %v5647 = vpop.f32.mrb[0].mxu0
        %5648 = vmatprep.mubr.bf16.mxu0 %v3938
        %5649 = vmatmul.mubr.bf16.gmra.mrb[0].mxu0 %v3937
        %v5650 = vpop.f32.mrb[0].mxu0
        %v5651 = vadd.f32 %v5515, %v5650
        %v5652 = vpop.f32.mrb[0].mxu0
        %v5653 = vpop.f32.mrb[0].mxu0
        %v5654 = vpop.f32.mrb[0].mxu0
        %5655 = vdwg.mxu0
        %5656 = vmatprep.subr.bf16.mxu0 0
        %5657 = vmatpush1.bf16.msra.mxu0 %v4711
        %5658 = vmatprep.subr.bf16.mxu0 0
        %5659 = vmatpush1.bf16.msra.mxu0 %v4714
        %5660 = vmatprep.subr.bf16.mxu0 0
        %5661 = vmatpush1.bf16.msra.mxu0 %v4717
        %5662 = vmatprep.subr.bf16.mxu0 0
        %5663 = vmatpush1.bf16.msra.mxu0 %v4720
        %5664 = vmatprep.subr.bf16.mxu0 0
        %5665 = vmatpush1.bf16.msra.mxu0 %v4723
        %5666 = vmatprep.subr.bf16.mxu0 0
        %5667 = vmatpush1.bf16.msra.mxu0 %v4726
        %5668 = vmatprep.subr.bf16.mxu0 0
        %5669 = vmatpush1.bf16.msra.mxu0 %v4729
        %5670 = vmatprep.subr.bf16.mxu0 0
        %5671 = vmatpush1.bf16.msra.mxu0 %v4732
        %5672 = vmatprep.subr.bf16.mxu0 0
        %5673 = vmatpush1.bf16.msra.mxu0 %v4735
        %5674 = vmatprep.subr.bf16.mxu0 0
        %5675 = vmatpush1.bf16.msra.mxu0 %v4738
        %5676 = vmatprep.subr.bf16.mxu0 0
        %5677 = vmatpush1.bf16.msra.mxu0 %v4741
        %5678 = vmatprep.subr.bf16.mxu0 0
        %5679 = vmatpush1.bf16.msra.mxu0 %v4744
        %5680 = vmatprep.subr.bf16.mxu0 0
        %5681 = vmatpush1.bf16.msra.mxu0 %v4747
        %5682 = vmatprep.subr.bf16.mxu0 0
        %5683 = vmatpush1.bf16.msra.mxu0 %v4750
        %5684 = vmatprep.subr.bf16.mxu0 0
        %5685 = vmatpush1.bf16.msra.mxu0 %v4753
        %5686 = vmatprep.subr.bf16.mxu0 0
        %5687 = vmatpush1.bf16.msra.mxu0 %v4756
        %5688 = vmatprep.mubr.bf16.mxu0 %v3868
        %5689 = vmatmul.mubr.bf16.gmra.mrb[0].mxu0 %v3867
        %v5690 = vpop.f32.mrb[0].mxu0
        %v5691 = vadd.f32 %v5555, %v5690
        %v5692 = vpop.f32.mrb[0].mxu0
        %v5693 = vpop.f32.mrb[0].mxu0
        %v5694 = vadd.f32 %v5558, %v5693
        %v5695 = vpop.f32.mrb[0].mxu0
        %5696 = vmatprep.mubr.bf16.mxu0 %v3874
        %5697 = vmatmul.mubr.bf16.gmra.mrb[0].mxu0 %v3873
        %v5698 = vpop.f32.mrb[0].mxu0
        %v5699 = vadd.f32 %v5563, %v5698
        %v5700 = vpop.f32.mrb[0].mxu0
        %v5701 = vpop.f32.mrb[0].mxu0
        %v5702 = vadd.f32 %v5566, %v5701
        %v5703 = vpop.f32.mrb[0].mxu0
        %5704 = vmatprep.mubr.bf16.mxu0 %v3880
        %5705 = vmatmul.mubr.bf16.gmra.mrb[0].mxu0 %v3879
        %v5706 = vpop.f32.mrb[0].mxu0
        %v5707 = vadd.f32 %v5571, %v5706
        %v5708 = vpop.f32.mrb[0].mxu0
        %v5709 = vpop.f32.mrb[0].mxu0
        %v5710 = vadd.f32 %v5574, %v5709
        %v5711 = vpop.f32.mrb[0].mxu0
        %5712 = vmatprep.mubr.bf16.mxu0 %v3886
        %5713 = vmatmul.mubr.bf16.gmra.mrb[0].mxu0 %v3885
        %v5714 = vpop.f32.mrb[0].mxu0
        %v5715 = vadd.f32 %v5579, %v5714
        %v5716 = vpop.f32.mrb[0].mxu0
        %v5717 = vpop.f32.mrb[0].mxu0
        %v5718 = vadd.f32 %v5582, %v5717
        %v5719 = vpop.f32.mrb[0].mxu0
        %5720 = vmatprep.mubr.bf16.mxu0 %v3892
        %5721 = vmatmul.mubr.bf16.gmra.mrb[0].mxu0 %v3891
        %v5722 = vpop.f32.mrb[0].mxu0
        %v5723 = vadd.f32 %v5587, %v5722
        %v5724 = vpop.f32.mrb[0].mxu0
        %v5725 = vpop.f32.mrb[0].mxu0
        %v5726 = vadd.f32 %v5590, %v5725
        %v5727 = vpop.f32.mrb[0].mxu0
        %5728 = vmatprep.mubr.bf16.mxu0 %v3898
        %5729 = vmatmul.mubr.bf16.gmra.mrb[0].mxu0 %v3897
        %v5730 = vpop.f32.mrb[0].mxu0
        %v5731 = vadd.f32 %v5595, %v5730
        %v5732 = vpop.f32.mrb[0].mxu0
        %v5733 = vpop.f32.mrb[0].mxu0
        %v5734 = vadd.f32 %v5598, %v5733
        %v5735 = vpop.f32.mrb[0].mxu0
        %5736 = vmatprep.mubr.bf16.mxu0 %v3904
        %5737 = vmatmul.mubr.bf16.gmra.mrb[0].mxu0 %v3903
        %v5738 = vpop.f32.mrb[0].mxu0
        %v5739 = vadd.f32 %v5603, %v5738
        %v5740 = vpop.f32.mrb[0].mxu0
        %v5741 = vpop.f32.mrb[0].mxu0
        %v5742 = vadd.f32 %v5606, %v5741
        %v5743 = vpop.f32.mrb[0].mxu0
        %5744 = vmatprep.mubr.bf16.mxu0 %v3910
        %5745 = vmatmul.mubr.bf16.gmra.mrb[0].mxu0 %v3909
        %v5746 = vpop.f32.mrb[0].mxu0
        %v5747 = vadd.f32 %v5611, %v5746
        %v5748 = vpop.f32.mrb[0].mxu0
        %v5749 = vpop.f32.mrb[0].mxu0
        %v5750 = vadd.f32 %v5614, %v5749
        %v5751 = vpop.f32.mrb[0].mxu0
        %5752 = vmatprep.mubr.bf16.mxu0 %v3916
        %5753 = vmatmul.mubr.bf16.gmra.mrb[0].mxu0 %v3915
        %v5754 = vpop.f32.mrb[0].mxu0
        %v5755 = vadd.f32 %v5619, %v5754
        %v5756 = vpop.f32.mrb[0].mxu0
        %v5757 = vpop.f32.mrb[0].mxu0
        %v5758 = vadd.f32 %v5622, %v5757
        %v5759 = vpop.f32.mrb[0].mxu0
        %5760 = vmatprep.mubr.bf16.mxu0 %v3922
        %5761 = vmatmul.mubr.bf16.gmra.mrb[0].mxu0 %v3921
        %v5762 = vpop.f32.mrb[0].mxu0
        %v5763 = vadd.f32 %v5627, %v5762
        %v5764 = vpop.f32.mrb[0].mxu0
        %v5765 = vpop.f32.mrb[0].mxu0
        %v5766 = vadd.f32 %v5630, %v5765
        %v5767 = vpop.f32.mrb[0].mxu0
        %5768 = vmatprep.mubr.bf16.mxu0 %v3928
        %5769 = vmatmul.mubr.bf16.gmra.mrb[0].mxu0 %v3927
        %v5770 = vpop.f32.mrb[0].mxu0
        %v5771 = vadd.f32 %v5635, %v5770
        %v5772 = vpop.f32.mrb[0].mxu0
        %v5773 = vpop.f32.mrb[0].mxu0
        %v5774 = vadd.f32 %v5638, %v5773
        %v5775 = vpop.f32.mrb[0].mxu0
        %5776 = vmatprep.mubr.bf16.mxu0 %v3934
        %5777 = vmatmul.mubr.bf16.gmra.mrb[0].mxu0 %v3933
        %v5778 = vpop.f32.mrb[0].mxu0
        %v5779 = vadd.f32 %v5643, %v5778
        %v5780 = vpop.f32.mrb[0].mxu0
        %v5781 = vpop.f32.mrb[0].mxu0
        %v5782 = vadd.f32 %v5646, %v5781
        %v5783 = vpop.f32.mrb[0].mxu0
        %5784 = vmatprep.mubr.bf16.mxu0 %v3940
        %5785 = vmatmul.mubr.bf16.gmra.mrb[0].mxu0 %v3939
        %v5786 = vpop.f32.mrb[0].mxu0
        %v5787 = vadd.f32 %v5651, %v5786
        %v5788 = vpop.f32.mrb[0].mxu0
        %v5789 = vpop.f32.mrb[0].mxu0
        %v5790 = vpop.f32.mrb[0].mxu0
        %5791 = vdwg.mxu0
        %v5792 = vadd.f32 %v3788, %v5258
        %v5793 = vadd.f32 %v3789, %v5260
        %v5794 = vadd.f32 %v3790, %v5691
        %v5795 = vadd.f32 %v3791, %v5262
        %v5796 = vadd.f32 %v3792, %v5264
        %v5797 = vadd.f32 %v3793, %v5694
        %v5798 = vadd.f32 %v3794, %v5268
        %v5799 = vadd.f32 %v3795, %v5270
        %v5800 = vadd.f32 %v3796, %v5699
        %v5801 = vadd.f32 %v3797, %v5272
        %v5802 = vadd.f32 %v3798, %v5274
        %v5803 = vadd.f32 %v3799, %v5702
        %v5804 = vadd.f32 %v3800, %v5278
        %v5805 = vadd.f32 %v3801, %v5280
        %v5806 = vadd.f32 %v3802, %v5707
        %v5807 = vadd.f32 %v3803, %v5282
        %v5808 = vadd.f32 %v3804, %v5284
        %v5809 = vadd.f32 %v3805, %v5710
        %v5810 = vadd.f32 %v3806, %v5288
        %v5811 = vadd.f32 %v3807, %v5290
        %v5812 = vadd.f32 %v3808, %v5715
        %v5813 = vadd.f32 %v3809, %v5292
        %v5814 = vadd.f32 %v3810, %v5294
        %v5815 = vadd.f32 %v3811, %v5718
        %v5816 = vadd.f32 %v3812, %v5298
        %v5817 = vadd.f32 %v3813, %v5300
        %v5818 = vadd.f32 %v3814, %v5723
        %v5819 = vadd.f32 %v3815, %v5302
        %v5820 = vadd.f32 %v3816, %v5304
        %v5821 = vadd.f32 %v3817, %v5726
        %v5822 = vadd.f32 %v3818, %v5308
        %v5823 = vadd.f32 %v3819, %v5310
        %v5824 = vadd.f32 %v3820, %v5731
        %v5825 = vadd.f32 %v3821, %v5312
        %v5826 = vadd.f32 %v3822, %v5314
        %v5827 = vadd.f32 %v3823, %v5734
        %v5828 = vadd.f32 %v3824, %v5318
        %v5829 = vadd.f32 %v3825, %v5320
        %v5830 = vadd.f32 %v3826, %v5739
        %v5831 = vadd.f32 %v3827, %v5322
        %v5832 = vadd.f32 %v3828, %v5324
        %v5833 = vadd.f32 %v3829, %v5742
        %v5834 = vadd.f32 %v3830, %v5328
        %v5835 = vadd.f32 %v3831, %v5330
        %v5836 = vadd.f32 %v3832, %v5747
        %v5837 = vadd.f32 %v3833, %v5332
        %v5838 = vadd.f32 %v3834, %v5334
        %v5839 = vadd.f32 %v3835, %v5750
        %v5840 = vadd.f32 %v3836, %v5338
        %v5841 = vadd.f32 %v3837, %v5340
        %v5842 = vadd.f32 %v3838, %v5755
        %v5843 = vadd.f32 %v3839, %v5342
        %v5844 = vadd.f32 %v3840, %v5344
        %v5845 = vadd.f32 %v3841, %v5758
        %v5846 = vadd.f32 %v3842, %v5348
        %v5847 = vadd.f32 %v3843, %v5350
        %v5848 = vadd.f32 %v3844, %v5763
        %v5849 = vadd.f32 %v3845, %v5352
        %v5850 = vadd.f32 %v3846, %v5354
        %v5851 = vadd.f32 %v3847, %v5766
        %v5852 = vadd.f32 %v3848, %v5358
        %v5853 = vadd.f32 %v3849, %v5360
        %v5854 = vadd.f32 %v3850, %v5771
        %v5855 = vadd.f32 %v3851, %v5362
        %v5856 = vadd.f32 %v3852, %v5364
        %v5857 = vadd.f32 %v3853, %v5774
        %v5858 = vadd.f32 %v3854, %v5368
        %v5859 = vadd.f32 %v3855, %v5370
        %v5860 = vadd.f32 %v3856, %v5779
        %v5861 = vadd.f32 %v3857, %v5372
        %v5862 = vadd.f32 %v3858, %v5374
        %v5863 = vadd.f32 %v3859, %v5782
        %v5864 = vadd.f32 %v3860, %v5378
        %v5865 = vadd.f32 %v3861, %v5380
        %v5866 = vadd.f32 %v3862, %v5787
        %5867 = vst [vmem:[#allocation11] sm:$0xff] %v5792
        %5868 = vst [vmem:[#allocation11 + $0x8] sm:$0xff] %v5793
        %5869 = vst [vmem:[#allocation11 + $0x10] sm:$0xff] %v5794
        %5870 = vst [vmem:[#allocation11 + $0x18] sm:$0xff] %v5795
        %5871 = vst [vmem:[#allocation11 + $0x20] sm:$0xff] %v5796
        %5872 = vst [vmem:[#allocation11 + $0x28] sm:$0xff] %v5797
        %5873 = vst [vmem:[#allocation11 + $0x30] sm:$0xff] %v5798
        %5874 = vst [vmem:[#allocation11 + $0x38] sm:$0xff] %v5799
        %5875 = vst [vmem:[#allocation11 + $0x40] sm:$0xff] %v5800
        %5876 = vst [vmem:[#allocation11 + $0x48] sm:$0xff] %v5801
        %5877 = vst [vmem:[#allocation11 + $0x50] sm:$0xff] %v5802
        %5878 = vst [vmem:[#allocation11 + $0x58] sm:$0xff] %v5803
        %5879 = vst [vmem:[#allocation11 + $0x60] sm:$0xff] %v5804
        %5880 = vst [vmem:[#allocation11 + $0x68] sm:$0xff] %v5805
        %5881 = vst [vmem:[#allocation11 + $0x70] sm:$0xff] %v5806
        %5882 = vst [vmem:[#allocation11 + $0x78] sm:$0xff] %v5807
        %5883 = vst [vmem:[#allocation11 + $0x80] sm:$0xff] %v5808
        %5884 = vst [vmem:[#allocation11 + $0x88] sm:$0xff] %v5809
        %5885 = vst [vmem:[#allocation11 + $0x90] sm:$0xff] %v5810
        %5886 = vst [vmem:[#allocation11 + $0x98] sm:$0xff] %v5811
        %5887 = vst [vmem:[#allocation11 + $0xa0] sm:$0xff] %v5812
        %5888 = vst [vmem:[#allocation11 + $0xa8] sm:$0xff] %v5813
        %5889 = vst [vmem:[#allocation11 + $0xb0] sm:$0xff] %v5814
        %5890 = vst [vmem:[#allocation11 + $0xb8] sm:$0xff] %v5815
        %5891 = vst [vmem:[#allocation11 + $0xc0] sm:$0xff] %v5816
        %5892 = vst [vmem:[#allocation11 + $0xc8] sm:$0xff] %v5817
        %5893 = vst [vmem:[#allocation11 + $0xd0] sm:$0xff] %v5818
        %5894 = vst [vmem:[#allocation11 + $0xd8] sm:$0xff] %v5819
        %5895 = vst [vmem:[#allocation11 + $0xe0] sm:$0xff] %v5820
        %5896 = vst [vmem:[#allocation11 + $0xe8] sm:$0xff] %v5821
        %5897 = vst [vmem:[#allocation11 + $0xf0] sm:$0xff] %v5822
        %5898 = vst [vmem:[#allocation11 + $0xf8] sm:$0xff] %v5823
        %5899 = vst [vmem:[#allocation11 + $0x100] sm:$0xff] %v5824
        %5900 = vst [vmem:[#allocation11 + $0x108] sm:$0xff] %v5825
        %5901 = vst [vmem:[#allocation11 + $0x110] sm:$0xff] %v5826
        %5902 = vst [vmem:[#allocation11 + $0x118] sm:$0xff] %v5827
        %5903 = vst [vmem:[#allocation11 + $0x120] sm:$0xff] %v5828
        %5904 = vst [vmem:[#allocation11 + $0x128] sm:$0xff] %v5829
        %5905 = vst [vmem:[#allocation11 + $0x130] sm:$0xff] %v5830
        %5906 = vst [vmem:[#allocation11 + $0x138] sm:$0xff] %v5831
        %5907 = vst [vmem:[#allocation11 + $0x140] sm:$0xff] %v5832
        %5908 = vst [vmem:[#allocation11 + $0x148] sm:$0xff] %v5833
        %5909 = vst [vmem:[#allocation11 + $0x150] sm:$0xff] %v5834
        %5910 = vst [vmem:[#allocation11 + $0x158] sm:$0xff] %v5835
        %5911 = vst [vmem:[#allocation11 + $0x160] sm:$0xff] %v5836
        %5912 = vst [vmem:[#allocation11 + $0x168] sm:$0xff] %v5837
        %5913 = vst [vmem:[#allocation11 + $0x170] sm:$0xff] %v5838
        %5914 = vst [vmem:[#allocation11 + $0x178] sm:$0xff] %v5839
        %5915 = vst [vmem:[#allocation11 + $0x180] sm:$0xff] %v5840
        %5916 = vst [vmem:[#allocation11 + $0x188] sm:$0xff] %v5841
        %5917 = vst [vmem:[#allocation11 + $0x190] sm:$0xff] %v5842
        %5918 = vst [vmem:[#allocation11 + $0x198] sm:$0xff] %v5843
        %5919 = vst [vmem:[#allocation11 + $0x1a0] sm:$0xff] %v5844
        %5920 = vst [vmem:[#allocation11 + $0x1a8] sm:$0xff] %v5845
        %5921 = vst [vmem:[#allocation11 + $0x1b0] sm:$0xff] %v5846
        %5922 = vst [vmem:[#allocation11 + $0x1b8] sm:$0xff] %v5847
        %5923 = vst [vmem:[#allocation11 + $0x1c0] sm:$0xff] %v5848
        %5924 = vst [vmem:[#allocation11 + $0x1c8] sm:$0xff] %v5849
        %5925 = vst [vmem:[#allocation11 + $0x1d0] sm:$0xff] %v5850
        %5926 = vst [vmem:[#allocation11 + $0x1d8] sm:$0xff] %v5851
        %5927 = vst [vmem:[#allocation11 + $0x1e0] sm:$0xff] %v5852
        %5928 = vst [vmem:[#allocation11 + $0x1e8] sm:$0xff] %v5853
        %5929 = vst [vmem:[#allocation11 + $0x1f0] sm:$0xff] %v5854
        %5930 = vst [vmem:[#allocation11 + $0x1f8] sm:$0xff] %v5855
        %5931 = vst [vmem:[#allocation11 + $0x200] sm:$0xff] %v5856
        %5932 = vst [vmem:[#allocation11 + $0x208] sm:$0xff] %v5857
        %5933 = vst [vmem:[#allocation11 + $0x210] sm:$0xff] %v5858
        %5934 = vst [vmem:[#allocation11 + $0x218] sm:$0xff] %v5859
        %5935 = vst [vmem:[#allocation11 + $0x220] sm:$0xff] %v5860
        %5936 = vst [vmem:[#allocation11 + $0x228] sm:$0xff] %v5861
        %5937 = vst [vmem:[#allocation11 + $0x230] sm:$0xff] %v5862
        %5938 = vst [vmem:[#allocation11 + $0x238] sm:$0xff] %v5863
        %5939 = vst [vmem:[#allocation11 + $0x240] sm:$0xf] %v5864
        %5940 = vst [vmem:[#allocation11 + $0x248] sm:$0xf] %v5865
        %5941 = vst [vmem:[#allocation11 + $0x250] sm:$0xf] %v5866
        // Predicated region
        $region65: #{tpu_custom_call.1} parent=39 // pred_check
          %p5942 = pneg %p179
        $region66: #{tpu_custom_call.1} parent=39 // pred_check_branch
          %5944 = sbr.rel (%p5942) target = $region68
        $region67: #{tpu_custom_call.1} parent=39 // pred_region
          %s5945 = smul.u32 25, %s28
          %s5947 = ssub.s32 9600, 9600
          %5948 = vsyncadd [#allocation4], %s5947
          %s5949 = smul.addr %s5945, 3
          %s5950 = smul.addr %s5949, 128
          %s5951 = scalar_lea.hbm %s5, %s5950
          %s5952 = sshll.u32 [#allocation11], 4
          %s5953 = int_to_ptr.vmem [resolvable:$true] %s5952
          %5958 = dma.vmem_to_hbm [thread:$0]  %s5953, 9600, %s5951, [#allocation4], 384, 384, 24
        $region68: #{tpu_custom_call.1} parent=39 // pred_fallthru
          _
        // Predicated region
        $region69: #{tpu_custom_call.1} parent=39 // pred_check
          %p5959 = pneg %p179
        $region70: #{tpu_custom_call.1} parent=39 // pred_check_branch
          %5961 = sbr.rel (%p5959) target = $region72
        $region71: #{tpu_custom_call.1} parent=39 // pred_region
          %5962 = dma.done [#allocation4], 9600
        $region72: #{tpu_custom_call.1} parent=39 // pred_fallthru
          _
      $region40: #{tpu_custom_call.1} parent=5 // pred_fallthru
        _
      %p5963 = scmp.le.s32.totalorder 2, %s19
      // Predicated region
      $region73: #{tpu_custom_call.1} parent=5 // pred_check
        %p5964 = pneg %p5963
      $region74: #{tpu_custom_call.1} parent=5 // pred_check_branch
        %5966 = sbr.rel (%p5964) target = $region76
      $region75: #{tpu_custom_call.1} parent=5 // pred_region
        %s5967 = ssub.s32 %s19, 2
      $region76: #{tpu_custom_call.1} parent=5 // pred_fallthru
        _
    $region6: #{tpu_custom_call.1} parent=1 // loop_footer
      %s23 = sadd.s32 1, %s19
    $region7: #{tpu_custom_call.1} parent=1 // loop_footer_branch
      %18 = sbr.rel target = $region3
    $region8: #{tpu_custom_call.1} parent=1 // loop_exit
      _
    %5968 = vsyncpa [#allocation3], 1
    %s5969 = scalar_lea.sflag [#allocation3], 1
    %5970 = vsyncpa %s5969, 1
    %5971 = vsyncpa [#allocation6], 1
    %s5972 = scalar_lea.sflag [#allocation6], 1
    %5973 = vsyncpa %s5972, 1
    %5974 = vsyncpa [#allocation9], 1
    %s5975 = scalar_lea.sflag [#allocation9], 1
    %5976 = vsyncpa %s5975, 1
    %5977 = vsyncpa [#allocation4], 1
    %s5978 = scalar_lea.sflag [#allocation4], 1
    %5979 = vsyncpa %s5978, 1

</llo_original>
